<compile_context>
chip_gen: v7x
topology: tpu7x:2x2x1
jax: 0.10.0
libtpu: 0.0.40
codegen_flags: <defaults>
</compile_context>

<pallas_src>
import functools

import jax
import jax.numpy as jnp
from jax.experimental import pallas as pl
from jax.experimental.pallas import tpu as pltpu


def _round_up(v, m):
    return ((v + m - 1) // m) * m


def _wavenet_kernel(blocks, layer_num,
                    x2_ref, c_ref, t_ref,
                    first_w_ref, first_b_ref,
                    skipconv_w_ref, skipconv_b_ref,
                    cond_w_ref, cond_b_ref,
                    layer_wp_ref, layer_wc_ref,
                    rs_w_ref, rs_b_ref,
                    fc_w_ref, cond0_w_ref, fccond_b_ref,
                    logits_w_ref, logits_b_ref,
                    out_ref):
    f32 = jnp.float32
    M = x2_ref.shape[0]                    # folded batch*time rows
    R = first_w_ref.shape[1]
    L = blocks * layer_num
    P = cond_w_ref.shape[1] // L           # 128-lane-aligned per-layer stride

    def mm(a, w):
        # MXU matmul; operands in the weights' dtype (f32 or bf16), f32 accum.
        return jnp.dot(a.astype(w.dtype), w, preferred_element_type=f32)

    x2 = x2_ref[...]                        # (M, 2): cols [x[t-2], x[t-1]]
    c = c_ref[...]                          # (M, Cc)
    fw = first_w_ref[...]                   # (2, R)

    # First causal conv (in_channels=1): pure VPU broadcast math, no MXU.
    residual0 = (x2[:, 0:1] * fw[0:1, :] + x2[:, 1:2] * fw[1:2, :]
                 + first_b_ref[...])                                   # (M, R)
    skip0 = mm(residual0, skipconv_w_ref[...]) + skipconv_b_ref[...]   # (M, S)
    # Packed state: residual in lanes [0:R), skip in lanes [R:R+S).
    state = jnp.concatenate([residual0, skip0], axis=1)                # (M,R+S)

    # Loop-invariant conditioning for every layer in one matmul; each layer's
    # 2R chunk is padded to P (multiple of 128) columns so the per-layer slice
    # below starts at a vreg lane-0 boundary.  Causal-conv and condition
    # biases are folded into cond_b.
    cond_all = mm(c, cond_w_ref[...]) + cond_b_ref[...]                # (M,L*P)

    # Hoisted causal-shift masks: one compare per distinct dilation.  The time
    # index is per-sequence, so rolls never leak across folded-batch bounds.
    t_full = jnp.broadcast_to(t_ref[...], (M, R))                      # (M, R)
    masks = [t_full >= (1 << i) for i in range(layer_num)]

    # TODO(synk): for production depths/lengths (L >~ 16, large T) switch to a
    # lax.fori_loop with streamed per-layer weights (pl.ANY + double-buffered
    # make_async_copy, pl.Buffered(1) on grid-invariant specs), tile T with a
    # dilation halo, and compute the conditioning per layer instead of the
    # hoisted cond_all (which scales as T*L*2R and would blow v7x's 64 MiB
    # VMEM).  At toy sizes a static unroll + fully-resident state is best.
    for blk in range(blocks):
        for i in range(layer_num):
            l = blk * layer_num + i
            res = state[:, :R]                                          # lane 0
            r_prev = jnp.where(masks[i],
                               pltpu.roll(res, shift=1 << i, axis=0), 0.0)
            pre = (mm(r_prev, layer_wp_ref[l]) + mm(res, layer_wc_ref[l])
                   + cond_all[:, l * P:l * P + 2 * R])                 # (M, 2R)
            z = jax.nn.sigmoid(pre[:, :R]) * jnp.tanh(pre[:, R:])      # (M, R)
            state = state + (mm(z, rs_w_ref[l]) + rs_b_ref[l])         # (M,R+S)

    skip = jnp.maximum(state[:, R:], 0.0)                              # (M, S)
    h = jnp.maximum(mm(skip, fc_w_ref[...]) + mm(c, cond0_w_ref[...])
                    + fccond_b_ref[...], 0.0)                          # (M, S)
    out_ref[...] = (mm(h, logits_w_ref[...])
                    + logits_b_ref[...]).astype(out_ref.dtype)


def _pack_params(params, *, R, S, Cc, L, compute_dtype):
    """Fuse torch-style per-module weights into the kernel's packed layout."""
    (first_w, first_b, skipconv_w, skipconv_b, cond0_w, cond0_b, fc_w, fc_b,
     logits_w, logits_b, causal_wg, causal_wo, causal_bg, causal_bo,
     cond_wg, cond_wo, cond_bg, cond_bo, res_w, res_b, skip_w, skip_b) = params
    wd = compute_dtype
    P = _round_up(2 * R, 128)               # lane-aligned per-layer cond stride

    first_w2 = first_w[:, 0, :]                                        # (2, R)

    # Causal conv split by tap (no per-layer lane concat in the kernel):
    # columns [0:R] = gate half, [R:2R] = output half.
    layer_wp = jnp.concatenate([causal_wg[:, 0], causal_wo[:, 0]],
                               axis=2).astype(wd)                      # (L,R,2R)
    layer_wc = jnp.concatenate([causal_wg[:, 1], causal_wo[:, 1]],
                               axis=2).astype(wd)                      # (L,R,2R)

    # Per-layer conditioning projections padded to P columns per layer so the
    # in-kernel slices are 128-lane aligned; causal + condition biases folded.
    cond_w_l = jnp.concatenate([cond_wg, cond_wo], axis=2)             # (L,Cc,2R)
    cond_b_l = (jnp.concatenate([cond_bg, cond_bo], axis=2)
                + jnp.concatenate([causal_bg, causal_bo], axis=2))     # (L,1,2R)
    pad = P - 2 * R
    cond_w = jnp.pad(cond_w_l, ((0, 0), (0, 0), (0, pad)))
    cond_w = jnp.transpose(cond_w, (1, 0, 2)).reshape(Cc, L * P).astype(wd)
    cond_b = jnp.pad(cond_b_l, ((0, 0), (0, 0), (0, pad))).reshape(1, L * P)

    rs_w = jnp.concatenate([res_w, skip_w], axis=2).astype(wd)         # (L,R,R+S)
    rs_b = jnp.concatenate([res_b, skip_b], axis=2)                    # (L,1,R+S)

    fccond_b = fc_b + cond0_b                                          # (1, S)

    return (first_w2, first_b,
            skipconv_w.astype(wd), skipconv_b,
            cond_w, cond_b,
            layer_wp, layer_wc,
            rs_w, rs_b,
            fc_w.astype(wd), cond0_w.astype(wd), fccond_b,
            logits_w.astype(wd), logits_b)


def wavenet_forward(x, c, params, *, blocks, layer_num,
                    compute_dtype=jnp.bfloat16, batch_block=None):
    """x: (B, T) raw 0..255 samples; c: (B, C_cond, T_c). Returns (B, 256, T).

    Matmul operands run in `compute_dtype` (bf16 default, f32 accumulation and
    f32 elementwise/bias math).  `batch_block` is how many sequences are
    folded into each grid step's matmul M dimension; the default folds the
    whole batch (grid=(1,)), which is best on single-TensorCore v5e/v6e — on
    v7x pass batch_block=B//2 so both TensorCores stay busy.
    """
    B, T = x.shape
    Cc, Tc = c.shape[1], c.shape[2]
    assert T % Tc == 0, "conditioning length must divide sample length"
    L = blocks * layer_num
    R = params[0].shape[2]        # first_conv weight: (k, 1, R)
    S = params[2].shape[1]        # skip_conv weight:  (R, S)
    classes = params[8].shape[1]  # logits weight:     (S, classes)

    BB = B if batch_block is None else batch_block
    assert B % BB == 0, "batch_block must divide batch"
    nb = B // BB
    M = BB * T
    assert nb == 1 or M % 8 == 0, "folded block rows must be sublane-aligned"

    # Conditioning upsample (glue) -> channels-last, flattened over batch.
    c_up = (jnp.repeat(c, T // Tc, axis=2) if Tc != 1
            else jnp.broadcast_to(c, (B, Cc, T)))
    c_flat = jnp.transpose(c_up, (0, 2, 1)).reshape(B * T, Cc).astype(jnp.float32)

    # Preprocessed + causally shifted input taps (glue): col0=x[t-2], col1=x[t-1].
    x_in = x.astype(jnp.float32)[..., None] / 255.0 - 0.5              # (B,T,1)

    def shift(a, d):
        return jnp.pad(a, ((0, 0), (d, 0), (0, 0)))[:, :T, :]

    x2 = jnp.concatenate([shift(x_in, 2), shift(x_in, 1)],
                         axis=2).reshape(B * T, 2)                     # (B*T,2)

    # Per-sequence time index (int32 column) keeps roll-based causal shifts
    # zero-filled at every sequence start inside the folded batch.
    t_idx = jnp.tile(jnp.arange(T, dtype=jnp.int32), B).reshape(B * T, 1)

    packed = _pack_params(params, R=R, S=S, Cc=Cc, L=L,
                          compute_dtype=compute_dtype)
    P = packed[4].shape[1] // L

    def seq_spec(cols):
        return pl.BlockSpec((M, cols), lambda b: (b, 0))

    def full_spec(shape):
        n = len(shape)
        return pl.BlockSpec(tuple(shape), lambda b, n=n: (0,) * n)

    inputs = (x2, c_flat, t_idx) + packed
    in_specs = ([seq_spec(2), seq_spec(Cc), seq_spec(1)]
                + [full_spec(a.shape) for a in packed])

    flops = 2 * B * T * (R * S + Cc * L * P
                         + L * (2 * R * (2 * R) + R * (R + S))
                         + S * S + Cc * S + S * classes)
    bytes_accessed = (4 * (int(x2.size) + int(c_flat.size) + int(t_idx.size)
                           + B * T * classes)
                      + sum(int(a.size) * a.dtype.itemsize for a in packed))

    # TODO(synk): at production T/L on v5e/v6e raise vmem_limit_bytes (128 MiB
    # physical) before resorting to streaming; keep streaming for v7x (64 MiB).
    out = pl.pallas_call(
        functools.partial(_wavenet_kernel, blocks, layer_num),
        out_shape=jax.ShapeDtypeStruct((B * T, classes), jnp.float32),
        grid=(nb,),
        in_specs=in_specs,
        out_specs=pl.BlockSpec((M, classes), lambda b: (b, 0)),
        compiler_params=pltpu.CompilerParams(
            dimension_semantics=("parallel",),
            vmem_limit_bytes=32 * 1024 * 1024),
        cost_estimate=pl.CostEstimate(
            flops=flops,
            transcendentals=2 * B * T * R * L,
            bytes_accessed=bytes_accessed),
    )(*inputs)
    return jnp.transpose(out.reshape(B, T, classes), (0, 2, 1))   # (B, 256, T)


def init_params(key, *, blocks, layer_num, R, S, Cc, classes=256, k=2):
    """Deterministic synthetic parameters in torch-equivalent (raw) layout.

    Conv weights are stored (C_in, C_out); causal conv tap j=0 multiplies
    x[t-d], j=1 multiplies x[t]; 2R-channel convs are split into gate / output
    halves (torch chunk(2, 1)).
    """
    L = blocks * layer_num
    keys = iter(jax.random.split(key, 32))

    def w(shape, scale=0.1):
        return scale * jax.random.normal(next(keys), shape, jnp.float32)

    return (
        w((k, 1, R)),        # first_conv weight
        w((1, R)),           # first_conv bias
        w((R, S)),           # skip_conv weight
        w((1, S)),           # skip_conv bias
        w((Cc, S)),          # top-level condition weight
        w((1, S)),           # top-level condition bias
        w((S, S)),           # fc weight
        w((1, S)),           # fc bias
        w((S, classes)),     # logits weight
        w((1, classes)),     # logits bias
        w((L, k, R, R)),     # causal conv, gate half
        w((L, k, R, R)),     # causal conv, output half
        w((L, 1, R)),        # causal bias, gate half
        w((L, 1, R)),        # causal bias, output half
        w((L, Cc, R)),       # layer condition, gate half
        w((L, Cc, R)),       # layer condition, output half
        w((L, 1, R)),        # layer condition bias, gate half
        w((L, 1, R)),        # layer condition bias, output half
        w((L, R, R)),        # residual 1x1 weight
        w((L, 1, R)),        # residual 1x1 bias
        w((L, R, S)),        # skip 1x1 weight
        w((L, 1, S)),        # skip 1x1 bias
    )


def wavenet_ref(x, c, params, *, blocks, layer_num):
    """Pure-JAX reference mirroring the torch forward (channels-last math)."""
    (first_w, first_b, skipconv_w, skipconv_b, cond0_w, cond0_b, fc_w, fc_b,
     logits_w, logits_b, causal_wg, causal_wo, causal_bg, causal_bo,
     cond_wg, cond_wo, cond_bg, cond_bo, res_w, res_b, skip_w, skip_b) = params
    B, T = x.shape
    Cc, Tc = c.shape[1], c.shape[2]
    c_up = (jnp.repeat(c, T // Tc, axis=2) if Tc != 1
            else jnp.broadcast_to(c, (B, Cc, T)))
    cc = jnp.transpose(c_up, (0, 2, 1))
    xf = x.astype(jnp.float32)[..., None] / 255.0 - 0.5

    def shift(a, d):
        return jnp.pad(a, ((0, 0), (d, 0), (0, 0)))[:, :T, :]

    xf = shift(xf, 1)
    residual = shift(xf, 1) * first_w[0] + xf * first_w[1] + first_b
    skip = residual @ skipconv_w + skipconv_b
    for blk in range(blocks):
        for i in range(layer_num):
            l = blk * layer_num + i
            rp = shift(residual, 2 ** i)
            g = rp @ causal_wg[l, 0] + residual @ causal_wg[l, 1] + causal_bg[l]
            o = rp @ causal_wo[l, 0] + residual @ causal_wo[l, 1] + causal_bo[l]
            g = g + cc @ cond_wg[l] + cond_bg[l]
            o = o + cc @ cond_wo[l] + cond_bo[l]
            z = jax.nn.sigmoid(g) * jnp.tanh(o)
            residual = residual + z @ res_w[l] + res_b[l]
            skip = skip + z @ skip_w[l] + skip_b[l]
    skip = jnp.maximum(skip, 0.0)
    skip = skip @ fc_w + fc_b
    skip = skip + cc @ cond0_w + cond0_b
    skip = jnp.maximum(skip, 0.0)
    return jnp.transpose(skip @ logits_w + logits_b, (0, 2, 1))


if __name__ == "__main__":
    # args: blocks=2, layers=3, kernel_size=2, residual=skip=32, latent_d=4
    blocks, layer_num = 2, 3
    R, S, Cc = 32, 32, 4
    B, T, Tc = 2, 16, 4

    key = jax.random.PRNGKey(0)
    kx, kc, kp = jax.random.split(key, 3)
    x = jax.random.randint(kx, (B, T), 0, 256).astype(jnp.float32)   # raw samples
    c = jax.random.normal(kc, (B, Cc, Tc), jnp.float32)              # latent cond
    params = init_params(kp, blocks=blocks, layer_num=layer_num, R=R, S=S, Cc=Cc)

    ref = wavenet_ref(x, c, params, blocks=blocks, layer_num=layer_num)

    # f32 parity check (matmul operands in f32).
    out_f32 = wavenet_forward(x, c, params, blocks=blocks, layer_num=layer_num,
                              compute_dtype=jnp.float32)
    out_f32 = jax.block_until_ready(out_f32)
    assert out_f32.shape == (B, 256, T)
    if not jnp.allclose(out_f32, ref, atol=2e-3, rtol=2e-3):
        raise AssertionError("Pallas kernel (f32) mismatch vs JAX reference")

    # Default bf16-operand run (recommended on all generations).
    out_bf16 = jax.block_until_ready(
        wavenet_forward(x, c, params, blocks=blocks, layer_num=layer_num))
    if not jnp.allclose(out_bf16, ref, atol=5e-2, rtol=5e-2):
        raise AssertionError("Pallas kernel (bf16) mismatch vs JAX reference")

    print("KERNEL_OK")
</pallas_src>

<mosaic_0001>
module attributes {stable_mosaic.version = 11 : i64} {
  func.func @_wavenet_kernel(%arg0: i32, %arg1: memref<32x2xf32, #tpu.memory_space<vmem>>, %arg2: memref<32x4xf32, #tpu.memory_space<vmem>>, %arg3: memref<32x1xi32, #tpu.memory_space<vmem>>, %arg4: memref<2x32xf32, #tpu.memory_space<vmem>>, %arg5: memref<1x32xf32, #tpu.memory_space<vmem>>, %arg6: memref<32x32xf32, #tpu.memory_space<vmem>>, %arg7: memref<1x32xf32, #tpu.memory_space<vmem>>, %arg8: memref<4x768xf32, #tpu.memory_space<vmem>>, %arg9: memref<1x768xf32, #tpu.memory_space<vmem>>, %arg10: memref<6x32x64xf32, #tpu.memory_space<vmem>>, %arg11: memref<6x32x64xf32, #tpu.memory_space<vmem>>, %arg12: memref<6x32x64xf32, #tpu.memory_space<vmem>>, %arg13: memref<6x1x64xf32, #tpu.memory_space<vmem>>, %arg14: memref<32x32xf32, #tpu.memory_space<vmem>>, %arg15: memref<4x32xf32, #tpu.memory_space<vmem>>, %arg16: memref<1x32xf32, #tpu.memory_space<vmem>>, %arg17: memref<32x256xf32, #tpu.memory_space<vmem>>, %arg18: memref<1x256xf32, #tpu.memory_space<vmem>>, %arg19: memref<32x256xf32, #tpu.memory_space<vmem>>) attributes {dimension_semantics = [#tpu.dimension_semantics<parallel>], iteration_bounds = array<i64: 1>, scalar_prefetch = 0 : i64, scratch_operands = 0 : i64, tpu.core_type = #tpu.core_type<tc>, window_params = [{transform_indices = @transform_0, window_bounds = array<i64: 32, 2>}, {transform_indices = @transform_1, window_bounds = array<i64: 32, 4>}, {transform_indices = @transform_2, window_bounds = array<i64: 32, 1>}, {pipeline_mode = #tpu.pipeline_mode<synchronous>, transform_indices = @transform_3, window_bounds = array<i64: 2, 32>}, {pipeline_mode = #tpu.pipeline_mode<synchronous>, transform_indices = @transform_4, window_bounds = array<i64: 1, 32>}, {pipeline_mode = #tpu.pipeline_mode<synchronous>, transform_indices = @transform_5, window_bounds = array<i64: 32, 32>}, {pipeline_mode = #tpu.pipeline_mode<synchronous>, transform_indices = @transform_6, window_bounds = array<i64: 1, 32>}, {pipeline_mode = #tpu.pipeline_mode<synchronous>, transform_indices = @transform_7, window_bounds = array<i64: 4, 768>}, {pipeline_mode = #tpu.pipeline_mode<synchronous>, transform_indices = @transform_8, window_bounds = array<i64: 1, 768>}, {pipeline_mode = #tpu.pipeline_mode<synchronous>, transform_indices = @transform_9, window_bounds = array<i64: 6, 32, 64>}, {pipeline_mode = #tpu.pipeline_mode<synchronous>, transform_indices = @transform_10, window_bounds = array<i64: 6, 32, 64>}, {pipeline_mode = #tpu.pipeline_mode<synchronous>, transform_indices = @transform_11, window_bounds = array<i64: 6, 32, 64>}, {pipeline_mode = #tpu.pipeline_mode<synchronous>, transform_indices = @transform_12, window_bounds = array<i64: 6, 1, 64>}, {pipeline_mode = #tpu.pipeline_mode<synchronous>, transform_indices = @transform_13, window_bounds = array<i64: 32, 32>}, {pipeline_mode = #tpu.pipeline_mode<synchronous>, transform_indices = @transform_14, window_bounds = array<i64: 4, 32>}, {pipeline_mode = #tpu.pipeline_mode<synchronous>, transform_indices = @transform_15, window_bounds = array<i64: 1, 32>}, {pipeline_mode = #tpu.pipeline_mode<synchronous>, transform_indices = @transform_16, window_bounds = array<i64: 32, 256>}, {pipeline_mode = #tpu.pipeline_mode<synchronous>, transform_indices = @transform_17, window_bounds = array<i64: 1, 256>}, {transform_indices = @transform_18, window_bounds = array<i64: 32, 256>}]} {
    %c0 = arith.constant 0 : index
    %c0_0 = arith.constant 0 : index
    %0 = vector.load %arg1[%c0, %c0_0] : memref<32x2xf32, #tpu.memory_space<vmem>>, vector<32x2xf32>
    %c0_1 = arith.constant 0 : index
    %c0_2 = arith.constant 0 : index
    %1 = vector.load %arg2[%c0_1, %c0_2] : memref<32x4xf32, #tpu.memory_space<vmem>>, vector<32x4xf32>
    %c0_3 = arith.constant 0 : index
    %c0_4 = arith.constant 0 : index
    %2 = vector.load %arg4[%c0_3, %c0_4] : memref<2x32xf32, #tpu.memory_space<vmem>>, vector<2x32xf32>
    %3 = vector.extract_strided_slice %0 {offsets = [0, 0], sizes = [32, 1], strides = [1, 1]} : vector<32x2xf32> to vector<32x1xf32>
    %4 = vector.extract_strided_slice %2 {offsets = [0, 0], sizes = [1, 32], strides = [1, 1]} : vector<2x32xf32> to vector<1x32xf32>
    %5 = vector.broadcast %3 : vector<32x1xf32> to vector<32x32xf32>
    %6 = vector.broadcast %4 : vector<1x32xf32> to vector<32x32xf32>
    %7 = arith.mulf %5, %6 : vector<32x32xf32>
    %8 = vector.extract_strided_slice %0 {offsets = [0, 1], sizes = [32, 1], strides = [1, 1]} : vector<32x2xf32> to vector<32x1xf32>
    %9 = vector.extract_strided_slice %2 {offsets = [1, 0], sizes = [1, 32], strides = [1, 1]} : vector<2x32xf32> to vector<1x32xf32>
    %10 = vector.broadcast %8 : vector<32x1xf32> to vector<32x32xf32>
    %11 = vector.broadcast %9 : vector<1x32xf32> to vector<32x32xf32>
    %12 = arith.mulf %10, %11 : vector<32x32xf32>
    %13 = arith.addf %7, %12 : vector<32x32xf32>
    %c0_5 = arith.constant 0 : index
    %c0_6 = arith.constant 0 : index
    %14 = vector.load %arg5[%c0_5, %c0_6] : memref<1x32xf32, #tpu.memory_space<vmem>>, vector<1x32xf32>
    %15 = vector.broadcast %14 : vector<1x32xf32> to vector<32x32xf32>
    %16 = arith.addf %13, %15 : vector<32x32xf32>
    %c0_7 = arith.constant 0 : index
    %c0_8 = arith.constant 0 : index
    %17 = vector.load %arg6[%c0_7, %c0_8] : memref<32x32xf32, #tpu.memory_space<vmem>>, vector<32x32xf32>
    %cst = arith.constant dense<0.000000e+00> : vector<32x32xf32>
    %18 = tpu.matmul %16, %17, %cst {dimension_numbers = #tpu.dot_dimension_numbers<[1], [0], [0], [1], [0, 0, 1, 1], [], []>} : vector<32x32xf32>, vector<32x32xf32>, vector<32x32xf32> -> vector<32x32xf32>
    %c0_9 = arith.constant 0 : index
    %c0_10 = arith.constant 0 : index
    %19 = vector.load %arg7[%c0_9, %c0_10] : memref<1x32xf32, #tpu.memory_space<vmem>>, vector<1x32xf32>
    %20 = vector.broadcast %19 : vector<1x32xf32> to vector<32x32xf32>
    %21 = arith.addf %18, %20 : vector<32x32xf32>
    %22 = tpu.concatenate %16, %21 in 1 : vector<32x32xf32>, vector<32x32xf32> -> vector<32x64xf32>
    %c0_11 = arith.constant 0 : index
    %c0_12 = arith.constant 0 : index
    %23 = vector.load %arg8[%c0_11, %c0_12] : memref<4x768xf32, #tpu.memory_space<vmem>>, vector<4x768xf32>
    %cst_13 = arith.constant dense<0.000000e+00> : vector<32x768xf32>
    %24 = tpu.matmul %1, %23, %cst_13 {dimension_numbers = #tpu.dot_dimension_numbers<[1], [0], [0], [1], [0, 0, 1, 1], [], []>} : vector<32x4xf32>, vector<4x768xf32>, vector<32x768xf32> -> vector<32x768xf32>
    %c0_14 = arith.constant 0 : index
    %c0_15 = arith.constant 0 : index
    %25 = vector.load %arg9[%c0_14, %c0_15] : memref<1x768xf32, #tpu.memory_space<vmem>>, vector<1x768xf32>
    %26 = vector.broadcast %25 : vector<1x768xf32> to vector<32x768xf32>
    %27 = arith.addf %24, %26 : vector<32x768xf32>
    %c0_16 = arith.constant 0 : index
    %c0_17 = arith.constant 0 : index
    %28 = vector.load %arg3[%c0_16, %c0_17] : memref<32x1xi32, #tpu.memory_space<vmem>>, vector<32x1xi32>
    %29 = vector.shape_cast %28 : vector<32x1xi32> to vector<32x1xi32>
    %30 = vector.broadcast %29 : vector<32x1xi32> to vector<32x32xi32>
    %c1_i32 = arith.constant 1 : i32
    %31 = vector.broadcast %c1_i32 : i32 to vector<32x32xi32>
    %32 = arith.cmpi sge, %30, %31 : vector<32x32xi32>
    %c2_i32 = arith.constant 2 : i32
    %33 = vector.broadcast %c2_i32 : i32 to vector<32x32xi32>
    %34 = arith.cmpi sge, %30, %33 : vector<32x32xi32>
    %c4_i32 = arith.constant 4 : i32
    %35 = vector.broadcast %c4_i32 : i32 to vector<32x32xi32>
    %36 = arith.cmpi sge, %30, %35 : vector<32x32xi32>
    %37 = vector.extract_strided_slice %22 {offsets = [0, 0], sizes = [32, 32], strides = [1, 1]} : vector<32x64xf32> to vector<32x32xf32>
    %c1_i32_18 = arith.constant 1 : i32
    %38 = tpu.dynamic_rotate %37 by %c1_i32_18 dim 0 : vector<32x32xf32>, i32 -> vector<32x32xf32>
    %cst_19 = arith.constant 0.000000e+00 : f32
    %39 = vector.broadcast %cst_19 : f32 to vector<32x32xf32>
    %40 = arith.select %32, %38, %39 : vector<32x32xi1>, vector<32x32xf32>
    %c0_20 = arith.constant 0 : index
    %c0_21 = arith.constant 0 : index
    %c0_22 = arith.constant 0 : index
    %41 = vector.load %arg10[%c0_20, %c0_21, %c0_22] : memref<6x32x64xf32, #tpu.memory_space<vmem>>, vector<1x32x64xf32>
    %42 = vector.shape_cast %41 : vector<1x32x64xf32> to vector<32x64xf32>
    %cst_23 = arith.constant dense<0.000000e+00> : vector<32x64xf32>
    %43 = tpu.matmul %40, %42, %cst_23 {dimension_numbers = #tpu.dot_dimension_numbers<[1], [0], [0], [1], [0, 0, 1, 1], [], []>} : vector<32x32xf32>, vector<32x64xf32>, vector<32x64xf32> -> vector<32x64xf32>
    %c0_24 = arith.constant 0 : index
    %c0_25 = arith.constant 0 : index
    %c0_26 = arith.constant 0 : index
    %44 = vector.load %arg11[%c0_24, %c0_25, %c0_26] : memref<6x32x64xf32, #tpu.memory_space<vmem>>, vector<1x32x64xf32>
    %45 = vector.shape_cast %44 : vector<1x32x64xf32> to vector<32x64xf32>
    %cst_27 = arith.constant dense<0.000000e+00> : vector<32x64xf32>
    %46 = tpu.matmul %37, %45, %cst_27 {dimension_numbers = #tpu.dot_dimension_numbers<[1], [0], [0], [1], [0, 0, 1, 1], [], []>} : vector<32x32xf32>, vector<32x64xf32>, vector<32x64xf32> -> vector<32x64xf32>
    %47 = arith.addf %43, %46 : vector<32x64xf32>
    %48 = vector.extract_strided_slice %27 {offsets = [0, 0], sizes = [32, 64], strides = [1, 1]} : vector<32x768xf32> to vector<32x64xf32>
    %49 = arith.addf %47, %48 : vector<32x64xf32>
    %50 = vector.extract_strided_slice %49 {offsets = [0, 0], sizes = [32, 32], strides = [1, 1]} : vector<32x64xf32> to vector<32x32xf32>
    %51 = arith.negf %50 : vector<32x32xf32>
    %52 = math.exp %51 : vector<32x32xf32>
    %cst_28 = arith.constant 1.000000e+00 : f32
    %53 = vector.broadcast %cst_28 : f32 to vector<32x32xf32>
    %54 = arith.addf %53, %52 : vector<32x32xf32>
    %55 = arith.divf %53, %54 : vector<32x32xf32>
    %56 = vector.extract_strided_slice %49 {offsets = [0, 32], sizes = [32, 32], strides = [1, 1]} : vector<32x64xf32> to vector<32x32xf32>
    %57 = math.tanh %56 : vector<32x32xf32>
    %58 = arith.mulf %55, %57 : vector<32x32xf32>
    %c0_29 = arith.constant 0 : index
    %c0_30 = arith.constant 0 : index
    %c0_31 = arith.constant 0 : index
    %59 = vector.load %arg12[%c0_29, %c0_30, %c0_31] : memref<6x32x64xf32, #tpu.memory_space<vmem>>, vector<1x32x64xf32>
    %60 = vector.shape_cast %59 : vector<1x32x64xf32> to vector<32x64xf32>
    %cst_32 = arith.constant dense<0.000000e+00> : vector<32x64xf32>
    %61 = tpu.matmul %58, %60, %cst_32 {dimension_numbers = #tpu.dot_dimension_numbers<[1], [0], [0], [1], [0, 0, 1, 1], [], []>} : vector<32x32xf32>, vector<32x64xf32>, vector<32x64xf32> -> vector<32x64xf32>
    %c0_33 = arith.constant 0 : index
    %c0_34 = arith.constant 0 : index
    %c0_35 = arith.constant 0 : index
    %62 = vector.load %arg13[%c0_33, %c0_34, %c0_35] : memref<6x1x64xf32, #tpu.memory_space<vmem>>, vector<1x1x64xf32>
    %63 = vector.shape_cast %62 : vector<1x1x64xf32> to vector<1x64xf32>
    %64 = vector.broadcast %63 : vector<1x64xf32> to vector<32x64xf32>
    %65 = arith.addf %61, %64 : vector<32x64xf32>
    %66 = arith.addf %22, %65 : vector<32x64xf32>
    %67 = vector.extract_strided_slice %66 {offsets = [0, 0], sizes = [32, 32], strides = [1, 1]} : vector<32x64xf32> to vector<32x32xf32>
    %c2_i32_36 = arith.constant 2 : i32
    %68 = tpu.dynamic_rotate %67 by %c2_i32_36 dim 0 : vector<32x32xf32>, i32 -> vector<32x32xf32>
    %cst_37 = arith.constant 0.000000e+00 : f32
    %69 = vector.broadcast %cst_37 : f32 to vector<32x32xf32>
    %70 = arith.select %34, %68, %69 : vector<32x32xi1>, vector<32x32xf32>
    %c1 = arith.constant 1 : index
    %c0_38 = arith.constant 0 : index
    %c0_39 = arith.constant 0 : index
    %71 = vector.load %arg10[%c1, %c0_38, %c0_39] : memref<6x32x64xf32, #tpu.memory_space<vmem>>, vector<1x32x64xf32>
    %72 = vector.shape_cast %71 : vector<1x32x64xf32> to vector<32x64xf32>
    %cst_40 = arith.constant dense<0.000000e+00> : vector<32x64xf32>
    %73 = tpu.matmul %70, %72, %cst_40 {dimension_numbers = #tpu.dot_dimension_numbers<[1], [0], [0], [1], [0, 0, 1, 1], [], []>} : vector<32x32xf32>, vector<32x64xf32>, vector<32x64xf32> -> vector<32x64xf32>
    %c1_41 = arith.constant 1 : index
    %c0_42 = arith.constant 0 : index
    %c0_43 = arith.constant 0 : index
    %74 = vector.load %arg11[%c1_41, %c0_42, %c0_43] : memref<6x32x64xf32, #tpu.memory_space<vmem>>, vector<1x32x64xf32>
    %75 = vector.shape_cast %74 : vector<1x32x64xf32> to vector<32x64xf32>
    %cst_44 = arith.constant dense<0.000000e+00> : vector<32x64xf32>
    %76 = tpu.matmul %67, %75, %cst_44 {dimension_numbers = #tpu.dot_dimension_numbers<[1], [0], [0], [1], [0, 0, 1, 1], [], []>} : vector<32x32xf32>, vector<32x64xf32>, vector<32x64xf32> -> vector<32x64xf32>
    %77 = arith.addf %73, %76 : vector<32x64xf32>
    %78 = vector.extract_strided_slice %27 {offsets = [0, 128], sizes = [32, 64], strides = [1, 1]} : vector<32x768xf32> to vector<32x64xf32>
    %79 = arith.addf %77, %78 : vector<32x64xf32>
    %80 = vector.extract_strided_slice %79 {offsets = [0, 0], sizes = [32, 32], strides = [1, 1]} : vector<32x64xf32> to vector<32x32xf32>
    %81 = arith.negf %80 : vector<32x32xf32>
    %82 = math.exp %81 : vector<32x32xf32>
    %cst_45 = arith.constant 1.000000e+00 : f32
    %83 = vector.broadcast %cst_45 : f32 to vector<32x32xf32>
    %84 = arith.addf %83, %82 : vector<32x32xf32>
    %85 = arith.divf %83, %84 : vector<32x32xf32>
    %86 = vector.extract_strided_slice %79 {offsets = [0, 32], sizes = [32, 32], strides = [1, 1]} : vector<32x64xf32> to vector<32x32xf32>
    %87 = math.tanh %86 : vector<32x32xf32>
    %88 = arith.mulf %85, %87 : vector<32x32xf32>
    %c1_46 = arith.constant 1 : index
    %c0_47 = arith.constant 0 : index
    %c0_48 = arith.constant 0 : index
    %89 = vector.load %arg12[%c1_46, %c0_47, %c0_48] : memref<6x32x64xf32, #tpu.memory_space<vmem>>, vector<1x32x64xf32>
    %90 = vector.shape_cast %89 : vector<1x32x64xf32> to vector<32x64xf32>
    %cst_49 = arith.constant dense<0.000000e+00> : vector<32x64xf32>
    %91 = tpu.matmul %88, %90, %cst_49 {dimension_numbers = #tpu.dot_dimension_numbers<[1], [0], [0], [1], [0, 0, 1, 1], [], []>} : vector<32x32xf32>, vector<32x64xf32>, vector<32x64xf32> -> vector<32x64xf32>
    %c1_50 = arith.constant 1 : index
    %c0_51 = arith.constant 0 : index
    %c0_52 = arith.constant 0 : index
    %92 = vector.load %arg13[%c1_50, %c0_51, %c0_52] : memref<6x1x64xf32, #tpu.memory_space<vmem>>, vector<1x1x64xf32>
    %93 = vector.shape_cast %92 : vector<1x1x64xf32> to vector<1x64xf32>
    %94 = vector.broadcast %93 : vector<1x64xf32> to vector<32x64xf32>
    %95 = arith.addf %91, %94 : vector<32x64xf32>
    %96 = arith.addf %66, %95 : vector<32x64xf32>
    %97 = vector.extract_strided_slice %96 {offsets = [0, 0], sizes = [32, 32], strides = [1, 1]} : vector<32x64xf32> to vector<32x32xf32>
    %c4_i32_53 = arith.constant 4 : i32
    %98 = tpu.dynamic_rotate %97 by %c4_i32_53 dim 0 : vector<32x32xf32>, i32 -> vector<32x32xf32>
    %cst_54 = arith.constant 0.000000e+00 : f32
    %99 = vector.broadcast %cst_54 : f32 to vector<32x32xf32>
    %100 = arith.select %36, %98, %99 : vector<32x32xi1>, vector<32x32xf32>
    %c2 = arith.constant 2 : index
    %c0_55 = arith.constant 0 : index
    %c0_56 = arith.constant 0 : index
    %101 = vector.load %arg10[%c2, %c0_55, %c0_56] : memref<6x32x64xf32, #tpu.memory_space<vmem>>, vector<1x32x64xf32>
    %102 = vector.shape_cast %101 : vector<1x32x64xf32> to vector<32x64xf32>
    %cst_57 = arith.constant dense<0.000000e+00> : vector<32x64xf32>
    %103 = tpu.matmul %100, %102, %cst_57 {dimension_numbers = #tpu.dot_dimension_numbers<[1], [0], [0], [1], [0, 0, 1, 1], [], []>} : vector<32x32xf32>, vector<32x64xf32>, vector<32x64xf32> -> vector<32x64xf32>
    %c2_58 = arith.constant 2 : index
    %c0_59 = arith.constant 0 : index
    %c0_60 = arith.constant 0 : index
    %104 = vector.load %arg11[%c2_58, %c0_59, %c0_60] : memref<6x32x64xf32, #tpu.memory_space<vmem>>, vector<1x32x64xf32>
    %105 = vector.shape_cast %104 : vector<1x32x64xf32> to vector<32x64xf32>
    %cst_61 = arith.constant dense<0.000000e+00> : vector<32x64xf32>
    %106 = tpu.matmul %97, %105, %cst_61 {dimension_numbers = #tpu.dot_dimension_numbers<[1], [0], [0], [1], [0, 0, 1, 1], [], []>} : vector<32x32xf32>, vector<32x64xf32>, vector<32x64xf32> -> vector<32x64xf32>
    %107 = arith.addf %103, %106 : vector<32x64xf32>
    %108 = vector.extract_strided_slice %27 {offsets = [0, 256], sizes = [32, 64], strides = [1, 1]} : vector<32x768xf32> to vector<32x64xf32>
    %109 = arith.addf %107, %108 : vector<32x64xf32>
    %110 = vector.extract_strided_slice %109 {offsets = [0, 0], sizes = [32, 32], strides = [1, 1]} : vector<32x64xf32> to vector<32x32xf32>
    %111 = arith.negf %110 : vector<32x32xf32>
    %112 = math.exp %111 : vector<32x32xf32>
    %cst_62 = arith.constant 1.000000e+00 : f32
    %113 = vector.broadcast %cst_62 : f32 to vector<32x32xf32>
    %114 = arith.addf %113, %112 : vector<32x32xf32>
    %115 = arith.divf %113, %114 : vector<32x32xf32>
    %116 = vector.extract_strided_slice %109 {offsets = [0, 32], sizes = [32, 32], strides = [1, 1]} : vector<32x64xf32> to vector<32x32xf32>
    %117 = math.tanh %116 : vector<32x32xf32>
    %118 = arith.mulf %115, %117 : vector<32x32xf32>
    %c2_63 = arith.constant 2 : index
    %c0_64 = arith.constant 0 : index
    %c0_65 = arith.constant 0 : index
    %119 = vector.load %arg12[%c2_63, %c0_64, %c0_65] : memref<6x32x64xf32, #tpu.memory_space<vmem>>, vector<1x32x64xf32>
    %120 = vector.shape_cast %119 : vector<1x32x64xf32> to vector<32x64xf32>
    %cst_66 = arith.constant dense<0.000000e+00> : vector<32x64xf32>
    %121 = tpu.matmul %118, %120, %cst_66 {dimension_numbers = #tpu.dot_dimension_numbers<[1], [0], [0], [1], [0, 0, 1, 1], [], []>} : vector<32x32xf32>, vector<32x64xf32>, vector<32x64xf32> -> vector<32x64xf32>
    %c2_67 = arith.constant 2 : index
    %c0_68 = arith.constant 0 : index
    %c0_69 = arith.constant 0 : index
    %122 = vector.load %arg13[%c2_67, %c0_68, %c0_69] : memref<6x1x64xf32, #tpu.memory_space<vmem>>, vector<1x1x64xf32>
    %123 = vector.shape_cast %122 : vector<1x1x64xf32> to vector<1x64xf32>
    %124 = vector.broadcast %123 : vector<1x64xf32> to vector<32x64xf32>
    %125 = arith.addf %121, %124 : vector<32x64xf32>
    %126 = arith.addf %96, %125 : vector<32x64xf32>
    %127 = vector.extract_strided_slice %126 {offsets = [0, 0], sizes = [32, 32], strides = [1, 1]} : vector<32x64xf32> to vector<32x32xf32>
    %c1_i32_70 = arith.constant 1 : i32
    %128 = tpu.dynamic_rotate %127 by %c1_i32_70 dim 0 : vector<32x32xf32>, i32 -> vector<32x32xf32>
    %cst_71 = arith.constant 0.000000e+00 : f32
    %129 = vector.broadcast %cst_71 : f32 to vector<32x32xf32>
    %130 = arith.select %32, %128, %129 : vector<32x32xi1>, vector<32x32xf32>
    %c3 = arith.constant 3 : index
    %c0_72 = arith.constant 0 : index
    %c0_73 = arith.constant 0 : index
    %131 = vector.load %arg10[%c3, %c0_72, %c0_73] : memref<6x32x64xf32, #tpu.memory_space<vmem>>, vector<1x32x64xf32>
    %132 = vector.shape_cast %131 : vector<1x32x64xf32> to vector<32x64xf32>
    %cst_74 = arith.constant dense<0.000000e+00> : vector<32x64xf32>
    %133 = tpu.matmul %130, %132, %cst_74 {dimension_numbers = #tpu.dot_dimension_numbers<[1], [0], [0], [1], [0, 0, 1, 1], [], []>} : vector<32x32xf32>, vector<32x64xf32>, vector<32x64xf32> -> vector<32x64xf32>
    %c3_75 = arith.constant 3 : index
    %c0_76 = arith.constant 0 : index
    %c0_77 = arith.constant 0 : index
    %134 = vector.load %arg11[%c3_75, %c0_76, %c0_77] : memref<6x32x64xf32, #tpu.memory_space<vmem>>, vector<1x32x64xf32>
    %135 = vector.shape_cast %134 : vector<1x32x64xf32> to vector<32x64xf32>
    %cst_78 = arith.constant dense<0.000000e+00> : vector<32x64xf32>
    %136 = tpu.matmul %127, %135, %cst_78 {dimension_numbers = #tpu.dot_dimension_numbers<[1], [0], [0], [1], [0, 0, 1, 1], [], []>} : vector<32x32xf32>, vector<32x64xf32>, vector<32x64xf32> -> vector<32x64xf32>
    %137 = arith.addf %133, %136 : vector<32x64xf32>
    %138 = vector.extract_strided_slice %27 {offsets = [0, 384], sizes = [32, 64], strides = [1, 1]} : vector<32x768xf32> to vector<32x64xf32>
    %139 = arith.addf %137, %138 : vector<32x64xf32>
    %140 = vector.extract_strided_slice %139 {offsets = [0, 0], sizes = [32, 32], strides = [1, 1]} : vector<32x64xf32> to vector<32x32xf32>
    %141 = arith.negf %140 : vector<32x32xf32>
    %142 = math.exp %141 : vector<32x32xf32>
    %cst_79 = arith.constant 1.000000e+00 : f32
    %143 = vector.broadcast %cst_79 : f32 to vector<32x32xf32>
    %144 = arith.addf %143, %142 : vector<32x32xf32>
    %145 = arith.divf %143, %144 : vector<32x32xf32>
    %146 = vector.extract_strided_slice %139 {offsets = [0, 32], sizes = [32, 32], strides = [1, 1]} : vector<32x64xf32> to vector<32x32xf32>
    %147 = math.tanh %146 : vector<32x32xf32>
    %148 = arith.mulf %145, %147 : vector<32x32xf32>
    %c3_80 = arith.constant 3 : index
    %c0_81 = arith.constant 0 : index
    %c0_82 = arith.constant 0 : index
    %149 = vector.load %arg12[%c3_80, %c0_81, %c0_82] : memref<6x32x64xf32, #tpu.memory_space<vmem>>, vector<1x32x64xf32>
    %150 = vector.shape_cast %149 : vector<1x32x64xf32> to vector<32x64xf32>
    %cst_83 = arith.constant dense<0.000000e+00> : vector<32x64xf32>
    %151 = tpu.matmul %148, %150, %cst_83 {dimension_numbers = #tpu.dot_dimension_numbers<[1], [0], [0], [1], [0, 0, 1, 1], [], []>} : vector<32x32xf32>, vector<32x64xf32>, vector<32x64xf32> -> vector<32x64xf32>
    %c3_84 = arith.constant 3 : index
    %c0_85 = arith.constant 0 : index
    %c0_86 = arith.constant 0 : index
    %152 = vector.load %arg13[%c3_84, %c0_85, %c0_86] : memref<6x1x64xf32, #tpu.memory_space<vmem>>, vector<1x1x64xf32>
    %153 = vector.shape_cast %152 : vector<1x1x64xf32> to vector<1x64xf32>
    %154 = vector.broadcast %153 : vector<1x64xf32> to vector<32x64xf32>
    %155 = arith.addf %151, %154 : vector<32x64xf32>
    %156 = arith.addf %126, %155 : vector<32x64xf32>
    %157 = vector.extract_strided_slice %156 {offsets = [0, 0], sizes = [32, 32], strides = [1, 1]} : vector<32x64xf32> to vector<32x32xf32>
    %c2_i32_87 = arith.constant 2 : i32
    %158 = tpu.dynamic_rotate %157 by %c2_i32_87 dim 0 : vector<32x32xf32>, i32 -> vector<32x32xf32>
    %cst_88 = arith.constant 0.000000e+00 : f32
    %159 = vector.broadcast %cst_88 : f32 to vector<32x32xf32>
    %160 = arith.select %34, %158, %159 : vector<32x32xi1>, vector<32x32xf32>
    %c4 = arith.constant 4 : index
    %c0_89 = arith.constant 0 : index
    %c0_90 = arith.constant 0 : index
    %161 = vector.load %arg10[%c4, %c0_89, %c0_90] : memref<6x32x64xf32, #tpu.memory_space<vmem>>, vector<1x32x64xf32>
    %162 = vector.shape_cast %161 : vector<1x32x64xf32> to vector<32x64xf32>
    %cst_91 = arith.constant dense<0.000000e+00> : vector<32x64xf32>
    %163 = tpu.matmul %160, %162, %cst_91 {dimension_numbers = #tpu.dot_dimension_numbers<[1], [0], [0], [1], [0, 0, 1, 1], [], []>} : vector<32x32xf32>, vector<32x64xf32>, vector<32x64xf32> -> vector<32x64xf32>
    %c4_92 = arith.constant 4 : index
    %c0_93 = arith.constant 0 : index
    %c0_94 = arith.constant 0 : index
    %164 = vector.load %arg11[%c4_92, %c0_93, %c0_94] : memref<6x32x64xf32, #tpu.memory_space<vmem>>, vector<1x32x64xf32>
    %165 = vector.shape_cast %164 : vector<1x32x64xf32> to vector<32x64xf32>
    %cst_95 = arith.constant dense<0.000000e+00> : vector<32x64xf32>
    %166 = tpu.matmul %157, %165, %cst_95 {dimension_numbers = #tpu.dot_dimension_numbers<[1], [0], [0], [1], [0, 0, 1, 1], [], []>} : vector<32x32xf32>, vector<32x64xf32>, vector<32x64xf32> -> vector<32x64xf32>
    %167 = arith.addf %163, %166 : vector<32x64xf32>
    %168 = vector.extract_strided_slice %27 {offsets = [0, 512], sizes = [32, 64], strides = [1, 1]} : vector<32x768xf32> to vector<32x64xf32>
    %169 = arith.addf %167, %168 : vector<32x64xf32>
    %170 = vector.extract_strided_slice %169 {offsets = [0, 0], sizes = [32, 32], strides = [1, 1]} : vector<32x64xf32> to vector<32x32xf32>
    %171 = arith.negf %170 : vector<32x32xf32>
    %172 = math.exp %171 : vector<32x32xf32>
    %cst_96 = arith.constant 1.000000e+00 : f32
    %173 = vector.broadcast %cst_96 : f32 to vector<32x32xf32>
    %174 = arith.addf %173, %172 : vector<32x32xf32>
    %175 = arith.divf %173, %174 : vector<32x32xf32>
    %176 = vector.extract_strided_slice %169 {offsets = [0, 32], sizes = [32, 32], strides = [1, 1]} : vector<32x64xf32> to vector<32x32xf32>
    %177 = math.tanh %176 : vector<32x32xf32>
    %178 = arith.mulf %175, %177 : vector<32x32xf32>
    %c4_97 = arith.constant 4 : index
    %c0_98 = arith.constant 0 : index
    %c0_99 = arith.constant 0 : index
    %179 = vector.load %arg12[%c4_97, %c0_98, %c0_99] : memref<6x32x64xf32, #tpu.memory_space<vmem>>, vector<1x32x64xf32>
    %180 = vector.shape_cast %179 : vector<1x32x64xf32> to vector<32x64xf32>
    %cst_100 = arith.constant dense<0.000000e+00> : vector<32x64xf32>
    %181 = tpu.matmul %178, %180, %cst_100 {dimension_numbers = #tpu.dot_dimension_numbers<[1], [0], [0], [1], [0, 0, 1, 1], [], []>} : vector<32x32xf32>, vector<32x64xf32>, vector<32x64xf32> -> vector<32x64xf32>
    %c4_101 = arith.constant 4 : index
    %c0_102 = arith.constant 0 : index
    %c0_103 = arith.constant 0 : index
    %182 = vector.load %arg13[%c4_101, %c0_102, %c0_103] : memref<6x1x64xf32, #tpu.memory_space<vmem>>, vector<1x1x64xf32>
    %183 = vector.shape_cast %182 : vector<1x1x64xf32> to vector<1x64xf32>
    %184 = vector.broadcast %183 : vector<1x64xf32> to vector<32x64xf32>
    %185 = arith.addf %181, %184 : vector<32x64xf32>
    %186 = arith.addf %156, %185 : vector<32x64xf32>
    %187 = vector.extract_strided_slice %186 {offsets = [0, 0], sizes = [32, 32], strides = [1, 1]} : vector<32x64xf32> to vector<32x32xf32>
    %c4_i32_104 = arith.constant 4 : i32
    %188 = tpu.dynamic_rotate %187 by %c4_i32_104 dim 0 : vector<32x32xf32>, i32 -> vector<32x32xf32>
    %cst_105 = arith.constant 0.000000e+00 : f32
    %189 = vector.broadcast %cst_105 : f32 to vector<32x32xf32>
    %190 = arith.select %36, %188, %189 : vector<32x32xi1>, vector<32x32xf32>
    %c5 = arith.constant 5 : index
    %c0_106 = arith.constant 0 : index
    %c0_107 = arith.constant 0 : index
    %191 = vector.load %arg10[%c5, %c0_106, %c0_107] : memref<6x32x64xf32, #tpu.memory_space<vmem>>, vector<1x32x64xf32>
    %192 = vector.shape_cast %191 : vector<1x32x64xf32> to vector<32x64xf32>
    %cst_108 = arith.constant dense<0.000000e+00> : vector<32x64xf32>
    %193 = tpu.matmul %190, %192, %cst_108 {dimension_numbers = #tpu.dot_dimension_numbers<[1], [0], [0], [1], [0, 0, 1, 1], [], []>} : vector<32x32xf32>, vector<32x64xf32>, vector<32x64xf32> -> vector<32x64xf32>
    %c5_109 = arith.constant 5 : index
    %c0_110 = arith.constant 0 : index
    %c0_111 = arith.constant 0 : index
    %194 = vector.load %arg11[%c5_109, %c0_110, %c0_111] : memref<6x32x64xf32, #tpu.memory_space<vmem>>, vector<1x32x64xf32>
    %195 = vector.shape_cast %194 : vector<1x32x64xf32> to vector<32x64xf32>
    %cst_112 = arith.constant dense<0.000000e+00> : vector<32x64xf32>
    %196 = tpu.matmul %187, %195, %cst_112 {dimension_numbers = #tpu.dot_dimension_numbers<[1], [0], [0], [1], [0, 0, 1, 1], [], []>} : vector<32x32xf32>, vector<32x64xf32>, vector<32x64xf32> -> vector<32x64xf32>
    %197 = arith.addf %193, %196 : vector<32x64xf32>
    %198 = vector.extract_strided_slice %27 {offsets = [0, 640], sizes = [32, 64], strides = [1, 1]} : vector<32x768xf32> to vector<32x64xf32>
    %199 = arith.addf %197, %198 : vector<32x64xf32>
    %200 = vector.extract_strided_slice %199 {offsets = [0, 0], sizes = [32, 32], strides = [1, 1]} : vector<32x64xf32> to vector<32x32xf32>
    %201 = arith.negf %200 : vector<32x32xf32>
    %202 = math.exp %201 : vector<32x32xf32>
    %cst_113 = arith.constant 1.000000e+00 : f32
    %203 = vector.broadcast %cst_113 : f32 to vector<32x32xf32>
    %204 = arith.addf %203, %202 : vector<32x32xf32>
    %205 = arith.divf %203, %204 : vector<32x32xf32>
    %206 = vector.extract_strided_slice %199 {offsets = [0, 32], sizes = [32, 32], strides = [1, 1]} : vector<32x64xf32> to vector<32x32xf32>
    %207 = math.tanh %206 : vector<32x32xf32>
    %208 = arith.mulf %205, %207 : vector<32x32xf32>
    %c5_114 = arith.constant 5 : index
    %c0_115 = arith.constant 0 : index
    %c0_116 = arith.constant 0 : index
    %209 = vector.load %arg12[%c5_114, %c0_115, %c0_116] : memref<6x32x64xf32, #tpu.memory_space<vmem>>, vector<1x32x64xf32>
    %210 = vector.shape_cast %209 : vector<1x32x64xf32> to vector<32x64xf32>
    %cst_117 = arith.constant dense<0.000000e+00> : vector<32x64xf32>
    %211 = tpu.matmul %208, %210, %cst_117 {dimension_numbers = #tpu.dot_dimension_numbers<[1], [0], [0], [1], [0, 0, 1, 1], [], []>} : vector<32x32xf32>, vector<32x64xf32>, vector<32x64xf32> -> vector<32x64xf32>
    %c5_118 = arith.constant 5 : index
    %c0_119 = arith.constant 0 : index
    %c0_120 = arith.constant 0 : index
    %212 = vector.load %arg13[%c5_118, %c0_119, %c0_120] : memref<6x1x64xf32, #tpu.memory_space<vmem>>, vector<1x1x64xf32>
    %213 = vector.shape_cast %212 : vector<1x1x64xf32> to vector<1x64xf32>
    %214 = vector.broadcast %213 : vector<1x64xf32> to vector<32x64xf32>
    %215 = arith.addf %211, %214 : vector<32x64xf32>
    %216 = arith.addf %186, %215 : vector<32x64xf32>
    %217 = vector.extract_strided_slice %216 {offsets = [0, 32], sizes = [32, 32], strides = [1, 1]} : vector<32x64xf32> to vector<32x32xf32>
    %cst_121 = arith.constant 0.000000e+00 : f32
    %218 = vector.broadcast %cst_121 : f32 to vector<32x32xf32>
    %219 = arith.maximumf %217, %218 : vector<32x32xf32>
    %c0_122 = arith.constant 0 : index
    %c0_123 = arith.constant 0 : index
    %220 = vector.load %arg14[%c0_122, %c0_123] : memref<32x32xf32, #tpu.memory_space<vmem>>, vector<32x32xf32>
    %cst_124 = arith.constant dense<0.000000e+00> : vector<32x32xf32>
    %221 = tpu.matmul %219, %220, %cst_124 {dimension_numbers = #tpu.dot_dimension_numbers<[1], [0], [0], [1], [0, 0, 1, 1], [], []>} : vector<32x32xf32>, vector<32x32xf32>, vector<32x32xf32> -> vector<32x32xf32>
    %c0_125 = arith.constant 0 : index
    %c0_126 = arith.constant 0 : index
    %222 = vector.load %arg15[%c0_125, %c0_126] : memref<4x32xf32, #tpu.memory_space<vmem>>, vector<4x32xf32>
    %cst_127 = arith.constant dense<0.000000e+00> : vector<32x32xf32>
    %223 = tpu.matmul %1, %222, %cst_127 {dimension_numbers = #tpu.dot_dimension_numbers<[1], [0], [0], [1], [0, 0, 1, 1], [], []>} : vector<32x4xf32>, vector<4x32xf32>, vector<32x32xf32> -> vector<32x32xf32>
    %224 = arith.addf %221, %223 : vector<32x32xf32>
    %c0_128 = arith.constant 0 : index
    %c0_129 = arith.constant 0 : index
    %225 = vector.load %arg16[%c0_128, %c0_129] : memref<1x32xf32, #tpu.memory_space<vmem>>, vector<1x32xf32>
    %226 = vector.broadcast %225 : vector<1x32xf32> to vector<32x32xf32>
    %227 = arith.addf %224, %226 : vector<32x32xf32>
    %cst_130 = arith.constant 0.000000e+00 : f32
    %228 = vector.broadcast %cst_130 : f32 to vector<32x32xf32>
    %229 = arith.maximumf %227, %228 : vector<32x32xf32>
    %c0_131 = arith.constant 0 : index
    %c0_132 = arith.constant 0 : index
    %230 = vector.load %arg17[%c0_131, %c0_132] : memref<32x256xf32, #tpu.memory_space<vmem>>, vector<32x256xf32>
    %cst_133 = arith.constant dense<0.000000e+00> : vector<32x256xf32>
    %231 = tpu.matmul %229, %230, %cst_133 {dimension_numbers = #tpu.dot_dimension_numbers<[1], [0], [0], [1], [0, 0, 1, 1], [], []>} : vector<32x32xf32>, vector<32x256xf32>, vector<32x256xf32> -> vector<32x256xf32>
    %c0_134 = arith.constant 0 : index
    %c0_135 = arith.constant 0 : index
    %232 = vector.load %arg18[%c0_134, %c0_135] : memref<1x256xf32, #tpu.memory_space<vmem>>, vector<1x256xf32>
    %233 = vector.broadcast %232 : vector<1x256xf32> to vector<32x256xf32>
    %234 = arith.addf %231, %233 : vector<32x256xf32>
    %c0_136 = arith.constant 0 : index
    %c0_137 = arith.constant 0 : index
    %235 = vector.load %arg19[%c0_136, %c0_137] : memref<32x256xf32, #tpu.memory_space<vmem>>, vector<32x256xf32>
    tpu.vector_store %arg19[%c0_136, %c0_137], %234 {strides = array<i32>} : memref<32x256xf32, #tpu.memory_space<vmem>>, vector<32x256xf32>,
    return
  }
  func.func @transform_0(%arg0: i32) -> (i32, i32) {
    %c0_i32 = arith.constant 0 : i32
    %c0_i32_0 = arith.constant 0 : i32
    return %arg0, %c0_i32 : i32, i32
  }
  func.func @transform_1(%arg0: i32) -> (i32, i32) {
    %c0_i32 = arith.constant 0 : i32
    %c0_i32_0 = arith.constant 0 : i32
    return %arg0, %c0_i32 : i32, i32
  }
  func.func @transform_2(%arg0: i32) -> (i32, i32) {
    %c0_i32 = arith.constant 0 : i32
    %c0_i32_0 = arith.constant 0 : i32
    return %arg0, %c0_i32 : i32, i32
  }
  func.func @transform_3(%arg0: i32) -> (i32, i32) {
    %c0_i32 = arith.constant 0 : i32
    %c0_i32_0 = arith.constant 0 : i32
    %c0_i32_1 = arith.constant 0 : i32
    return %c0_i32, %c0_i32_0 : i32, i32
  }
  func.func @transform_4(%arg0: i32) -> (i32, i32) {
    %c0_i32 = arith.constant 0 : i32
    %c0_i32_0 = arith.constant 0 : i32
    %c0_i32_1 = arith.constant 0 : i32
    return %c0_i32, %c0_i32_0 : i32, i32
  }
  func.func @transform_5(%arg0: i32) -> (i32, i32) {
    %c0_i32 = arith.constant 0 : i32
    %c0_i32_0 = arith.constant 0 : i32
    %c0_i32_1 = arith.constant 0 : i32
    return %c0_i32, %c0_i32_0 : i32, i32
  }
  func.func @transform_6(%arg0: i32) -> (i32, i32) {
    %c0_i32 = arith.constant 0 : i32
    %c0_i32_0 = arith.constant 0 : i32
    %c0_i32_1 = arith.constant 0 : i32
    return %c0_i32, %c0_i32_0 : i32, i32
  }
  func.func @transform_7(%arg0: i32) -> (i32, i32) {
    %c0_i32 = arith.constant 0 : i32
    %c0_i32_0 = arith.constant 0 : i32
    %c0_i32_1 = arith.constant 0 : i32
    return %c0_i32, %c0_i32_0 : i32, i32
  }
  func.func @transform_8(%arg0: i32) -> (i32, i32) {
    %c0_i32 = arith.constant 0 : i32
    %c0_i32_0 = arith.constant 0 : i32
    %c0_i32_1 = arith.constant 0 : i32
    return %c0_i32, %c0_i32_0 : i32, i32
  }
  func.func @transform_9(%arg0: i32) -> (i32, i32, i32) {
    %c0_i32 = arith.constant 0 : i32
    %c0_i32_0 = arith.constant 0 : i32
    %c0_i32_1 = arith.constant 0 : i32
    %c0_i32_2 = arith.constant 0 : i32
    return %c0_i32, %c0_i32_0, %c0_i32_1 : i32, i32, i32
  }
  func.func @transform_10(%arg0: i32) -> (i32, i32, i32) {
    %c0_i32 = arith.constant 0 : i32
    %c0_i32_0 = arith.constant 0 : i32
    %c0_i32_1 = arith.constant 0 : i32
    %c0_i32_2 = arith.constant 0 : i32
    return %c0_i32, %c0_i32_0, %c0_i32_1 : i32, i32, i32
  }
  func.func @transform_11(%arg0: i32) -> (i32, i32, i32) {
    %c0_i32 = arith.constant 0 : i32
    %c0_i32_0 = arith.constant 0 : i32
    %c0_i32_1 = arith.constant 0 : i32
    %c0_i32_2 = arith.constant 0 : i32
    return %c0_i32, %c0_i32_0, %c0_i32_1 : i32, i32, i32
  }
  func.func @transform_12(%arg0: i32) -> (i32, i32, i32) {
    %c0_i32 = arith.constant 0 : i32
    %c0_i32_0 = arith.constant 0 : i32
    %c0_i32_1 = arith.constant 0 : i32
    %c0_i32_2 = arith.constant 0 : i32
    return %c0_i32, %c0_i32_0, %c0_i32_1 : i32, i32, i32
  }
  func.func @transform_13(%arg0: i32) -> (i32, i32) {
    %c0_i32 = arith.constant 0 : i32
    %c0_i32_0 = arith.constant 0 : i32
    %c0_i32_1 = arith.constant 0 : i32
    return %c0_i32, %c0_i32_0 : i32, i32
  }
  func.func @transform_14(%arg0: i32) -> (i32, i32) {
    %c0_i32 = arith.constant 0 : i32
    %c0_i32_0 = arith.constant 0 : i32
    %c0_i32_1 = arith.constant 0 : i32
    return %c0_i32, %c0_i32_0 : i32, i32
  }
  func.func @transform_15(%arg0: i32) -> (i32, i32) {
    %c0_i32 = arith.constant 0 : i32
    %c0_i32_0 = arith.constant 0 : i32
    %c0_i32_1 = arith.constant 0 : i32
    return %c0_i32, %c0_i32_0 : i32, i32
  }
  func.func @transform_16(%arg0: i32) -> (i32, i32) {
    %c0_i32 = arith.constant 0 : i32
    %c0_i32_0 = arith.constant 0 : i32
    %c0_i32_1 = arith.constant 0 : i32
    return %c0_i32, %c0_i32_0 : i32, i32
  }
  func.func @transform_17(%arg0: i32) -> (i32, i32) {
    %c0_i32 = arith.constant 0 : i32
    %c0_i32_0 = arith.constant 0 : i32
    %c0_i32_1 = arith.constant 0 : i32
    return %c0_i32, %c0_i32_0 : i32, i32
  }
  func.func @transform_18(%arg0: i32) -> (i32, i32) {
    %c0_i32 = arith.constant 0 : i32
    %c0_i32_0 = arith.constant 0 : i32
    return %arg0, %c0_i32 : i32, i32
  }
}

</mosaic_0001>

<llo_original>
// kernel: tpu_custom_call.1
$region0: #{tpu_custom_call.1}
  #allocation0 [shape = 'u32[]', space=smem, size = 0x4, offset = 0x4, fixed_abs, tag = 'smem constant byte address 0x4 - core index']
  #allocation1 [shape = 'u32[144,128]{1,0:T(1,128)}', space=vmem, size = 0x12000, scoped, tag = 'internal scratch']
  %s0 = inlined_call_operand.vmem [shape: f32[32,2], index: 0, kind: input, shape index: {}]
  %s1 = inlined_call_operand.vmem [shape: f32[32,4], index: 1, kind: input, shape index: {}]
  %s2 = inlined_call_operand.vmem [shape: s32[32,1], index: 2, kind: input, shape index: {}]
  %s3 = inlined_call_operand.hbm [shape: f32[2,32], index: 3, kind: input, shape index: {}]
  %s4 = inlined_call_operand.hbm [shape: f32[1,32], index: 4, kind: input, shape index: {}]
  %s5 = inlined_call_operand.vmem [shape: f32[32,32], index: 5, kind: input, shape index: {}]
  %s6 = inlined_call_operand.hbm [shape: f32[1,32], index: 6, kind: input, shape index: {}]
  %s7 = inlined_call_operand.hbm [shape: f32[4,768], index: 7, kind: input, shape index: {}]
  %s8 = inlined_call_operand.hbm [shape: f32[1,768], index: 8, kind: input, shape index: {}]
  %s9 = inlined_call_operand.hbm [shape: f32[6,32,64], index: 9, kind: input, shape index: {}]
  %s10 = inlined_call_operand.hbm [shape: f32[6,32,64], index: 10, kind: input, shape index: {}]
  %s11 = inlined_call_operand.hbm [shape: f32[6,32,64], index: 11, kind: input, shape index: {}]
  %s12 = inlined_call_operand.vmem [shape: f32[6,1,64], index: 12, kind: input, shape index: {}]
  %s13 = inlined_call_operand.vmem [shape: f32[32,32], index: 13, kind: input, shape index: {}]
  %s14 = inlined_call_operand.vmem [shape: f32[4,32], index: 14, kind: input, shape index: {}]
  %s15 = inlined_call_operand.vmem [shape: f32[1,32], index: 15, kind: input, shape index: {}]
  %s16 = inlined_call_operand.vmem [shape: f32[32,256], index: 16, kind: input, shape index: {}]
  %s17 = inlined_call_operand.vmem [shape: f32[1,256], index: 17, kind: input, shape index: {}]
  %s18 = inlined_call_operand.hbm [shape: f32[32,256], index: 18, kind: output, shape index: {}]
  %s19 = sld [smem:[#allocation0]]
  $region114: #{tpu_custom_call.1} parent=0
    _
  %s21 = ssub.s32 1, %s19
  %s22 = scalar_select 0, %s21, %s19
  $region1: #{tpu_custom_call.1} parent=0
    #allocation2 [shape = 'u8[1024]{0}', space=vmem, size = 0x400, scoped, tag = 'input window, operand 3, single buffered']
    #allocation3 [shape = 's32[1]{0}', space=sflag, size = 0x4, scoped, tag = 'scoped memory for tpu_custom_call.1']
    #allocation4 [shape = 's32[1]{0}', space=sflag, size = 0x4, scoped, tag = 'scoped memory for tpu_custom_call.1']
    #allocation5 [shape = 'u8[512]{0}', space=vmem, size = 0x400, scoped, tag = 'input window, operand 4, single buffered']
    #allocation6 [shape = 's32[1]{0}', space=sflag, size = 0x4, scoped, tag = 'scoped memory for tpu_custom_call.1']
    #allocation7 [shape = 'u8[512]{0}', space=vmem, size = 0x400, scoped, tag = 'input window, operand 6, single buffered']
    #allocation8 [shape = 'u8[12288]{0}', space=vmem, size = 0x3000, scoped, tag = 'input window, operand 7, single buffered']
    #allocation9 [shape = 's32[1]{0}', space=sflag, size = 0x4, scoped, tag = 'scoped memory for tpu_custom_call.1']
    #allocation10 [shape = 'u8[3072]{0}', space=vmem, size = 0xc00, scoped, tag = 'input window, operand 8, single buffered']
    #allocation11 [shape = 'u8[98304]{0}', space=vmem, size = 0x18000, scoped, tag = 'input window, operand 9, single buffered']
    #allocation12 [shape = 's32[1]{0}', space=sflag, size = 0x4, scoped, tag = 'scoped memory for tpu_custom_call.1']
    #allocation13 [shape = 'u8[98304]{0}', space=vmem, size = 0x18000, scoped, tag = 'input window, operand 10, single buffered']
    #allocation14 [shape = 'u8[98304]{0}', space=vmem, size = 0x18000, scoped, tag = 'input window, operand 11, single buffered']
    #allocation15 [shape = 's32[1]{0}', space=sflag, size = 0x4, scoped, tag = 'scoped memory for tpu_custom_call.1']
    #allocation16 [shape = 'u8[32768]{0}', space=vmem, size = 0x8000, scoped, tag = 'output window, operand 0, single buffered']
    %23 = vsyncpa [#allocation3], 0
    %24 = vsyncpa [#allocation6], 0
    %25 = vsyncpa [#allocation9], 0
    %26 = vsyncpa [#allocation12], 0
    %27 = vsyncpa [#allocation15], 0
    %28 = vsyncpa [#allocation4], 0
    // Predicated region
    $region2: #{tpu_custom_call.1} parent=1 // pred_check
      _
    $region3: #{tpu_custom_call.1} parent=1 // pred_check_branch
      %30 = sbr.rel (0) target = $region5
    $region4: #{tpu_custom_call.1} parent=1 // pred_region
      _
    $region5: #{tpu_custom_call.1} parent=1 // pred_fallthru
      _
    // Predicated region
    $region6: #{tpu_custom_call.1} parent=1 // pred_check
      _
    $region7: #{tpu_custom_call.1} parent=1 // pred_check_branch
      %32 = sbr.rel (0) target = $region9
    $region8: #{tpu_custom_call.1} parent=1 // pred_region
      _
    $region9: #{tpu_custom_call.1} parent=1 // pred_fallthru
      _
    // Predicated region
    $region10: #{tpu_custom_call.1} parent=1 // pred_check
      _
    $region11: #{tpu_custom_call.1} parent=1 // pred_check_branch
      %34 = sbr.rel (0) target = $region13
    $region12: #{tpu_custom_call.1} parent=1 // pred_region
      _
    $region13: #{tpu_custom_call.1} parent=1 // pred_fallthru
      _
    // Predicated region
    $region14: #{tpu_custom_call.1} parent=1 // pred_check
      _
    $region15: #{tpu_custom_call.1} parent=1 // pred_check_branch
      %36 = sbr.rel (0) target = $region17
    $region16: #{tpu_custom_call.1} parent=1 // pred_region
      %s38 = ssub.s32 32, 32
      %39 = vsyncadd [#allocation3], %s38
      %s41 = sshll.u32 [#allocation2], 4
      %s42 = int_to_ptr.vmem [resolvable:$true] %s41
      %44 = dma.hbm_to_vmem [thread:$0]  %s3, 32, %s42, [#allocation3]
    $region17: #{tpu_custom_call.1} parent=1 // pred_fallthru
      _
    // Predicated region
    $region18: #{tpu_custom_call.1} parent=1 // pred_check
      _
    $region19: #{tpu_custom_call.1} parent=1 // pred_check_branch
      %46 = sbr.rel (0) target = $region21
    $region20: #{tpu_custom_call.1} parent=1 // pred_region
      %s48 = ssub.s32 16, 16
      %49 = vsyncadd [#allocation6], %s48
      %s51 = sshll.u32 [#allocation5], 4
      %s52 = int_to_ptr.vmem [resolvable:$true] %s51
      %54 = dma.hbm_to_vmem [thread:$0]  %s4, 16, %s52, [#allocation6]
    $region21: #{tpu_custom_call.1} parent=1 // pred_fallthru
      _
    // Predicated region
    $region22: #{tpu_custom_call.1} parent=1 // pred_check
      _
    $region23: #{tpu_custom_call.1} parent=1 // pred_check_branch
      %56 = sbr.rel (0) target = $region25
    $region24: #{tpu_custom_call.1} parent=1 // pred_region
      _
    $region25: #{tpu_custom_call.1} parent=1 // pred_fallthru
      _
    // Predicated region
    $region26: #{tpu_custom_call.1} parent=1 // pred_check
      _
    $region27: #{tpu_custom_call.1} parent=1 // pred_check_branch
      %58 = sbr.rel (0) target = $region29
    $region28: #{tpu_custom_call.1} parent=1 // pred_region
      %s60 = ssub.s32 16, 16
      %61 = vsyncadd [#allocation6], %s60
      %s63 = sshll.u32 [#allocation7], 4
      %s64 = int_to_ptr.vmem [resolvable:$true] %s63
      %66 = dma.hbm_to_vmem [thread:$0]  %s6, 16, %s64, [#allocation6]
    $region29: #{tpu_custom_call.1} parent=1 // pred_fallthru
      _
    // Predicated region
    $region30: #{tpu_custom_call.1} parent=1 // pred_check
      _
    $region31: #{tpu_custom_call.1} parent=1 // pred_check_branch
      %68 = sbr.rel (0) target = $region33
    $region32: #{tpu_custom_call.1} parent=1 // pred_region
      %s70 = ssub.s32 384, 384
      %71 = vsyncadd [#allocation9], %s70
      %s73 = sshll.u32 [#allocation8], 4
      %s74 = int_to_ptr.vmem [resolvable:$true] %s73
      %76 = dma.hbm_to_vmem [thread:$0]  %s7, 384, %s74, [#allocation9]
    $region33: #{tpu_custom_call.1} parent=1 // pred_fallthru
      _
    // Predicated region
    $region34: #{tpu_custom_call.1} parent=1 // pred_check
      _
    $region35: #{tpu_custom_call.1} parent=1 // pred_check_branch
      %78 = sbr.rel (0) target = $region37
    $region36: #{tpu_custom_call.1} parent=1 // pred_region
      %s80 = ssub.s32 96, 96
      %81 = vsyncadd [#allocation9], %s80
      %s83 = sshll.u32 [#allocation10], 4
      %s84 = int_to_ptr.vmem [resolvable:$true] %s83
      %86 = dma.hbm_to_vmem [thread:$0]  %s8, 96, %s84, [#allocation9]
    $region37: #{tpu_custom_call.1} parent=1 // pred_fallthru
      _
    // Predicated region
    $region38: #{tpu_custom_call.1} parent=1 // pred_check
      _
    $region39: #{tpu_custom_call.1} parent=1 // pred_check_branch
      %88 = sbr.rel (0) target = $region41
    $region40: #{tpu_custom_call.1} parent=1 // pred_region
      %s90 = ssub.s32 3072, 3072
      %91 = vsyncadd [#allocation12], %s90
      %s92 = sshll.u32 [#allocation11], 4
      %s93 = int_to_ptr.vmem [resolvable:$true] %s92
      %98 = dma.hbm_to_vmem [thread:$0]  %s9, 3072, %s93, [#allocation12], 128, 128, 8
    $region41: #{tpu_custom_call.1} parent=1 // pred_fallthru
      _
    // Predicated region
    $region42: #{tpu_custom_call.1} parent=1 // pred_check
      _
    $region43: #{tpu_custom_call.1} parent=1 // pred_check_branch
      %100 = sbr.rel (0) target = $region45
    $region44: #{tpu_custom_call.1} parent=1 // pred_region
      %s102 = ssub.s32 3072, 3072
      %103 = vsyncadd [#allocation12], %s102
      %s104 = sshll.u32 [#allocation13], 4
      %s105 = int_to_ptr.vmem [resolvable:$true] %s104
      %110 = dma.hbm_to_vmem [thread:$0]  %s10, 3072, %s105, [#allocation12], 128, 128, 8
    $region45: #{tpu_custom_call.1} parent=1 // pred_fallthru
      _
    // Predicated region
    $region46: #{tpu_custom_call.1} parent=1 // pred_check
      _
    $region47: #{tpu_custom_call.1} parent=1 // pred_check_branch
      %112 = sbr.rel (0) target = $region49
    $region48: #{tpu_custom_call.1} parent=1 // pred_region
      %s114 = ssub.s32 3072, 3072
      %115 = vsyncadd [#allocation15], %s114
      %s116 = sshll.u32 [#allocation14], 4
      %s117 = int_to_ptr.vmem [resolvable:$true] %s116
      %122 = dma.hbm_to_vmem [thread:$0]  %s11, 3072, %s117, [#allocation15], 128, 128, 8
    $region49: #{tpu_custom_call.1} parent=1 // pred_fallthru
      _
    // Predicated region
    $region50: #{tpu_custom_call.1} parent=1 // pred_check
      _
    $region51: #{tpu_custom_call.1} parent=1 // pred_check_branch
      %124 = sbr.rel (0) target = $region53
    $region52: #{tpu_custom_call.1} parent=1 // pred_region
      _
    $region53: #{tpu_custom_call.1} parent=1 // pred_fallthru
      _
    // Predicated region
    $region54: #{tpu_custom_call.1} parent=1 // pred_check
      _
    $region55: #{tpu_custom_call.1} parent=1 // pred_check_branch
      %126 = sbr.rel (0) target = $region57
    $region56: #{tpu_custom_call.1} parent=1 // pred_region
      _
    $region57: #{tpu_custom_call.1} parent=1 // pred_fallthru
      _
    // Predicated region
    $region58: #{tpu_custom_call.1} parent=1 // pred_check
      _
    $region59: #{tpu_custom_call.1} parent=1 // pred_check_branch
      %128 = sbr.rel (0) target = $region61
    $region60: #{tpu_custom_call.1} parent=1 // pred_region
      _
    $region61: #{tpu_custom_call.1} parent=1 // pred_fallthru
      _
    // Predicated region
    $region62: #{tpu_custom_call.1} parent=1 // pred_check
      _
    $region63: #{tpu_custom_call.1} parent=1 // pred_check_branch
      %130 = sbr.rel (0) target = $region65
    $region64: #{tpu_custom_call.1} parent=1 // pred_region
      _
    $region65: #{tpu_custom_call.1} parent=1 // pred_fallthru
      _
    // Predicated region
    $region66: #{tpu_custom_call.1} parent=1 // pred_check
      _
    $region67: #{tpu_custom_call.1} parent=1 // pred_check_branch
      %132 = sbr.rel (0) target = $region69
    $region68: #{tpu_custom_call.1} parent=1 // pred_region
      _
    $region69: #{tpu_custom_call.1} parent=1 // pred_fallthru
      _
    // Predicated region
    $region70: #{tpu_custom_call.1} parent=1 // pred_check
      _
    $region71: #{tpu_custom_call.1} parent=1 // pred_check_branch
      %134 = sbr.rel (0) target = $region73
    $region72: #{tpu_custom_call.1} parent=1 // pred_region
      _
    $region73: #{tpu_custom_call.1} parent=1 // pred_fallthru
      _
    // Predicated region
    $region74: #{tpu_custom_call.1} parent=1 // pred_check
      _
    $region75: #{tpu_custom_call.1} parent=1 // pred_check_branch
      %136 = sbr.rel (0) target = $region77
    $region76: #{tpu_custom_call.1} parent=1 // pred_region
      %137 = dma.done [#allocation3], 32
    $region77: #{tpu_custom_call.1} parent=1 // pred_fallthru
      _
    // Predicated region
    $region78: #{tpu_custom_call.1} parent=1 // pred_check
      _
    $region79: #{tpu_custom_call.1} parent=1 // pred_check_branch
      %139 = sbr.rel (0) target = $region81
    $region80: #{tpu_custom_call.1} parent=1 // pred_region
      %140 = dma.done [#allocation6], 16
    $region81: #{tpu_custom_call.1} parent=1 // pred_fallthru
      _
    // Predicated region
    $region82: #{tpu_custom_call.1} parent=1 // pred_check
      _
    $region83: #{tpu_custom_call.1} parent=1 // pred_check_branch
      %142 = sbr.rel (0) target = $region85
    $region84: #{tpu_custom_call.1} parent=1 // pred_region
      %143 = dma.done [#allocation6], 16
    $region85: #{tpu_custom_call.1} parent=1 // pred_fallthru
      _
    // Predicated region
    $region86: #{tpu_custom_call.1} parent=1 // pred_check
      _
    $region87: #{tpu_custom_call.1} parent=1 // pred_check_branch
      %145 = sbr.rel (0) target = $region89
    $region88: #{tpu_custom_call.1} parent=1 // pred_region
      %146 = dma.done [#allocation9], 384
    $region89: #{tpu_custom_call.1} parent=1 // pred_fallthru
      _
    // Predicated region
    $region90: #{tpu_custom_call.1} parent=1 // pred_check
      _
    $region91: #{tpu_custom_call.1} parent=1 // pred_check_branch
      %148 = sbr.rel (0) target = $region93
    $region92: #{tpu_custom_call.1} parent=1 // pred_region
      %149 = dma.done [#allocation9], 96
    $region93: #{tpu_custom_call.1} parent=1 // pred_fallthru
      _
    // Predicated region
    $region94: #{tpu_custom_call.1} parent=1 // pred_check
      _
    $region95: #{tpu_custom_call.1} parent=1 // pred_check_branch
      %151 = sbr.rel (0) target = $region97
    $region96: #{tpu_custom_call.1} parent=1 // pred_region
      %152 = dma.done [#allocation12], 3072
    $region97: #{tpu_custom_call.1} parent=1 // pred_fallthru
      _
    // Predicated region
    $region98: #{tpu_custom_call.1} parent=1 // pred_check
      _
    $region99: #{tpu_custom_call.1} parent=1 // pred_check_branch
      %154 = sbr.rel (0) target = $region101
    $region100: #{tpu_custom_call.1} parent=1 // pred_region
      %155 = dma.done [#allocation12], 3072
    $region101: #{tpu_custom_call.1} parent=1 // pred_fallthru
      _
    // Predicated region
    $region102: #{tpu_custom_call.1} parent=1 // pred_check
      _
    $region103: #{tpu_custom_call.1} parent=1 // pred_check_branch
      %157 = sbr.rel (0) target = $region105
    $region104: #{tpu_custom_call.1} parent=1 // pred_region
      %158 = dma.done [#allocation15], 3072
    $region105: #{tpu_custom_call.1} parent=1 // pred_fallthru
      _
    %v159 = vld [vmem:[%s0] sm:$0xff]
    %v160 = vld [vmem:[%s0 + $0x8] sm:$0xff]
    %v161 = vld [vmem:[%s0 + $0x10] sm:$0xff]
    %v162 = vld [vmem:[%s0 + $0x18] sm:$0xff]
    %v163 = vld [vmem:[%s1] sm:$0xff]
    %v164 = vld [vmem:[%s1 + $0x8] sm:$0xff]
    %v165 = vld [vmem:[%s1 + $0x10] sm:$0xff]
    %v166 = vld [vmem:[%s1 + $0x18] sm:$0xff]
    %v167 = vld [vmem:[#allocation2] sm:$0x3]
    %169 = vset.pattern.permute.xlu0 0
    %170 = vperm.xlu0 %169, %v159
    %v171 = vpop.permute.xlu0 %170
    %174 = vset.pattern.permute.xlu0 0
    %175 = vperm.xlu0 %174, %v160
    %v176 = vpop.permute.xlu0 %175
    %179 = vset.pattern.permute.xlu0 0
    %180 = vperm.xlu0 %179, %v161
    %v181 = vpop.permute.xlu0 %180
    %184 = vset.pattern.permute.xlu0 0
    %185 = vperm.xlu0 %184, %v162
    %v186 = vpop.permute.xlu0 %185
    %v188 = vlaneseq
    %v189 = vshrl.u32 %v188, 7
    %v190 = vsub.s32 0, %v189
    %v191 = vrot.slane %v167, %v190
    %v192 = vmul.f32 %v171, %v191
    %v193 = vmul.f32 %v176, %v191
    %v194 = vmul.f32 %v181, %v191
    %v195 = vmul.f32 %v186, %v191
    %196 = vset.pattern.permute.xlu0 1
    %197 = vperm.xlu0 %196, %v159
    %v198 = vpop.permute.xlu0 %197
    %200 = vset.pattern.permute.xlu0 1
    %201 = vperm.xlu0 %200, %v160
    %v202 = vpop.permute.xlu0 %201
    %204 = vset.pattern.permute.xlu0 1
    %205 = vperm.xlu0 %204, %v161
    %v206 = vpop.permute.xlu0 %205
    %208 = vset.pattern.permute.xlu0 1
    %209 = vperm.xlu0 %208, %v162
    %v210 = vpop.permute.xlu0 %209
    %v212 = vlaneseq
    %v213 = vshrl.u32 %v212, 7
    %v214 = vsub.s32 1, %v213
    %v215 = vrot.slane %v167, %v214
    %v216 = vmul.f32 %v198, %v215
    %v217 = vmul.f32 %v202, %v215
    %v218 = vmul.f32 %v206, %v215
    %v219 = vmul.f32 %v210, %v215
    %v220 = vadd.f32 %v192, %v216
    %v221 = vadd.f32 %v193, %v217
    %v222 = vadd.f32 %v194, %v218
    %v223 = vadd.f32 %v195, %v219
    %v224 = vld [vmem:[#allocation5] sm:$0x1]
    %v226 = vlaneseq
    %v227 = vshrl.u32 %v226, 7
    %v228 = vsub.s32 0, %v227
    %v229 = vrot.slane %v224, %v228
    %v231 = vadd.f32 %v220, %v229
    %v232 = vadd.f32 %v221, %v229
    %v233 = vadd.f32 %v222, %v229
    %v234 = vadd.f32 %v223, %v229
    %v235 = vld [vmem:[%s5] sm:$0xff]
    %v236 = vld [vmem:[%s5 + $0x8] sm:$0xff]
    %v237 = vld [vmem:[%s5 + $0x10] sm:$0xff]
    %v238 = vld [vmem:[%s5 + $0x18] sm:$0xff]
    %v239 = vld [vmem:[#allocation7] sm:$0x1]
    %v241 = vlaneseq
    %v242 = vshrl.u32 %v241, 7
    %v243 = vsub.s32 0, %v242
    %v244 = vrot.slane %v239, %v243
    %vm246 = vcmask 261120
    %v248 = vsel %vm246, %v231, 0
    %v251 = vsel %vm246, %v232, 0
    %v254 = vsel %vm246, %v233, 0
    %v257 = vsel %vm246, %v234, 0
    %259 = vmatprep.subr.mxu0 0.0
    %260 = vmatpush1.msra.mxu0 %v235
    %261 = vmatprep.subr.mxu0 0.0
    %262 = vmatpush1.msra.mxu0 %v236
    %263 = vmatprep.subr.mxu0 0.0
    %264 = vmatpush1.msra.mxu0 %v237
    %265 = vmatprep.subr.mxu0 0.0
    %266 = vmatpush1.msra.mxu0 %v238
    %267 = vmatprep.subr.mxu0 0.0
    %268 = vmatpush1.msra.mxu0 0.0
    %269 = vmatprep.subr.mxu0 0.0
    %270 = vmatpush1.msra.mxu0 0.0
    %271 = vmatprep.subr.mxu0 0.0
    %272 = vmatpush1.msra.mxu0 0.0
    %273 = vmatprep.subr.mxu0 0.0
    %274 = vmatpush1.msra.mxu0 0.0
    %275 = vmatprep.subr.mxu0 0.0
    %276 = vmatpush1.msra.mxu0 0.0
    %277 = vmatprep.subr.mxu0 0.0
    %278 = vmatpush1.msra.mxu0 0.0
    %279 = vmatprep.subr.mxu0 0.0
    %280 = vmatpush1.msra.mxu0 0.0
    %281 = vmatprep.subr.mxu0 0.0
    %282 = vmatpush1.msra.mxu0 0.0
    %283 = vmatprep.subr.mxu0 0.0
    %284 = vmatpush1.msra.mxu0 0.0
    %285 = vmatprep.subr.mxu0 0.0
    %286 = vmatpush1.msra.mxu0 0.0
    %287 = vmatprep.subr.mxu0 0.0
    %288 = vmatpush1.msra.mxu0 0.0
    %289 = vmatprep.subr.mxu0 0.0
    %290 = vmatpush1.msra.mxu0 0.0
    %291 = vmatprep.subr.mxu0 0.0
    %292 = vmatpush1.msra.mxu0 0.0
    %293 = vmatprep.subr.mxu0 0.0
    %294 = vmatpush1.msra.mxu0 0.0
    %295 = vmatprep.subr.mxu0 0.0
    %296 = vmatpush1.msra.mxu0 0.0
    %297 = vmatprep.subr.mxu0 0.0
    %298 = vmatpush1.msra.mxu0 0.0
    %299 = vmatprep.subr.mxu0 0.0
    %300 = vmatpush1.msra.mxu0 0.0
    %301 = vmatprep.subr.mxu0 0.0
    %302 = vmatpush1.msra.mxu0 0.0
    %303 = vmatprep.subr.mxu0 0.0
    %304 = vmatpush1.msra.mxu0 0.0
    %305 = vmatprep.subr.mxu0 0.0
    %306 = vmatpush1.msra.mxu0 0.0
    %307 = vmatprep.subr.mxu0 0.0
    %308 = vmatpush1.msra.mxu0 0.0
    %309 = vmatprep.subr.mxu0 0.0
    %310 = vmatpush1.msra.mxu0 0.0
    %311 = vmatprep.subr.mxu0 0.0
    %312 = vmatpush1.msra.mxu0 0.0
    %313 = vmatprep.subr.mxu0 0.0
    %314 = vmatpush1.msra.mxu0 0.0
    %315 = vmatprep.subr.mxu0 0.0
    %316 = vmatpush1.msra.mxu0 0.0
    %317 = vmatprep.subr.mxu0 0.0
    %318 = vmatpush1.msra.mxu0 0.0
    %319 = vmatprep.subr.mxu0 0.0
    %320 = vmatpush1.msra.mxu0 0.0
    %321 = vmatprep.subr.mxu0 0.0
    %322 = vmatpush1.msra.mxu0 0.0
    %323 = vmatprep.mubr.f32.mxu0 0.0
    %324 = vmatmul.mubr.f32.gmra.mrb[0].mxu0 %v248
    %v325 = vpop.f32.mrb[0].mxu0
    %v326 = vadd.f32 %v244, %v325
    %v327 = vpop.f32.mrb[0].mxu0
    %328 = vmatprep.mubr.f32.mxu0 0.0
    %329 = vmatmul.mubr.f32.gmra.mrb[0].mxu0 %v251
    %v330 = vpop.f32.mrb[0].mxu0
    %v331 = vadd.f32 %v244, %v330
    %v332 = vpop.f32.mrb[0].mxu0
    %333 = vmatprep.mubr.f32.mxu0 0.0
    %334 = vmatmul.mubr.f32.gmra.mrb[0].mxu0 %v254
    %v335 = vpop.f32.mrb[0].mxu0
    %v336 = vadd.f32 %v244, %v335
    %v337 = vpop.f32.mrb[0].mxu0
    %338 = vmatprep.mubr.f32.mxu0 0.0
    %339 = vmatmul.mubr.f32.gmra.mrb[0].mxu0 %v257
    %v340 = vpop.f32.mrb[0].mxu0
    %v341 = vadd.f32 %v244, %v340
    %v342 = vpop.f32.mrb[0].mxu0
    %343 = vdwg.mxu0
    %348 = vrot.lane.b32.xlu0 %v326, 32
    %v349 = vpop.permute.xlu0 %348
    %350 = vrot.lane.b32.xlu0 %v331, 32
    %v351 = vpop.permute.xlu0 %350
    %352 = vrot.lane.b32.xlu0 %v336, 32
    %v353 = vpop.permute.xlu0 %352
    %354 = vrot.lane.b32.xlu0 %v341, 32
    %v355 = vpop.permute.xlu0 %354
    %v360 = vsel %vm246, %v231, %v349
    %v361 = vsel %vm246, %v232, %v351
    %v362 = vsel %vm246, %v233, %v353
    %v363 = vsel %vm246, %v234, %v355
    %v364 = vld [vmem:[#allocation8] sm:$0xff]
    %v365 = vld [vmem:[#allocation8 + $0x8] sm:$0xff]
    %v366 = vld [vmem:[#allocation8 + $0x10] sm:$0xff]
    %v367 = vld [vmem:[#allocation10] sm:$0x3f]
    %v369 = vlaneseq
    %v370 = vshrl.u32 %v369, 7
    %v371 = vsub.s32 0, %v370
    %v372 = vrot.slane %v367, %v371
    %v373 = vlaneseq
    %v374 = vshrl.u32 %v373, 7
    %v375 = vsub.s32 1, %v374
    %v376 = vrot.slane %v367, %v375
    %v377 = vlaneseq
    %v378 = vshrl.u32 %v377, 7
    %v379 = vsub.s32 2, %v378
    %v380 = vrot.slane %v367, %v379
    %v381 = vlaneseq
    %v382 = vshrl.u32 %v381, 7
    %v383 = vsub.s32 3, %v382
    %v384 = vrot.slane %v367, %v383
    %v385 = vlaneseq
    %v386 = vshrl.u32 %v385, 7
    %v387 = vsub.s32 4, %v386
    %v388 = vrot.slane %v367, %v387
    %v389 = vlaneseq
    %v390 = vshrl.u32 %v389, 7
    %v391 = vsub.s32 5, %v390
    %v392 = vrot.slane %v367, %v391
    %v402 = vcombine.high %v364, %v364
    %v403 = vcombine.high %v365, %v365
    %v404 = vcombine.high %v366, %v366
    %vm405 = vcmask 31744
    %v407 = vsel %vm405, %v163, 0
    %v410 = vsel %vm405, %v164, 0
    %v413 = vsel %vm405, %v165, 0
    %v416 = vsel %vm405, %v166, 0
    %vm418 = vcmask 1043456
    %v419 = vsel %vm418, %v364, 0
    %v421 = vsel %vm418, %v402, 0
    %v423 = vsel %vm418, %v365, 0
    %v425 = vsel %vm418, %v403, 0
    %v427 = vsel %vm418, %v366, 0
    %v429 = vsel %vm418, %v404, 0
    %431 = vmatprep.subr.mxu0 %v421
    %432 = vmatpush1.msra.mxu0 %v419
    %433 = vmatprep.subr.mxu0 0.0
    %434 = vmatpush1.msra.mxu0 0.0
    %435 = vmatprep.subr.mxu0 0.0
    %436 = vmatpush1.msra.mxu0 0.0
    %437 = vmatprep.subr.mxu0 0.0
    %438 = vmatpush1.msra.mxu0 0.0
    %439 = vmatprep.subr.mxu0 0.0
    %440 = vmatpush1.msra.mxu0 0.0
    %441 = vmatprep.subr.mxu0 0.0
    %442 = vmatpush1.msra.mxu0 0.0
    %443 = vmatprep.subr.mxu0 0.0
    %444 = vmatpush1.msra.mxu0 0.0
    %445 = vmatprep.subr.mxu0 0.0
    %446 = vmatpush1.msra.mxu0 0.0
    %447 = vmatprep.subr.mxu0 0.0
    %448 = vmatpush1.msra.mxu0 0.0
    %449 = vmatprep.subr.mxu0 0.0
    %450 = vmatpush1.msra.mxu0 0.0
    %451 = vmatprep.subr.mxu0 0.0
    %452 = vmatpush1.msra.mxu0 0.0
    %453 = vmatprep.subr.mxu0 0.0
    %454 = vmatpush1.msra.mxu0 0.0
    %455 = vmatprep.subr.mxu0 0.0
    %456 = vmatpush1.msra.mxu0 0.0
    %457 = vmatprep.subr.mxu0 0.0
    %458 = vmatpush1.msra.mxu0 0.0
    %459 = vmatprep.subr.mxu0 0.0
    %460 = vmatpush1.msra.mxu0 0.0
    %461 = vmatprep.subr.mxu0 0.0
    %462 = vmatpush1.msra.mxu0 0.0
    %463 = vmatprep.subr.mxu0 0.0
    %464 = vmatpush1.msra.mxu0 0.0
    %465 = vmatprep.subr.mxu0 0.0
    %466 = vmatpush1.msra.mxu0 0.0
    %467 = vmatprep.subr.mxu0 0.0
    %468 = vmatpush1.msra.mxu0 0.0
    %469 = vmatprep.subr.mxu0 0.0
    %470 = vmatpush1.msra.mxu0 0.0
    %471 = vmatprep.subr.mxu0 0.0
    %472 = vmatpush1.msra.mxu0 0.0
    %473 = vmatprep.subr.mxu0 0.0
    %474 = vmatpush1.msra.mxu0 0.0
    %475 = vmatprep.subr.mxu0 0.0
    %476 = vmatpush1.msra.mxu0 0.0
    %477 = vmatprep.subr.mxu0 0.0
    %478 = vmatpush1.msra.mxu0 0.0
    %479 = vmatprep.subr.mxu0 0.0
    %480 = vmatpush1.msra.mxu0 0.0
    %481 = vmatprep.subr.mxu0 0.0
    %482 = vmatpush1.msra.mxu0 0.0
    %483 = vmatprep.subr.mxu0 0.0
    %484 = vmatpush1.msra.mxu0 0.0
    %485 = vmatprep.subr.mxu0 0.0
    %486 = vmatpush1.msra.mxu0 0.0
    %487 = vmatprep.subr.mxu0 0.0
    %488 = vmatpush1.msra.mxu0 0.0
    %489 = vmatprep.subr.mxu0 0.0
    %490 = vmatpush1.msra.mxu0 0.0
    %491 = vmatprep.subr.mxu0 0.0
    %492 = vmatpush1.msra.mxu0 0.0
    %493 = vmatprep.subr.mxu0 0.0
    %494 = vmatpush1.msra.mxu0 0.0
    %495 = vmatprep.mubr.f32.mxu0 0.0
    %496 = vmatmul.mubr.f32.gmra.mrb[0].mxu0 %v407
    %v497 = vpop.f32.mrb[0].mxu0
    %v498 = vadd.f32 %v372, %v497
    %v499 = vpop.f32.mrb[0].mxu0
    %v500 = vadd.f32 %v376, %v499
    %501 = vmatprep.mubr.f32.mxu0 0.0
    %502 = vmatmul.mubr.f32.gmra.mrb[0].mxu0 %v410
    %v503 = vpop.f32.mrb[0].mxu0
    %v504 = vadd.f32 %v372, %v503
    %v505 = vpop.f32.mrb[0].mxu0
    %v506 = vadd.f32 %v376, %v505
    %507 = vmatprep.mubr.f32.mxu0 0.0
    %508 = vmatmul.mubr.f32.gmra.mrb[0].mxu0 %v413
    %v509 = vpop.f32.mrb[0].mxu0
    %v510 = vadd.f32 %v372, %v509
    %v511 = vpop.f32.mrb[0].mxu0
    %v512 = vadd.f32 %v376, %v511
    %513 = vmatprep.mubr.f32.mxu0 0.0
    %514 = vmatmul.mubr.f32.gmra.mrb[0].mxu0 %v416
    %v515 = vpop.f32.mrb[0].mxu0
    %v516 = vadd.f32 %v372, %v515
    %v517 = vpop.f32.mrb[0].mxu0
    %v518 = vadd.f32 %v376, %v517
    %519 = vdwg.mxu0
    %520 = vmatprep.subr.mxu0 %v425
    %521 = vmatpush1.msra.mxu0 %v423
    %522 = vmatprep.subr.mxu0 0.0
    %523 = vmatpush1.msra.mxu0 0.0
    %524 = vmatprep.subr.mxu0 0.0
    %525 = vmatpush1.msra.mxu0 0.0
    %526 = vmatprep.subr.mxu0 0.0
    %527 = vmatpush1.msra.mxu0 0.0
    %528 = vmatprep.subr.mxu0 0.0
    %529 = vmatpush1.msra.mxu0 0.0
    %530 = vmatprep.subr.mxu0 0.0
    %531 = vmatpush1.msra.mxu0 0.0
    %532 = vmatprep.subr.mxu0 0.0
    %533 = vmatpush1.msra.mxu0 0.0
    %534 = vmatprep.subr.mxu0 0.0
    %535 = vmatpush1.msra.mxu0 0.0
    %536 = vmatprep.subr.mxu0 0.0
    %537 = vmatpush1.msra.mxu0 0.0
    %538 = vmatprep.subr.mxu0 0.0
    %539 = vmatpush1.msra.mxu0 0.0
    %540 = vmatprep.subr.mxu0 0.0
    %541 = vmatpush1.msra.mxu0 0.0
    %542 = vmatprep.subr.mxu0 0.0
    %543 = vmatpush1.msra.mxu0 0.0
    %544 = vmatprep.subr.mxu0 0.0
    %545 = vmatpush1.msra.mxu0 0.0
    %546 = vmatprep.subr.mxu0 0.0
    %547 = vmatpush1.msra.mxu0 0.0
    %548 = vmatprep.subr.mxu0 0.0
    %549 = vmatpush1.msra.mxu0 0.0
    %550 = vmatprep.subr.mxu0 0.0
    %551 = vmatpush1.msra.mxu0 0.0
    %552 = vmatprep.subr.mxu0 0.0
    %553 = vmatpush1.msra.mxu0 0.0
    %554 = vmatprep.subr.mxu0 0.0
    %555 = vmatpush1.msra.mxu0 0.0
    %556 = vmatprep.subr.mxu0 0.0
    %557 = vmatpush1.msra.mxu0 0.0
    %558 = vmatprep.subr.mxu0 0.0
    %559 = vmatpush1.msra.mxu0 0.0
    %560 = vmatprep.subr.mxu0 0.0
    %561 = vmatpush1.msra.mxu0 0.0
    %562 = vmatprep.subr.mxu0 0.0
    %563 = vmatpush1.msra.mxu0 0.0
    %564 = vmatprep.subr.mxu0 0.0
    %565 = vmatpush1.msra.mxu0 0.0
    %566 = vmatprep.subr.mxu0 0.0
    %567 = vmatpush1.msra.mxu0 0.0
    %568 = vmatprep.subr.mxu0 0.0
    %569 = vmatpush1.msra.mxu0 0.0
    %570 = vmatprep.subr.mxu0 0.0
    %571 = vmatpush1.msra.mxu0 0.0
    %572 = vmatprep.subr.mxu0 0.0
    %573 = vmatpush1.msra.mxu0 0.0
    %574 = vmatprep.subr.mxu0 0.0
    %575 = vmatpush1.msra.mxu0 0.0
    %576 = vmatprep.subr.mxu0 0.0
    %577 = vmatpush1.msra.mxu0 0.0
    %578 = vmatprep.subr.mxu0 0.0
    %579 = vmatpush1.msra.mxu0 0.0
    %580 = vmatprep.subr.mxu0 0.0
    %581 = vmatpush1.msra.mxu0 0.0
    %582 = vmatprep.subr.mxu0 0.0
    %583 = vmatpush1.msra.mxu0 0.0
    %584 = vmatprep.mubr.f32.mxu0 0.0
    %585 = vmatmul.mubr.f32.gmra.mrb[0].mxu0 %v407
    %v586 = vpop.f32.mrb[0].mxu0
    %v587 = vadd.f32 %v380, %v586
    %v588 = vpop.f32.mrb[0].mxu0
    %v589 = vadd.f32 %v384, %v588
    %590 = vmatprep.mubr.f32.mxu0 0.0
    %591 = vmatmul.mubr.f32.gmra.mrb[0].mxu0 %v410
    %v592 = vpop.f32.mrb[0].mxu0
    %v593 = vadd.f32 %v380, %v592
    %v594 = vpop.f32.mrb[0].mxu0
    %v595 = vadd.f32 %v384, %v594
    %596 = vmatprep.mubr.f32.mxu0 0.0
    %597 = vmatmul.mubr.f32.gmra.mrb[0].mxu0 %v413
    %v598 = vpop.f32.mrb[0].mxu0
    %v599 = vadd.f32 %v380, %v598
    %v600 = vpop.f32.mrb[0].mxu0
    %v601 = vadd.f32 %v384, %v600
    %602 = vmatprep.mubr.f32.mxu0 0.0
    %603 = vmatmul.mubr.f32.gmra.mrb[0].mxu0 %v416
    %v604 = vpop.f32.mrb[0].mxu0
    %v605 = vadd.f32 %v380, %v604
    %v606 = vpop.f32.mrb[0].mxu0
    %v607 = vadd.f32 %v384, %v606
    %608 = vdwg.mxu0
    %609 = vmatprep.subr.mxu0 %v429
    %610 = vmatpush1.msra.mxu0 %v427
    %611 = vmatprep.subr.mxu0 0.0
    %612 = vmatpush1.msra.mxu0 0.0
    %613 = vmatprep.subr.mxu0 0.0
    %614 = vmatpush1.msra.mxu0 0.0
    %615 = vmatprep.subr.mxu0 0.0
    %616 = vmatpush1.msra.mxu0 0.0
    %617 = vmatprep.subr.mxu0 0.0
    %618 = vmatpush1.msra.mxu0 0.0
    %619 = vmatprep.subr.mxu0 0.0
    %620 = vmatpush1.msra.mxu0 0.0
    %621 = vmatprep.subr.mxu0 0.0
    %622 = vmatpush1.msra.mxu0 0.0
    %623 = vmatprep.subr.mxu0 0.0
    %624 = vmatpush1.msra.mxu0 0.0
    %625 = vmatprep.subr.mxu0 0.0
    %626 = vmatpush1.msra.mxu0 0.0
    %627 = vmatprep.subr.mxu0 0.0
    %628 = vmatpush1.msra.mxu0 0.0
    %629 = vmatprep.subr.mxu0 0.0
    %630 = vmatpush1.msra.mxu0 0.0
    %631 = vmatprep.subr.mxu0 0.0
    %632 = vmatpush1.msra.mxu0 0.0
    %633 = vmatprep.subr.mxu0 0.0
    %634 = vmatpush1.msra.mxu0 0.0
    %635 = vmatprep.subr.mxu0 0.0
    %636 = vmatpush1.msra.mxu0 0.0
    %637 = vmatprep.subr.mxu0 0.0
    %638 = vmatpush1.msra.mxu0 0.0
    %639 = vmatprep.subr.mxu0 0.0
    %640 = vmatpush1.msra.mxu0 0.0
    %641 = vmatprep.subr.mxu0 0.0
    %642 = vmatpush1.msra.mxu0 0.0
    %643 = vmatprep.subr.mxu0 0.0
    %644 = vmatpush1.msra.mxu0 0.0
    %645 = vmatprep.subr.mxu0 0.0
    %646 = vmatpush1.msra.mxu0 0.0
    %647 = vmatprep.subr.mxu0 0.0
    %648 = vmatpush1.msra.mxu0 0.0
    %649 = vmatprep.subr.mxu0 0.0
    %650 = vmatpush1.msra.mxu0 0.0
    %651 = vmatprep.subr.mxu0 0.0
    %652 = vmatpush1.msra.mxu0 0.0
    %653 = vmatprep.subr.mxu0 0.0
    %654 = vmatpush1.msra.mxu0 0.0
    %655 = vmatprep.subr.mxu0 0.0
    %656 = vmatpush1.msra.mxu0 0.0
    %657 = vmatprep.subr.mxu0 0.0
    %658 = vmatpush1.msra.mxu0 0.0
    %659 = vmatprep.subr.mxu0 0.0
    %660 = vmatpush1.msra.mxu0 0.0
    %661 = vmatprep.subr.mxu0 0.0
    %662 = vmatpush1.msra.mxu0 0.0
    %663 = vmatprep.subr.mxu0 0.0
    %664 = vmatpush1.msra.mxu0 0.0
    %665 = vmatprep.subr.mxu0 0.0
    %666 = vmatpush1.msra.mxu0 0.0
    %667 = vmatprep.subr.mxu0 0.0
    %668 = vmatpush1.msra.mxu0 0.0
    %669 = vmatprep.subr.mxu0 0.0
    %670 = vmatpush1.msra.mxu0 0.0
    %671 = vmatprep.subr.mxu0 0.0
    %672 = vmatpush1.msra.mxu0 0.0
    %673 = vmatprep.mubr.f32.mxu0 0.0
    %674 = vmatmul.mubr.f32.gmra.mrb[0].mxu0 %v407
    %v675 = vpop.f32.mrb[0].mxu0
    %v676 = vadd.f32 %v388, %v675
    %v677 = vpop.f32.mrb[0].mxu0
    %v678 = vadd.f32 %v392, %v677
    %679 = vmatprep.mubr.f32.mxu0 0.0
    %680 = vmatmul.mubr.f32.gmra.mrb[0].mxu0 %v410
    %v681 = vpop.f32.mrb[0].mxu0
    %v682 = vadd.f32 %v388, %v681
    %v683 = vpop.f32.mrb[0].mxu0
    %v684 = vadd.f32 %v392, %v683
    %685 = vmatprep.mubr.f32.mxu0 0.0
    %686 = vmatmul.mubr.f32.gmra.mrb[0].mxu0 %v413
    %v687 = vpop.f32.mrb[0].mxu0
    %v688 = vadd.f32 %v388, %v687
    %v689 = vpop.f32.mrb[0].mxu0
    %v690 = vadd.f32 %v392, %v689
    %691 = vmatprep.mubr.f32.mxu0 0.0
    %692 = vmatmul.mubr.f32.gmra.mrb[0].mxu0 %v416
    %v693 = vpop.f32.mrb[0].mxu0
    %v694 = vadd.f32 %v388, %v693
    %v695 = vpop.f32.mrb[0].mxu0
    %v696 = vadd.f32 %v392, %v695
    %697 = vdwg.mxu0
    %v698 = vld [vmem:[%s2] sm:$0xff]
    %v699 = vld [vmem:[%s2 + $0x8] sm:$0xff]
    %v700 = vld [vmem:[%s2 + $0x10] sm:$0xff]
    %v701 = vld [vmem:[%s2 + $0x18] sm:$0xff]
    %702 = vset.pattern.permute.xlu0 0
    %703 = vperm.xlu0 %702, %v698
    %v704 = vpop.permute.xlu0 %703
    %705 = vset.pattern.permute.xlu0 0
    %706 = vperm.xlu0 %705, %v699
    %v707 = vpop.permute.xlu0 %706
    %708 = vset.pattern.permute.xlu0 0
    %709 = vperm.xlu0 %708, %v700
    %v710 = vpop.permute.xlu0 %709
    %711 = vset.pattern.permute.xlu0 0
    %712 = vperm.xlu0 %711, %v701
    %v713 = vpop.permute.xlu0 %712
    %vm714 = vcmp.ge.s32.totalorder %v704, 1
    %vm715 = vcmp.ge.s32.totalorder %v707, 1
    %vm716 = vcmp.ge.s32.totalorder %v710, 1
    %vm717 = vcmp.ge.s32.totalorder %v713, 1
    %vm718 = vcmp.ge.s32.totalorder %v704, 2
    %vm719 = vcmp.ge.s32.totalorder %v707, 2
    %vm720 = vcmp.ge.s32.totalorder %v710, 2
    %vm721 = vcmp.ge.s32.totalorder %v713, 2
    %vm722 = vcmp.ge.s32.totalorder %v704, 4
    %vm723 = vcmp.ge.s32.totalorder %v707, 4
    %vm724 = vcmp.ge.s32.totalorder %v710, 4
    %vm725 = vcmp.ge.s32.totalorder %v713, 4
    %v726 = vrot.slane %v360, 7
    %v727 = vrot.slane %v361, 7
    %v728 = vrot.slane %v362, 7
    %v729 = vrot.slane %v363, 7
    %v730 = vlaneseq
    %v731 = vshrl.u32 %v730, 7
    %vm732 = vcmp.lt.s32.totalorder %v731, 1
    %v733 = vsel %vm732, %v728, %v729
    %v734 = vsel %vm732, %v727, %v728
    %v735 = vsel %vm732, %v726, %v727
    %v736 = vsel %vm732, %v729, %v726
    %v737 = vsel %vm714, %v736, 0.0
    %v738 = vsel %vm715, %v735, 0.0
    %v739 = vsel %vm716, %v734, 0.0
    %v740 = vsel %vm717, %v733, 0.0
    %v741 = vld [vmem:[#allocation11] sm:$0xff]
    %v742 = vld [vmem:[#allocation11 + $0x8] sm:$0xff]
    %v743 = vld [vmem:[#allocation11 + $0x10] sm:$0xff]
    %v744 = vld [vmem:[#allocation11 + $0x18] sm:$0xff]
    %v745 = vld [vmem:[#allocation13] sm:$0xff]
    %v746 = vld [vmem:[#allocation13 + $0x8] sm:$0xff]
    %v747 = vld [vmem:[#allocation13 + $0x10] sm:$0xff]
    %v748 = vld [vmem:[#allocation13 + $0x18] sm:$0xff]
    %v750 = vsel %vm246, %v360, 0
    %v753 = vsel %vm246, %v361, 0
    %v756 = vsel %vm246, %v362, 0
    %v759 = vsel %vm246, %v363, 0
    %761 = vmatprep.subr.mxu0 0.0
    %762 = vmatpush1.msra.mxu0 %v745
    %763 = vmatprep.subr.mxu0 0.0
    %764 = vmatpush1.msra.mxu0 %v746
    %765 = vmatprep.subr.mxu0 0.0
    %766 = vmatpush1.msra.mxu0 %v747
    %767 = vmatprep.subr.mxu0 0.0
    %768 = vmatpush1.msra.mxu0 %v748
    %769 = vmatprep.subr.mxu0 0.0
    %770 = vmatpush1.msra.mxu0 0.0
    %771 = vmatprep.subr.mxu0 0.0
    %772 = vmatpush1.msra.mxu0 0.0
    %773 = vmatprep.subr.mxu0 0.0
    %774 = vmatpush1.msra.mxu0 0.0
    %775 = vmatprep.subr.mxu0 0.0
    %776 = vmatpush1.msra.mxu0 0.0
    %777 = vmatprep.subr.mxu0 0.0
    %778 = vmatpush1.msra.mxu0 0.0
    %779 = vmatprep.subr.mxu0 0.0
    %780 = vmatpush1.msra.mxu0 0.0
    %781 = vmatprep.subr.mxu0 0.0
    %782 = vmatpush1.msra.mxu0 0.0
    %783 = vmatprep.subr.mxu0 0.0
    %784 = vmatpush1.msra.mxu0 0.0
    %785 = vmatprep.subr.mxu0 0.0
    %786 = vmatpush1.msra.mxu0 0.0
    %787 = vmatprep.subr.mxu0 0.0
    %788 = vmatpush1.msra.mxu0 0.0
    %789 = vmatprep.subr.mxu0 0.0
    %790 = vmatpush1.msra.mxu0 0.0
    %791 = vmatprep.subr.mxu0 0.0
    %792 = vmatpush1.msra.mxu0 0.0
    %793 = vmatprep.subr.mxu0 0.0
    %794 = vmatpush1.msra.mxu0 0.0
    %795 = vmatprep.subr.mxu0 0.0
    %796 = vmatpush1.msra.mxu0 0.0
    %797 = vmatprep.subr.mxu0 0.0
    %798 = vmatpush1.msra.mxu0 0.0
    %799 = vmatprep.subr.mxu0 0.0
    %800 = vmatpush1.msra.mxu0 0.0
    %801 = vmatprep.subr.mxu0 0.0
    %802 = vmatpush1.msra.mxu0 0.0
    %803 = vmatprep.subr.mxu0 0.0
    %804 = vmatpush1.msra.mxu0 0.0
    %805 = vmatprep.subr.mxu0 0.0
    %806 = vmatpush1.msra.mxu0 0.0
    %807 = vmatprep.subr.mxu0 0.0
    %808 = vmatpush1.msra.mxu0 0.0
    %809 = vmatprep.subr.mxu0 0.0
    %810 = vmatpush1.msra.mxu0 0.0
    %811 = vmatprep.subr.mxu0 0.0
    %812 = vmatpush1.msra.mxu0 0.0
    %813 = vmatprep.subr.mxu0 0.0
    %814 = vmatpush1.msra.mxu0 0.0
    %815 = vmatprep.subr.mxu0 0.0
    %816 = vmatpush1.msra.mxu0 0.0
    %817 = vmatprep.subr.mxu0 0.0
    %818 = vmatpush1.msra.mxu0 0.0
    %819 = vmatprep.subr.mxu0 0.0
    %820 = vmatpush1.msra.mxu0 0.0
    %821 = vmatprep.subr.mxu0 0.0
    %822 = vmatpush1.msra.mxu0 0.0
    %823 = vmatprep.subr.mxu0 0.0
    %824 = vmatpush1.msra.mxu0 0.0
    %825 = vmatprep.mubr.f32.mxu0 0.0
    %826 = vmatmul.mubr.f32.gmra.mrb[0].mxu0 %v750
    %v827 = vpop.f32.mrb[0].mxu0
    %v828 = vadd.f32 0.0, %v827
    %v829 = vpop.f32.mrb[0].mxu0
    %830 = vmatprep.mubr.f32.mxu0 0.0
    %831 = vmatmul.mubr.f32.gmra.mrb[0].mxu0 %v753
    %v832 = vpop.f32.mrb[0].mxu0
    %v833 = vadd.f32 0.0, %v832
    %v834 = vpop.f32.mrb[0].mxu0
    %835 = vmatprep.mubr.f32.mxu0 0.0
    %836 = vmatmul.mubr.f32.gmra.mrb[0].mxu0 %v756
    %v837 = vpop.f32.mrb[0].mxu0
    %v838 = vadd.f32 0.0, %v837
    %v839 = vpop.f32.mrb[0].mxu0
    %840 = vmatprep.mubr.f32.mxu0 0.0
    %841 = vmatmul.mubr.f32.gmra.mrb[0].mxu0 %v759
    %v842 = vpop.f32.mrb[0].mxu0
    %v843 = vadd.f32 0.0, %v842
    %v844 = vpop.f32.mrb[0].mxu0
    %845 = vdwg.mxu0
    %v847 = vsel %vm246, %v737, 0
    %v850 = vsel %vm246, %v738, 0
    %v853 = vsel %vm246, %v739, 0
    %v856 = vsel %vm246, %v740, 0
    %858 = vmatprep.subr.mxu0 0.0
    %859 = vmatpush1.msra.mxu0 %v741
    %860 = vmatprep.subr.mxu0 0.0
    %861 = vmatpush1.msra.mxu0 %v742
    %862 = vmatprep.subr.mxu0 0.0
    %863 = vmatpush1.msra.mxu0 %v743
    %864 = vmatprep.subr.mxu0 0.0
    %865 = vmatpush1.msra.mxu0 %v744
    %866 = vmatprep.subr.mxu0 0.0
    %867 = vmatpush1.msra.mxu0 0.0
    %868 = vmatprep.subr.mxu0 0.0
    %869 = vmatpush1.msra.mxu0 0.0
    %870 = vmatprep.subr.mxu0 0.0
    %871 = vmatpush1.msra.mxu0 0.0
    %872 = vmatprep.subr.mxu0 0.0
    %873 = vmatpush1.msra.mxu0 0.0
    %874 = vmatprep.subr.mxu0 0.0
    %875 = vmatpush1.msra.mxu0 0.0
    %876 = vmatprep.subr.mxu0 0.0
    %877 = vmatpush1.msra.mxu0 0.0
    %878 = vmatprep.subr.mxu0 0.0
    %879 = vmatpush1.msra.mxu0 0.0
    %880 = vmatprep.subr.mxu0 0.0
    %881 = vmatpush1.msra.mxu0 0.0
    %882 = vmatprep.subr.mxu0 0.0
    %883 = vmatpush1.msra.mxu0 0.0
    %884 = vmatprep.subr.mxu0 0.0
    %885 = vmatpush1.msra.mxu0 0.0
    %886 = vmatprep.subr.mxu0 0.0
    %887 = vmatpush1.msra.mxu0 0.0
    %888 = vmatprep.subr.mxu0 0.0
    %889 = vmatpush1.msra.mxu0 0.0
    %890 = vmatprep.subr.mxu0 0.0
    %891 = vmatpush1.msra.mxu0 0.0
    %892 = vmatprep.subr.mxu0 0.0
    %893 = vmatpush1.msra.mxu0 0.0
    %894 = vmatprep.subr.mxu0 0.0
    %895 = vmatpush1.msra.mxu0 0.0
    %896 = vmatprep.subr.mxu0 0.0
    %897 = vmatpush1.msra.mxu0 0.0
    %898 = vmatprep.subr.mxu0 0.0
    %899 = vmatpush1.msra.mxu0 0.0
    %900 = vmatprep.subr.mxu0 0.0
    %901 = vmatpush1.msra.mxu0 0.0
    %902 = vmatprep.subr.mxu0 0.0
    %903 = vmatpush1.msra.mxu0 0.0
    %904 = vmatprep.subr.mxu0 0.0
    %905 = vmatpush1.msra.mxu0 0.0
    %906 = vmatprep.subr.mxu0 0.0
    %907 = vmatpush1.msra.mxu0 0.0
    %908 = vmatprep.subr.mxu0 0.0
    %909 = vmatpush1.msra.mxu0 0.0
    %910 = vmatprep.subr.mxu0 0.0
    %911 = vmatpush1.msra.mxu0 0.0
    %912 = vmatprep.subr.mxu0 0.0
    %913 = vmatpush1.msra.mxu0 0.0
    %914 = vmatprep.subr.mxu0 0.0
    %915 = vmatpush1.msra.mxu0 0.0
    %916 = vmatprep.subr.mxu0 0.0
    %917 = vmatpush1.msra.mxu0 0.0
    %918 = vmatprep.subr.mxu0 0.0
    %919 = vmatpush1.msra.mxu0 0.0
    %920 = vmatprep.subr.mxu0 0.0
    %921 = vmatpush1.msra.mxu0 0.0
    %922 = vmatprep.mubr.f32.mxu0 0.0
    %923 = vmatmul.mubr.f32.gmra.mrb[0].mxu0 %v847
    %v924 = vpop.f32.mrb[0].mxu0
    %v925 = vadd.f32 %v828, %v924
    %v926 = vpop.f32.mrb[0].mxu0
    %927 = vmatprep.mubr.f32.mxu0 0.0
    %928 = vmatmul.mubr.f32.gmra.mrb[0].mxu0 %v850
    %v929 = vpop.f32.mrb[0].mxu0
    %v930 = vadd.f32 %v833, %v929
    %v931 = vpop.f32.mrb[0].mxu0
    %932 = vmatprep.mubr.f32.mxu0 0.0
    %933 = vmatmul.mubr.f32.gmra.mrb[0].mxu0 %v853
    %v934 = vpop.f32.mrb[0].mxu0
    %v935 = vadd.f32 %v838, %v934
    %v936 = vpop.f32.mrb[0].mxu0
    %937 = vmatprep.mubr.f32.mxu0 0.0
    %938 = vmatmul.mubr.f32.gmra.mrb[0].mxu0 %v856
    %v939 = vpop.f32.mrb[0].mxu0
    %v940 = vadd.f32 %v843, %v939
    %v941 = vpop.f32.mrb[0].mxu0
    %942 = vdwg.mxu0
    %v943 = vadd.f32 %v925, %v498
    %v944 = vadd.f32 %v930, %v504
    %v945 = vadd.f32 %v935, %v510
    %v946 = vadd.f32 %v940, %v516
    %v947 = vxor.u32 %v943, 2147483648
    %v948 = vxor.u32 %v944, 2147483648
    %v949 = vxor.u32 %v945, 2147483648
    %v950 = vxor.u32 %v946, 2147483648
    %v951 = vmul.f32 %v947, 1.442695
    %v952 = vpow.pop %v951
    %v953 = vmul.f32 %v948, 1.442695
    %v954 = vpow.pop %v953
    %v955 = vmul.f32 %v949, 1.442695
    %v956 = vpow.pop %v955
    %v957 = vmul.f32 %v950, 1.442695
    %v958 = vpow.pop %v957
    %v959 = vadd.f32 %v952, 1.0
    %v960 = vadd.f32 %v954, 1.0
    %v961 = vadd.f32 %v956, 1.0
    %v962 = vadd.f32 %v958, 1.0
    %v963 = vrcp.pop %v959
    %v964 = vmul.f32 1.0, %v963
    %v965 = vrcp.pop %v960
    %v966 = vmul.f32 1.0, %v965
    %v967 = vrcp.pop %v961
    %v968 = vmul.f32 1.0, %v967
    %v969 = vrcp.pop %v962
    %v970 = vmul.f32 1.0, %v969
    %v971 = vtanh.pop %v943
    %v972 = vtanh.pop %v944
    %v973 = vtanh.pop %v945
    %v974 = vtanh.pop %v946
    %979 = vrot.lane.b32.xlu0 %v971, 96
    %v980 = vpop.permute.xlu0 %979
    %981 = vrot.lane.b32.xlu0 %v972, 96
    %v982 = vpop.permute.xlu0 %981
    %983 = vrot.lane.b32.xlu0 %v973, 96
    %v984 = vpop.permute.xlu0 %983
    %985 = vrot.lane.b32.xlu0 %v974, 96
    %v986 = vpop.permute.xlu0 %985
    %v991 = vmul.f32 %v964, %v980
    %v992 = vmul.f32 %v966, %v982
    %v993 = vmul.f32 %v968, %v984
    %v994 = vmul.f32 %v970, %v986
    %v995 = vld [vmem:[#allocation14] sm:$0xff]
    %v996 = vld [vmem:[#allocation14 + $0x8] sm:$0xff]
    %v997 = vld [vmem:[#allocation14 + $0x10] sm:$0xff]
    %v998 = vld [vmem:[#allocation14 + $0x18] sm:$0xff]
    %v999 = vld [vmem:[%s12] sm:$0x1]
    %v1001 = vlaneseq
    %v1002 = vshrl.u32 %v1001, 7
    %v1003 = vsub.s32 0, %v1002
    %v1004 = vrot.slane %v999, %v1003
    %v1007 = vsel %vm246, %v991, 0
    %v1010 = vsel %vm246, %v992, 0
    %v1013 = vsel %vm246, %v993, 0
    %v1016 = vsel %vm246, %v994, 0
    %1018 = vmatprep.subr.mxu0 0.0
    %1019 = vmatpush1.msra.mxu0 %v995
    %1020 = vmatprep.subr.mxu0 0.0
    %1021 = vmatpush1.msra.mxu0 %v996
    %1022 = vmatprep.subr.mxu0 0.0
    %1023 = vmatpush1.msra.mxu0 %v997
    %1024 = vmatprep.subr.mxu0 0.0
    %1025 = vmatpush1.msra.mxu0 %v998
    %1026 = vmatprep.subr.mxu0 0.0
    %1027 = vmatpush1.msra.mxu0 0.0
    %1028 = vmatprep.subr.mxu0 0.0
    %1029 = vmatpush1.msra.mxu0 0.0
    %1030 = vmatprep.subr.mxu0 0.0
    %1031 = vmatpush1.msra.mxu0 0.0
    %1032 = vmatprep.subr.mxu0 0.0
    %1033 = vmatpush1.msra.mxu0 0.0
    %1034 = vmatprep.subr.mxu0 0.0
    %1035 = vmatpush1.msra.mxu0 0.0
    %1036 = vmatprep.subr.mxu0 0.0
    %1037 = vmatpush1.msra.mxu0 0.0
    %1038 = vmatprep.subr.mxu0 0.0
    %1039 = vmatpush1.msra.mxu0 0.0
    %1040 = vmatprep.subr.mxu0 0.0
    %1041 = vmatpush1.msra.mxu0 0.0
    %1042 = vmatprep.subr.mxu0 0.0
    %1043 = vmatpush1.msra.mxu0 0.0
    %1044 = vmatprep.subr.mxu0 0.0
    %1045 = vmatpush1.msra.mxu0 0.0
    %1046 = vmatprep.subr.mxu0 0.0
    %1047 = vmatpush1.msra.mxu0 0.0
    %1048 = vmatprep.subr.mxu0 0.0
    %1049 = vmatpush1.msra.mxu0 0.0
    %1050 = vmatprep.subr.mxu0 0.0
    %1051 = vmatpush1.msra.mxu0 0.0
    %1052 = vmatprep.subr.mxu0 0.0
    %1053 = vmatpush1.msra.mxu0 0.0
    %1054 = vmatprep.subr.mxu0 0.0
    %1055 = vmatpush1.msra.mxu0 0.0
    %1056 = vmatprep.subr.mxu0 0.0
    %1057 = vmatpush1.msra.mxu0 0.0
    %1058 = vmatprep.subr.mxu0 0.0
    %1059 = vmatpush1.msra.mxu0 0.0
    %1060 = vmatprep.subr.mxu0 0.0
    %1061 = vmatpush1.msra.mxu0 0.0
    %1062 = vmatprep.subr.mxu0 0.0
    %1063 = vmatpush1.msra.mxu0 0.0
    %1064 = vmatprep.subr.mxu0 0.0
    %1065 = vmatpush1.msra.mxu0 0.0
    %1066 = vmatprep.subr.mxu0 0.0
    %1067 = vmatpush1.msra.mxu0 0.0
    %1068 = vmatprep.subr.mxu0 0.0
    %1069 = vmatpush1.msra.mxu0 0.0
    %1070 = vmatprep.subr.mxu0 0.0
    %1071 = vmatpush1.msra.mxu0 0.0
    %1072 = vmatprep.subr.mxu0 0.0
    %1073 = vmatpush1.msra.mxu0 0.0
    %1074 = vmatprep.subr.mxu0 0.0
    %1075 = vmatpush1.msra.mxu0 0.0
    %1076 = vmatprep.subr.mxu0 0.0
    %1077 = vmatpush1.msra.mxu0 0.0
    %1078 = vmatprep.subr.mxu0 0.0
    %1079 = vmatpush1.msra.mxu0 0.0
    %1080 = vmatprep.subr.mxu0 0.0
    %1081 = vmatpush1.msra.mxu0 0.0
    %1082 = vmatprep.mubr.f32.mxu0 0.0
    %1083 = vmatmul.mubr.f32.gmra.mrb[0].mxu0 %v1007
    %v1084 = vpop.f32.mrb[0].mxu0
    %v1085 = vadd.f32 %v1004, %v1084
    %v1086 = vpop.f32.mrb[0].mxu0
    %1087 = vmatprep.mubr.f32.mxu0 0.0
    %1088 = vmatmul.mubr.f32.gmra.mrb[0].mxu0 %v1010
    %v1089 = vpop.f32.mrb[0].mxu0
    %v1090 = vadd.f32 %v1004, %v1089
    %v1091 = vpop.f32.mrb[0].mxu0
    %1092 = vmatprep.mubr.f32.mxu0 0.0
    %1093 = vmatmul.mubr.f32.gmra.mrb[0].mxu0 %v1013
    %v1094 = vpop.f32.mrb[0].mxu0
    %v1095 = vadd.f32 %v1004, %v1094
    %v1096 = vpop.f32.mrb[0].mxu0
    %1097 = vmatprep.mubr.f32.mxu0 0.0
    %1098 = vmatmul.mubr.f32.gmra.mrb[0].mxu0 %v1016
    %v1099 = vpop.f32.mrb[0].mxu0
    %v1100 = vadd.f32 %v1004, %v1099
    %v1101 = vpop.f32.mrb[0].mxu0
    %1102 = vdwg.mxu0
    %v1103 = vadd.f32 %v360, %v1085
    %v1104 = vadd.f32 %v361, %v1090
    %v1105 = vadd.f32 %v362, %v1095
    %v1106 = vadd.f32 %v363, %v1100
    %v1107 = vrot.slane %v1103, 6
    %v1108 = vrot.slane %v1104, 6
    %v1109 = vrot.slane %v1105, 6
    %v1110 = vrot.slane %v1106, 6
    %vm1111 = vcmp.lt.s32.totalorder %v731, 2
    %v1112 = vsel %vm1111, %v1109, %v1110
    %v1113 = vsel %vm1111, %v1108, %v1109
    %v1114 = vsel %vm1111, %v1107, %v1108
    %v1115 = vsel %vm1111, %v1110, %v1107
    %v1116 = vsel %vm718, %v1115, 0.0
    %v1117 = vsel %vm719, %v1114, 0.0
    %v1118 = vsel %vm720, %v1113, 0.0
    %v1119 = vsel %vm721, %v1112, 0.0
    %s1120 = scalar_lea.vmem [#allocation11], 32
    %v1121 = vld [vmem:[%s1120] sm:$0xff]
    %v1122 = vld [vmem:[%s1120 + $0x8] sm:$0xff]
    %v1123 = vld [vmem:[%s1120 + $0x10] sm:$0xff]
    %v1124 = vld [vmem:[%s1120 + $0x18] sm:$0xff]
    %s1125 = scalar_lea.vmem [#allocation13], 32
    %v1126 = vld [vmem:[%s1125] sm:$0xff]
    %v1127 = vld [vmem:[%s1125 + $0x8] sm:$0xff]
    %v1128 = vld [vmem:[%s1125 + $0x10] sm:$0xff]
    %v1129 = vld [vmem:[%s1125 + $0x18] sm:$0xff]
    %v1131 = vsel %vm246, %v1103, 0
    %v1134 = vsel %vm246, %v1104, 0
    %v1137 = vsel %vm246, %v1105, 0
    %v1140 = vsel %vm246, %v1106, 0
    %1142 = vmatprep.subr.mxu0 0.0
    %1143 = vmatpush1.msra.mxu0 %v1126
    %1144 = vmatprep.subr.mxu0 0.0
    %1145 = vmatpush1.msra.mxu0 %v1127
    %1146 = vmatprep.subr.mxu0 0.0
    %1147 = vmatpush1.msra.mxu0 %v1128
    %1148 = vmatprep.subr.mxu0 0.0
    %1149 = vmatpush1.msra.mxu0 %v1129
    %1150 = vmatprep.subr.mxu0 0.0
    %1151 = vmatpush1.msra.mxu0 0.0
    %1152 = vmatprep.subr.mxu0 0.0
    %1153 = vmatpush1.msra.mxu0 0.0
    %1154 = vmatprep.subr.mxu0 0.0
    %1155 = vmatpush1.msra.mxu0 0.0
    %1156 = vmatprep.subr.mxu0 0.0
    %1157 = vmatpush1.msra.mxu0 0.0
    %1158 = vmatprep.subr.mxu0 0.0
    %1159 = vmatpush1.msra.mxu0 0.0
    %1160 = vmatprep.subr.mxu0 0.0
    %1161 = vmatpush1.msra.mxu0 0.0
    %1162 = vmatprep.subr.mxu0 0.0
    %1163 = vmatpush1.msra.mxu0 0.0
    %1164 = vmatprep.subr.mxu0 0.0
    %1165 = vmatpush1.msra.mxu0 0.0
    %1166 = vmatprep.subr.mxu0 0.0
    %1167 = vmatpush1.msra.mxu0 0.0
    %1168 = vmatprep.subr.mxu0 0.0
    %1169 = vmatpush1.msra.mxu0 0.0
    %1170 = vmatprep.subr.mxu0 0.0
    %1171 = vmatpush1.msra.mxu0 0.0
    %1172 = vmatprep.subr.mxu0 0.0
    %1173 = vmatpush1.msra.mxu0 0.0
    %1174 = vmatprep.subr.mxu0 0.0
    %1175 = vmatpush1.msra.mxu0 0.0
    %1176 = vmatprep.subr.mxu0 0.0
    %1177 = vmatpush1.msra.mxu0 0.0
    %1178 = vmatprep.subr.mxu0 0.0
    %1179 = vmatpush1.msra.mxu0 0.0
    %1180 = vmatprep.subr.mxu0 0.0
    %1181 = vmatpush1.msra.mxu0 0.0
    %1182 = vmatprep.subr.mxu0 0.0
    %1183 = vmatpush1.msra.mxu0 0.0
    %1184 = vmatprep.subr.mxu0 0.0
    %1185 = vmatpush1.msra.mxu0 0.0
    %1186 = vmatprep.subr.mxu0 0.0
    %1187 = vmatpush1.msra.mxu0 0.0
    %1188 = vmatprep.subr.mxu0 0.0
    %1189 = vmatpush1.msra.mxu0 0.0
    %1190 = vmatprep.subr.mxu0 0.0
    %1191 = vmatpush1.msra.mxu0 0.0
    %1192 = vmatprep.subr.mxu0 0.0
    %1193 = vmatpush1.msra.mxu0 0.0
    %1194 = vmatprep.subr.mxu0 0.0
    %1195 = vmatpush1.msra.mxu0 0.0
    %1196 = vmatprep.subr.mxu0 0.0
    %1197 = vmatpush1.msra.mxu0 0.0
    %1198 = vmatprep.subr.mxu0 0.0
    %1199 = vmatpush1.msra.mxu0 0.0
    %1200 = vmatprep.subr.mxu0 0.0
    %1201 = vmatpush1.msra.mxu0 0.0
    %1202 = vmatprep.subr.mxu0 0.0
    %1203 = vmatpush1.msra.mxu0 0.0
    %1204 = vmatprep.subr.mxu0 0.0
    %1205 = vmatpush1.msra.mxu0 0.0
    %1206 = vmatprep.mubr.f32.mxu0 0.0
    %1207 = vmatmul.mubr.f32.gmra.mrb[0].mxu0 %v1131
    %v1208 = vpop.f32.mrb[0].mxu0
    %v1209 = vadd.f32 0.0, %v1208
    %v1210 = vpop.f32.mrb[0].mxu0
    %1211 = vmatprep.mubr.f32.mxu0 0.0
    %1212 = vmatmul.mubr.f32.gmra.mrb[0].mxu0 %v1134
    %v1213 = vpop.f32.mrb[0].mxu0
    %v1214 = vadd.f32 0.0, %v1213
    %v1215 = vpop.f32.mrb[0].mxu0
    %1216 = vmatprep.mubr.f32.mxu0 0.0
    %1217 = vmatmul.mubr.f32.gmra.mrb[0].mxu0 %v1137
    %v1218 = vpop.f32.mrb[0].mxu0
    %v1219 = vadd.f32 0.0, %v1218
    %v1220 = vpop.f32.mrb[0].mxu0
    %1221 = vmatprep.mubr.f32.mxu0 0.0
    %1222 = vmatmul.mubr.f32.gmra.mrb[0].mxu0 %v1140
    %v1223 = vpop.f32.mrb[0].mxu0
    %v1224 = vadd.f32 0.0, %v1223
    %v1225 = vpop.f32.mrb[0].mxu0
    %1226 = vdwg.mxu0
    %v1228 = vsel %vm246, %v1116, 0
    %v1231 = vsel %vm246, %v1117, 0
    %v1234 = vsel %vm246, %v1118, 0
    %v1237 = vsel %vm246, %v1119, 0
    %1239 = vmatprep.subr.mxu0 0.0
    %1240 = vmatpush1.msra.mxu0 %v1121
    %1241 = vmatprep.subr.mxu0 0.0
    %1242 = vmatpush1.msra.mxu0 %v1122
    %1243 = vmatprep.subr.mxu0 0.0
    %1244 = vmatpush1.msra.mxu0 %v1123
    %1245 = vmatprep.subr.mxu0 0.0
    %1246 = vmatpush1.msra.mxu0 %v1124
    %1247 = vmatprep.subr.mxu0 0.0
    %1248 = vmatpush1.msra.mxu0 0.0
    %1249 = vmatprep.subr.mxu0 0.0
    %1250 = vmatpush1.msra.mxu0 0.0
    %1251 = vmatprep.subr.mxu0 0.0
    %1252 = vmatpush1.msra.mxu0 0.0
    %1253 = vmatprep.subr.mxu0 0.0
    %1254 = vmatpush1.msra.mxu0 0.0
    %1255 = vmatprep.subr.mxu0 0.0
    %1256 = vmatpush1.msra.mxu0 0.0
    %1257 = vmatprep.subr.mxu0 0.0
    %1258 = vmatpush1.msra.mxu0 0.0
    %1259 = vmatprep.subr.mxu0 0.0
    %1260 = vmatpush1.msra.mxu0 0.0
    %1261 = vmatprep.subr.mxu0 0.0
    %1262 = vmatpush1.msra.mxu0 0.0
    %1263 = vmatprep.subr.mxu0 0.0
    %1264 = vmatpush1.msra.mxu0 0.0
    %1265 = vmatprep.subr.mxu0 0.0
    %1266 = vmatpush1.msra.mxu0 0.0
    %1267 = vmatprep.subr.mxu0 0.0
    %1268 = vmatpush1.msra.mxu0 0.0
    %1269 = vmatprep.subr.mxu0 0.0
    %1270 = vmatpush1.msra.mxu0 0.0
    %1271 = vmatprep.subr.mxu0 0.0
    %1272 = vmatpush1.msra.mxu0 0.0
    %1273 = vmatprep.subr.mxu0 0.0
    %1274 = vmatpush1.msra.mxu0 0.0
    %1275 = vmatprep.subr.mxu0 0.0
    %1276 = vmatpush1.msra.mxu0 0.0
    %1277 = vmatprep.subr.mxu0 0.0
    %1278 = vmatpush1.msra.mxu0 0.0
    %1279 = vmatprep.subr.mxu0 0.0
    %1280 = vmatpush1.msra.mxu0 0.0
    %1281 = vmatprep.subr.mxu0 0.0
    %1282 = vmatpush1.msra.mxu0 0.0
    %1283 = vmatprep.subr.mxu0 0.0
    %1284 = vmatpush1.msra.mxu0 0.0
    %1285 = vmatprep.subr.mxu0 0.0
    %1286 = vmatpush1.msra.mxu0 0.0
    %1287 = vmatprep.subr.mxu0 0.0
    %1288 = vmatpush1.msra.mxu0 0.0
    %1289 = vmatprep.subr.mxu0 0.0
    %1290 = vmatpush1.msra.mxu0 0.0
    %1291 = vmatprep.subr.mxu0 0.0
    %1292 = vmatpush1.msra.mxu0 0.0
    %1293 = vmatprep.subr.mxu0 0.0
    %1294 = vmatpush1.msra.mxu0 0.0
    %1295 = vmatprep.subr.mxu0 0.0
    %1296 = vmatpush1.msra.mxu0 0.0
    %1297 = vmatprep.subr.mxu0 0.0
    %1298 = vmatpush1.msra.mxu0 0.0
    %1299 = vmatprep.subr.mxu0 0.0
    %1300 = vmatpush1.msra.mxu0 0.0
    %1301 = vmatprep.subr.mxu0 0.0
    %1302 = vmatpush1.msra.mxu0 0.0
    %1303 = vmatprep.mubr.f32.mxu0 0.0
    %1304 = vmatmul.mubr.f32.gmra.mrb[0].mxu0 %v1228
    %v1305 = vpop.f32.mrb[0].mxu0
    %v1306 = vadd.f32 %v1209, %v1305
    %v1307 = vpop.f32.mrb[0].mxu0
    %1308 = vmatprep.mubr.f32.mxu0 0.0
    %1309 = vmatmul.mubr.f32.gmra.mrb[0].mxu0 %v1231
    %v1310 = vpop.f32.mrb[0].mxu0
    %v1311 = vadd.f32 %v1214, %v1310
    %v1312 = vpop.f32.mrb[0].mxu0
    %1313 = vmatprep.mubr.f32.mxu0 0.0
    %1314 = vmatmul.mubr.f32.gmra.mrb[0].mxu0 %v1234
    %v1315 = vpop.f32.mrb[0].mxu0
    %v1316 = vadd.f32 %v1219, %v1315
    %v1317 = vpop.f32.mrb[0].mxu0
    %1318 = vmatprep.mubr.f32.mxu0 0.0
    %1319 = vmatmul.mubr.f32.gmra.mrb[0].mxu0 %v1237
    %v1320 = vpop.f32.mrb[0].mxu0
    %v1321 = vadd.f32 %v1224, %v1320
    %v1322 = vpop.f32.mrb[0].mxu0
    %1323 = vdwg.mxu0
    %v1324 = vadd.f32 %v1306, %v500
    %v1325 = vadd.f32 %v1311, %v506
    %v1326 = vadd.f32 %v1316, %v512
    %v1327 = vadd.f32 %v1321, %v518
    %v1328 = vxor.u32 %v1324, 2147483648
    %v1329 = vxor.u32 %v1325, 2147483648
    %v1330 = vxor.u32 %v1326, 2147483648
    %v1331 = vxor.u32 %v1327, 2147483648
    %v1332 = vmul.f32 %v1328, 1.442695
    %v1333 = vpow.pop %v1332
    %v1334 = vmul.f32 %v1329, 1.442695
    %v1335 = vpow.pop %v1334
    %v1336 = vmul.f32 %v1330, 1.442695
    %v1337 = vpow.pop %v1336
    %v1338 = vmul.f32 %v1331, 1.442695
    %v1339 = vpow.pop %v1338
    %v1340 = vadd.f32 %v1333, 1.0
    %v1341 = vadd.f32 %v1335, 1.0
    %v1342 = vadd.f32 %v1337, 1.0
    %v1343 = vadd.f32 %v1339, 1.0
    %v1344 = vrcp.pop %v1340
    %v1345 = vmul.f32 1.0, %v1344
    %v1346 = vrcp.pop %v1341
    %v1347 = vmul.f32 1.0, %v1346
    %v1348 = vrcp.pop %v1342
    %v1349 = vmul.f32 1.0, %v1348
    %v1350 = vrcp.pop %v1343
    %v1351 = vmul.f32 1.0, %v1350
    %v1352 = vtanh.pop %v1324
    %v1353 = vtanh.pop %v1325
    %v1354 = vtanh.pop %v1326
    %v1355 = vtanh.pop %v1327
    %1360 = vrot.lane.b32.xlu0 %v1352, 96
    %v1361 = vpop.permute.xlu0 %1360
    %1362 = vrot.lane.b32.xlu0 %v1353, 96
    %v1363 = vpop.permute.xlu0 %1362
    %1364 = vrot.lane.b32.xlu0 %v1354, 96
    %v1365 = vpop.permute.xlu0 %1364
    %1366 = vrot.lane.b32.xlu0 %v1355, 96
    %v1367 = vpop.permute.xlu0 %1366
    %v1372 = vmul.f32 %v1345, %v1361
    %v1373 = vmul.f32 %v1347, %v1363
    %v1374 = vmul.f32 %v1349, %v1365
    %v1375 = vmul.f32 %v1351, %v1367
    %s1376 = scalar_lea.vmem [#allocation14], 32
    %v1377 = vld [vmem:[%s1376] sm:$0xff]
    %v1378 = vld [vmem:[%s1376 + $0x8] sm:$0xff]
    %v1379 = vld [vmem:[%s1376 + $0x10] sm:$0xff]
    %v1380 = vld [vmem:[%s1376 + $0x18] sm:$0xff]
    %s1381 = scalar_lea.vmem %s12, 1
    %v1382 = vld [vmem:[%s1381] sm:$0x1]
    %v1384 = vlaneseq
    %v1385 = vshrl.u32 %v1384, 7
    %v1386 = vsub.s32 0, %v1385
    %v1387 = vrot.slane %v1382, %v1386
    %v1390 = vsel %vm246, %v1372, 0
    %v1393 = vsel %vm246, %v1373, 0
    %v1396 = vsel %vm246, %v1374, 0
    %v1399 = vsel %vm246, %v1375, 0
    %1401 = vmatprep.subr.mxu0 0.0
    %1402 = vmatpush1.msra.mxu0 %v1377
    %1403 = vmatprep.subr.mxu0 0.0
    %1404 = vmatpush1.msra.mxu0 %v1378
    %1405 = vmatprep.subr.mxu0 0.0
    %1406 = vmatpush1.msra.mxu0 %v1379
    %1407 = vmatprep.subr.mxu0 0.0
    %1408 = vmatpush1.msra.mxu0 %v1380
    %1409 = vmatprep.subr.mxu0 0.0
    %1410 = vmatpush1.msra.mxu0 0.0
    %1411 = vmatprep.subr.mxu0 0.0
    %1412 = vmatpush1.msra.mxu0 0.0
    %1413 = vmatprep.subr.mxu0 0.0
    %1414 = vmatpush1.msra.mxu0 0.0
    %1415 = vmatprep.subr.mxu0 0.0
    %1416 = vmatpush1.msra.mxu0 0.0
    %1417 = vmatprep.subr.mxu0 0.0
    %1418 = vmatpush1.msra.mxu0 0.0
    %1419 = vmatprep.subr.mxu0 0.0
    %1420 = vmatpush1.msra.mxu0 0.0
    %1421 = vmatprep.subr.mxu0 0.0
    %1422 = vmatpush1.msra.mxu0 0.0
    %1423 = vmatprep.subr.mxu0 0.0
    %1424 = vmatpush1.msra.mxu0 0.0
    %1425 = vmatprep.subr.mxu0 0.0
    %1426 = vmatpush1.msra.mxu0 0.0
    %1427 = vmatprep.subr.mxu0 0.0
    %1428 = vmatpush1.msra.mxu0 0.0
    %1429 = vmatprep.subr.mxu0 0.0
    %1430 = vmatpush1.msra.mxu0 0.0
    %1431 = vmatprep.subr.mxu0 0.0
    %1432 = vmatpush1.msra.mxu0 0.0
    %1433 = vmatprep.subr.mxu0 0.0
    %1434 = vmatpush1.msra.mxu0 0.0
    %1435 = vmatprep.subr.mxu0 0.0
    %1436 = vmatpush1.msra.mxu0 0.0
    %1437 = vmatprep.subr.mxu0 0.0
    %1438 = vmatpush1.msra.mxu0 0.0
    %1439 = vmatprep.subr.mxu0 0.0
    %1440 = vmatpush1.msra.mxu0 0.0
    %1441 = vmatprep.subr.mxu0 0.0
    %1442 = vmatpush1.msra.mxu0 0.0
    %1443 = vmatprep.subr.mxu0 0.0
    %1444 = vmatpush1.msra.mxu0 0.0
    %1445 = vmatprep.subr.mxu0 0.0
    %1446 = vmatpush1.msra.mxu0 0.0
    %1447 = vmatprep.subr.mxu0 0.0
    %1448 = vmatpush1.msra.mxu0 0.0
    %1449 = vmatprep.subr.mxu0 0.0
    %1450 = vmatpush1.msra.mxu0 0.0
    %1451 = vmatprep.subr.mxu0 0.0
    %1452 = vmatpush1.msra.mxu0 0.0
    %1453 = vmatprep.subr.mxu0 0.0
    %1454 = vmatpush1.msra.mxu0 0.0
    %1455 = vmatprep.subr.mxu0 0.0
    %1456 = vmatpush1.msra.mxu0 0.0
    %1457 = vmatprep.subr.mxu0 0.0
    %1458 = vmatpush1.msra.mxu0 0.0
    %1459 = vmatprep.subr.mxu0 0.0
    %1460 = vmatpush1.msra.mxu0 0.0
    %1461 = vmatprep.subr.mxu0 0.0
    %1462 = vmatpush1.msra.mxu0 0.0
    %1463 = vmatprep.subr.mxu0 0.0
    %1464 = vmatpush1.msra.mxu0 0.0
    %1465 = vmatprep.mubr.f32.mxu0 0.0
    %1466 = vmatmul.mubr.f32.gmra.mrb[0].mxu0 %v1390
    %v1467 = vpop.f32.mrb[0].mxu0
    %v1468 = vadd.f32 %v1387, %v1467
    %v1469 = vpop.f32.mrb[0].mxu0
    %1470 = vmatprep.mubr.f32.mxu0 0.0
    %1471 = vmatmul.mubr.f32.gmra.mrb[0].mxu0 %v1393
    %v1472 = vpop.f32.mrb[0].mxu0
    %v1473 = vadd.f32 %v1387, %v1472
    %v1474 = vpop.f32.mrb[0].mxu0
    %1475 = vmatprep.mubr.f32.mxu0 0.0
    %1476 = vmatmul.mubr.f32.gmra.mrb[0].mxu0 %v1396
    %v1477 = vpop.f32.mrb[0].mxu0
    %v1478 = vadd.f32 %v1387, %v1477
    %v1479 = vpop.f32.mrb[0].mxu0
    %1480 = vmatprep.mubr.f32.mxu0 0.0
    %1481 = vmatmul.mubr.f32.gmra.mrb[0].mxu0 %v1399
    %v1482 = vpop.f32.mrb[0].mxu0
    %v1483 = vadd.f32 %v1387, %v1482
    %v1484 = vpop.f32.mrb[0].mxu0
    %1485 = vdwg.mxu0
    %v1486 = vadd.f32 %v1103, %v1468
    %v1487 = vadd.f32 %v1104, %v1473
    %v1488 = vadd.f32 %v1105, %v1478
    %v1489 = vadd.f32 %v1106, %v1483
    %v1490 = vrot.slane %v1486, 4
    %v1491 = vrot.slane %v1487, 4
    %v1492 = vrot.slane %v1488, 4
    %v1493 = vrot.slane %v1489, 4
    %vm1494 = vcmp.lt.s32.totalorder %v731, 4
    %v1495 = vsel %vm1494, %v1492, %v1493
    %v1496 = vsel %vm1494, %v1491, %v1492
    %v1497 = vsel %vm1494, %v1490, %v1491
    %v1498 = vsel %vm1494, %v1493, %v1490
    %v1499 = vsel %vm722, %v1498, 0.0
    %v1500 = vsel %vm723, %v1497, 0.0
    %v1501 = vsel %vm724, %v1496, 0.0
    %v1502 = vsel %vm725, %v1495, 0.0
    %s1503 = scalar_lea.vmem [#allocation11], 64
    %v1504 = vld [vmem:[%s1503] sm:$0xff]
    %v1505 = vld [vmem:[%s1503 + $0x8] sm:$0xff]
    %v1506 = vld [vmem:[%s1503 + $0x10] sm:$0xff]
    %v1507 = vld [vmem:[%s1503 + $0x18] sm:$0xff]
    %s1508 = scalar_lea.vmem [#allocation13], 64
    %v1509 = vld [vmem:[%s1508] sm:$0xff]
    %v1510 = vld [vmem:[%s1508 + $0x8] sm:$0xff]
    %v1511 = vld [vmem:[%s1508 + $0x10] sm:$0xff]
    %v1512 = vld [vmem:[%s1508 + $0x18] sm:$0xff]
    %v1514 = vsel %vm246, %v1486, 0
    %v1517 = vsel %vm246, %v1487, 0
    %v1520 = vsel %vm246, %v1488, 0
    %v1523 = vsel %vm246, %v1489, 0
    %1525 = vmatprep.subr.mxu0 0.0
    %1526 = vmatpush1.msra.mxu0 %v1509
    %1527 = vmatprep.subr.mxu0 0.0
    %1528 = vmatpush1.msra.mxu0 %v1510
    %1529 = vmatprep.subr.mxu0 0.0
    %1530 = vmatpush1.msra.mxu0 %v1511
    %1531 = vmatprep.subr.mxu0 0.0
    %1532 = vmatpush1.msra.mxu0 %v1512
    %1533 = vmatprep.subr.mxu0 0.0
    %1534 = vmatpush1.msra.mxu0 0.0
    %1535 = vmatprep.subr.mxu0 0.0
    %1536 = vmatpush1.msra.mxu0 0.0
    %1537 = vmatprep.subr.mxu0 0.0
    %1538 = vmatpush1.msra.mxu0 0.0
    %1539 = vmatprep.subr.mxu0 0.0
    %1540 = vmatpush1.msra.mxu0 0.0
    %1541 = vmatprep.subr.mxu0 0.0
    %1542 = vmatpush1.msra.mxu0 0.0
    %1543 = vmatprep.subr.mxu0 0.0
    %1544 = vmatpush1.msra.mxu0 0.0
    %1545 = vmatprep.subr.mxu0 0.0
    %1546 = vmatpush1.msra.mxu0 0.0
    %1547 = vmatprep.subr.mxu0 0.0
    %1548 = vmatpush1.msra.mxu0 0.0
    %1549 = vmatprep.subr.mxu0 0.0
    %1550 = vmatpush1.msra.mxu0 0.0
    %1551 = vmatprep.subr.mxu0 0.0
    %1552 = vmatpush1.msra.mxu0 0.0
    %1553 = vmatprep.subr.mxu0 0.0
    %1554 = vmatpush1.msra.mxu0 0.0
    %1555 = vmatprep.subr.mxu0 0.0
    %1556 = vmatpush1.msra.mxu0 0.0
    %1557 = vmatprep.subr.mxu0 0.0
    %1558 = vmatpush1.msra.mxu0 0.0
    %1559 = vmatprep.subr.mxu0 0.0
    %1560 = vmatpush1.msra.mxu0 0.0
    %1561 = vmatprep.subr.mxu0 0.0
    %1562 = vmatpush1.msra.mxu0 0.0
    %1563 = vmatprep.subr.mxu0 0.0
    %1564 = vmatpush1.msra.mxu0 0.0
    %1565 = vmatprep.subr.mxu0 0.0
    %1566 = vmatpush1.msra.mxu0 0.0
    %1567 = vmatprep.subr.mxu0 0.0
    %1568 = vmatpush1.msra.mxu0 0.0
    %1569 = vmatprep.subr.mxu0 0.0
    %1570 = vmatpush1.msra.mxu0 0.0
    %1571 = vmatprep.subr.mxu0 0.0
    %1572 = vmatpush1.msra.mxu0 0.0
    %1573 = vmatprep.subr.mxu0 0.0
    %1574 = vmatpush1.msra.mxu0 0.0
    %1575 = vmatprep.subr.mxu0 0.0
    %1576 = vmatpush1.msra.mxu0 0.0
    %1577 = vmatprep.subr.mxu0 0.0
    %1578 = vmatpush1.msra.mxu0 0.0
    %1579 = vmatprep.subr.mxu0 0.0
    %1580 = vmatpush1.msra.mxu0 0.0
    %1581 = vmatprep.subr.mxu0 0.0
    %1582 = vmatpush1.msra.mxu0 0.0
    %1583 = vmatprep.subr.mxu0 0.0
    %1584 = vmatpush1.msra.mxu0 0.0
    %1585 = vmatprep.subr.mxu0 0.0
    %1586 = vmatpush1.msra.mxu0 0.0
    %1587 = vmatprep.subr.mxu0 0.0
    %1588 = vmatpush1.msra.mxu0 0.0
    %1589 = vmatprep.mubr.f32.mxu0 0.0
    %1590 = vmatmul.mubr.f32.gmra.mrb[0].mxu0 %v1514
    %v1591 = vpop.f32.mrb[0].mxu0
    %v1592 = vadd.f32 0.0, %v1591
    %v1593 = vpop.f32.mrb[0].mxu0
    %1594 = vmatprep.mubr.f32.mxu0 0.0
    %1595 = vmatmul.mubr.f32.gmra.mrb[0].mxu0 %v1517
    %v1596 = vpop.f32.mrb[0].mxu0
    %v1597 = vadd.f32 0.0, %v1596
    %v1598 = vpop.f32.mrb[0].mxu0
    %1599 = vmatprep.mubr.f32.mxu0 0.0
    %1600 = vmatmul.mubr.f32.gmra.mrb[0].mxu0 %v1520
    %v1601 = vpop.f32.mrb[0].mxu0
    %v1602 = vadd.f32 0.0, %v1601
    %v1603 = vpop.f32.mrb[0].mxu0
    %1604 = vmatprep.mubr.f32.mxu0 0.0
    %1605 = vmatmul.mubr.f32.gmra.mrb[0].mxu0 %v1523
    %v1606 = vpop.f32.mrb[0].mxu0
    %v1607 = vadd.f32 0.0, %v1606
    %v1608 = vpop.f32.mrb[0].mxu0
    %1609 = vdwg.mxu0
    %v1611 = vsel %vm246, %v1499, 0
    %v1614 = vsel %vm246, %v1500, 0
    %v1617 = vsel %vm246, %v1501, 0
    %v1620 = vsel %vm246, %v1502, 0
    %1622 = vmatprep.subr.mxu0 0.0
    %1623 = vmatpush1.msra.mxu0 %v1504
    %1624 = vmatprep.subr.mxu0 0.0
    %1625 = vmatpush1.msra.mxu0 %v1505
    %1626 = vmatprep.subr.mxu0 0.0
    %1627 = vmatpush1.msra.mxu0 %v1506
    %1628 = vmatprep.subr.mxu0 0.0
    %1629 = vmatpush1.msra.mxu0 %v1507
    %1630 = vmatprep.subr.mxu0 0.0
    %1631 = vmatpush1.msra.mxu0 0.0
    %1632 = vmatprep.subr.mxu0 0.0
    %1633 = vmatpush1.msra.mxu0 0.0
    %1634 = vmatprep.subr.mxu0 0.0
    %1635 = vmatpush1.msra.mxu0 0.0
    %1636 = vmatprep.subr.mxu0 0.0
    %1637 = vmatpush1.msra.mxu0 0.0
    %1638 = vmatprep.subr.mxu0 0.0
    %1639 = vmatpush1.msra.mxu0 0.0
    %1640 = vmatprep.subr.mxu0 0.0
    %1641 = vmatpush1.msra.mxu0 0.0
    %1642 = vmatprep.subr.mxu0 0.0
    %1643 = vmatpush1.msra.mxu0 0.0
    %1644 = vmatprep.subr.mxu0 0.0
    %1645 = vmatpush1.msra.mxu0 0.0
    %1646 = vmatprep.subr.mxu0 0.0
    %1647 = vmatpush1.msra.mxu0 0.0
    %1648 = vmatprep.subr.mxu0 0.0
    %1649 = vmatpush1.msra.mxu0 0.0
    %1650 = vmatprep.subr.mxu0 0.0
    %1651 = vmatpush1.msra.mxu0 0.0
    %1652 = vmatprep.subr.mxu0 0.0
    %1653 = vmatpush1.msra.mxu0 0.0
    %1654 = vmatprep.subr.mxu0 0.0
    %1655 = vmatpush1.msra.mxu0 0.0
    %1656 = vmatprep.subr.mxu0 0.0
    %1657 = vmatpush1.msra.mxu0 0.0
    %1658 = vmatprep.subr.mxu0 0.0
    %1659 = vmatpush1.msra.mxu0 0.0
    %1660 = vmatprep.subr.mxu0 0.0
    %1661 = vmatpush1.msra.mxu0 0.0
    %1662 = vmatprep.subr.mxu0 0.0
    %1663 = vmatpush1.msra.mxu0 0.0
    %1664 = vmatprep.subr.mxu0 0.0
    %1665 = vmatpush1.msra.mxu0 0.0
    %1666 = vmatprep.subr.mxu0 0.0
    %1667 = vmatpush1.msra.mxu0 0.0
    %1668 = vmatprep.subr.mxu0 0.0
    %1669 = vmatpush1.msra.mxu0 0.0
    %1670 = vmatprep.subr.mxu0 0.0
    %1671 = vmatpush1.msra.mxu0 0.0
    %1672 = vmatprep.subr.mxu0 0.0
    %1673 = vmatpush1.msra.mxu0 0.0
    %1674 = vmatprep.subr.mxu0 0.0
    %1675 = vmatpush1.msra.mxu0 0.0
    %1676 = vmatprep.subr.mxu0 0.0
    %1677 = vmatpush1.msra.mxu0 0.0
    %1678 = vmatprep.subr.mxu0 0.0
    %1679 = vmatpush1.msra.mxu0 0.0
    %1680 = vmatprep.subr.mxu0 0.0
    %1681 = vmatpush1.msra.mxu0 0.0
    %1682 = vmatprep.subr.mxu0 0.0
    %1683 = vmatpush1.msra.mxu0 0.0
    %1684 = vmatprep.subr.mxu0 0.0
    %1685 = vmatpush1.msra.mxu0 0.0
    %1686 = vmatprep.mubr.f32.mxu0 0.0
    %1687 = vmatmul.mubr.f32.gmra.mrb[0].mxu0 %v1611
    %v1688 = vpop.f32.mrb[0].mxu0
    %v1689 = vadd.f32 %v1592, %v1688
    %v1690 = vpop.f32.mrb[0].mxu0
    %1691 = vmatprep.mubr.f32.mxu0 0.0
    %1692 = vmatmul.mubr.f32.gmra.mrb[0].mxu0 %v1614
    %v1693 = vpop.f32.mrb[0].mxu0
    %v1694 = vadd.f32 %v1597, %v1693
    %v1695 = vpop.f32.mrb[0].mxu0
    %1696 = vmatprep.mubr.f32.mxu0 0.0
    %1697 = vmatmul.mubr.f32.gmra.mrb[0].mxu0 %v1617
    %v1698 = vpop.f32.mrb[0].mxu0
    %v1699 = vadd.f32 %v1602, %v1698
    %v1700 = vpop.f32.mrb[0].mxu0
    %1701 = vmatprep.mubr.f32.mxu0 0.0
    %1702 = vmatmul.mubr.f32.gmra.mrb[0].mxu0 %v1620
    %v1703 = vpop.f32.mrb[0].mxu0
    %v1704 = vadd.f32 %v1607, %v1703
    %v1705 = vpop.f32.mrb[0].mxu0
    %1706 = vdwg.mxu0
    %v1707 = vadd.f32 %v1689, %v587
    %v1708 = vadd.f32 %v1694, %v593
    %v1709 = vadd.f32 %v1699, %v599
    %v1710 = vadd.f32 %v1704, %v605
    %v1711 = vxor.u32 %v1707, 2147483648
    %v1712 = vxor.u32 %v1708, 2147483648
    %v1713 = vxor.u32 %v1709, 2147483648
    %v1714 = vxor.u32 %v1710, 2147483648
    %v1715 = vmul.f32 %v1711, 1.442695
    %v1716 = vpow.pop %v1715
    %v1717 = vmul.f32 %v1712, 1.442695
    %v1718 = vpow.pop %v1717
    %v1719 = vmul.f32 %v1713, 1.442695
    %v1720 = vpow.pop %v1719
    %v1721 = vmul.f32 %v1714, 1.442695
    %v1722 = vpow.pop %v1721
    %v1723 = vadd.f32 %v1716, 1.0
    %v1724 = vadd.f32 %v1718, 1.0
    %v1725 = vadd.f32 %v1720, 1.0
    %v1726 = vadd.f32 %v1722, 1.0
    %v1727 = vrcp.pop %v1723
    %v1728 = vmul.f32 1.0, %v1727
    %v1729 = vrcp.pop %v1724
    %v1730 = vmul.f32 1.0, %v1729
    %v1731 = vrcp.pop %v1725
    %v1732 = vmul.f32 1.0, %v1731
    %v1733 = vrcp.pop %v1726
    %v1734 = vmul.f32 1.0, %v1733
    %v1735 = vtanh.pop %v1707
    %v1736 = vtanh.pop %v1708
    %v1737 = vtanh.pop %v1709
    %v1738 = vtanh.pop %v1710
    %1743 = vrot.lane.b32.xlu0 %v1735, 96
    %v1744 = vpop.permute.xlu0 %1743
    %1745 = vrot.lane.b32.xlu0 %v1736, 96
    %v1746 = vpop.permute.xlu0 %1745
    %1747 = vrot.lane.b32.xlu0 %v1737, 96
    %v1748 = vpop.permute.xlu0 %1747
    %1749 = vrot.lane.b32.xlu0 %v1738, 96
    %v1750 = vpop.permute.xlu0 %1749
    %v1755 = vmul.f32 %v1728, %v1744
    %v1756 = vmul.f32 %v1730, %v1746
    %v1757 = vmul.f32 %v1732, %v1748
    %v1758 = vmul.f32 %v1734, %v1750
    %s1759 = scalar_lea.vmem [#allocation14], 64
    %v1760 = vld [vmem:[%s1759] sm:$0xff]
    %v1761 = vld [vmem:[%s1759 + $0x8] sm:$0xff]
    %v1762 = vld [vmem:[%s1759 + $0x10] sm:$0xff]
    %v1763 = vld [vmem:[%s1759 + $0x18] sm:$0xff]
    %s1764 = scalar_lea.vmem %s12, 2
    %v1765 = vld [vmem:[%s1764] sm:$0x1]
    %v1767 = vlaneseq
    %v1768 = vshrl.u32 %v1767, 7
    %v1769 = vsub.s32 0, %v1768
    %v1770 = vrot.slane %v1765, %v1769
    %v1773 = vsel %vm246, %v1755, 0
    %v1776 = vsel %vm246, %v1756, 0
    %v1779 = vsel %vm246, %v1757, 0
    %v1782 = vsel %vm246, %v1758, 0
    %1784 = vmatprep.subr.mxu0 0.0
    %1785 = vmatpush1.msra.mxu0 %v1760
    %1786 = vmatprep.subr.mxu0 0.0
    %1787 = vmatpush1.msra.mxu0 %v1761
    %1788 = vmatprep.subr.mxu0 0.0
    %1789 = vmatpush1.msra.mxu0 %v1762
    %1790 = vmatprep.subr.mxu0 0.0
    %1791 = vmatpush1.msra.mxu0 %v1763
    %1792 = vmatprep.subr.mxu0 0.0
    %1793 = vmatpush1.msra.mxu0 0.0
    %1794 = vmatprep.subr.mxu0 0.0
    %1795 = vmatpush1.msra.mxu0 0.0
    %1796 = vmatprep.subr.mxu0 0.0
    %1797 = vmatpush1.msra.mxu0 0.0
    %1798 = vmatprep.subr.mxu0 0.0
    %1799 = vmatpush1.msra.mxu0 0.0
    %1800 = vmatprep.subr.mxu0 0.0
    %1801 = vmatpush1.msra.mxu0 0.0
    %1802 = vmatprep.subr.mxu0 0.0
    %1803 = vmatpush1.msra.mxu0 0.0
    %1804 = vmatprep.subr.mxu0 0.0
    %1805 = vmatpush1.msra.mxu0 0.0
    %1806 = vmatprep.subr.mxu0 0.0
    %1807 = vmatpush1.msra.mxu0 0.0
    %1808 = vmatprep.subr.mxu0 0.0
    %1809 = vmatpush1.msra.mxu0 0.0
    %1810 = vmatprep.subr.mxu0 0.0
    %1811 = vmatpush1.msra.mxu0 0.0
    %1812 = vmatprep.subr.mxu0 0.0
    %1813 = vmatpush1.msra.mxu0 0.0
    %1814 = vmatprep.subr.mxu0 0.0
    %1815 = vmatpush1.msra.mxu0 0.0
    %1816 = vmatprep.subr.mxu0 0.0
    %1817 = vmatpush1.msra.mxu0 0.0
    %1818 = vmatprep.subr.mxu0 0.0
    %1819 = vmatpush1.msra.mxu0 0.0
    %1820 = vmatprep.subr.mxu0 0.0
    %1821 = vmatpush1.msra.mxu0 0.0
    %1822 = vmatprep.subr.mxu0 0.0
    %1823 = vmatpush1.msra.mxu0 0.0
    %1824 = vmatprep.subr.mxu0 0.0
    %1825 = vmatpush1.msra.mxu0 0.0
    %1826 = vmatprep.subr.mxu0 0.0
    %1827 = vmatpush1.msra.mxu0 0.0
    %1828 = vmatprep.subr.mxu0 0.0
    %1829 = vmatpush1.msra.mxu0 0.0
    %1830 = vmatprep.subr.mxu0 0.0
    %1831 = vmatpush1.msra.mxu0 0.0
    %1832 = vmatprep.subr.mxu0 0.0
    %1833 = vmatpush1.msra.mxu0 0.0
    %1834 = vmatprep.subr.mxu0 0.0
    %1835 = vmatpush1.msra.mxu0 0.0
    %1836 = vmatprep.subr.mxu0 0.0
    %1837 = vmatpush1.msra.mxu0 0.0
    %1838 = vmatprep.subr.mxu0 0.0
    %1839 = vmatpush1.msra.mxu0 0.0
    %1840 = vmatprep.subr.mxu0 0.0
    %1841 = vmatpush1.msra.mxu0 0.0
    %1842 = vmatprep.subr.mxu0 0.0
    %1843 = vmatpush1.msra.mxu0 0.0
    %1844 = vmatprep.subr.mxu0 0.0
    %1845 = vmatpush1.msra.mxu0 0.0
    %1846 = vmatprep.subr.mxu0 0.0
    %1847 = vmatpush1.msra.mxu0 0.0
    %1848 = vmatprep.mubr.f32.mxu0 0.0
    %1849 = vmatmul.mubr.f32.gmra.mrb[0].mxu0 %v1773
    %v1850 = vpop.f32.mrb[0].mxu0
    %v1851 = vadd.f32 %v1770, %v1850
    %v1852 = vpop.f32.mrb[0].mxu0
    %1853 = vmatprep.mubr.f32.mxu0 0.0
    %1854 = vmatmul.mubr.f32.gmra.mrb[0].mxu0 %v1776
    %v1855 = vpop.f32.mrb[0].mxu0
    %v1856 = vadd.f32 %v1770, %v1855
    %v1857 = vpop.f32.mrb[0].mxu0
    %1858 = vmatprep.mubr.f32.mxu0 0.0
    %1859 = vmatmul.mubr.f32.gmra.mrb[0].mxu0 %v1779
    %v1860 = vpop.f32.mrb[0].mxu0
    %v1861 = vadd.f32 %v1770, %v1860
    %v1862 = vpop.f32.mrb[0].mxu0
    %1863 = vmatprep.mubr.f32.mxu0 0.0
    %1864 = vmatmul.mubr.f32.gmra.mrb[0].mxu0 %v1782
    %v1865 = vpop.f32.mrb[0].mxu0
    %v1866 = vadd.f32 %v1770, %v1865
    %v1867 = vpop.f32.mrb[0].mxu0
    %1868 = vdwg.mxu0
    %v1869 = vadd.f32 %v1486, %v1851
    %v1870 = vadd.f32 %v1487, %v1856
    %v1871 = vadd.f32 %v1488, %v1861
    %v1872 = vadd.f32 %v1489, %v1866
    %v1873 = vrot.slane %v1869, 7
    %v1874 = vrot.slane %v1870, 7
    %v1875 = vrot.slane %v1871, 7
    %v1876 = vrot.slane %v1872, 7
    %v1877 = vsel %vm732, %v1875, %v1876
    %v1878 = vsel %vm732, %v1874, %v1875
    %v1879 = vsel %vm732, %v1873, %v1874
    %v1880 = vsel %vm732, %v1876, %v1873
    %v1881 = vsel %vm714, %v1880, 0.0
    %v1882 = vsel %vm715, %v1879, 0.0
    %v1883 = vsel %vm716, %v1878, 0.0
    %v1884 = vsel %vm717, %v1877, 0.0
    %s1885 = scalar_lea.vmem [#allocation11], 96
    %v1886 = vld [vmem:[%s1885] sm:$0xff]
    %v1887 = vld [vmem:[%s1885 + $0x8] sm:$0xff]
    %v1888 = vld [vmem:[%s1885 + $0x10] sm:$0xff]
    %v1889 = vld [vmem:[%s1885 + $0x18] sm:$0xff]
    %s1890 = scalar_lea.vmem [#allocation13], 96
    %v1891 = vld [vmem:[%s1890] sm:$0xff]
    %v1892 = vld [vmem:[%s1890 + $0x8] sm:$0xff]
    %v1893 = vld [vmem:[%s1890 + $0x10] sm:$0xff]
    %v1894 = vld [vmem:[%s1890 + $0x18] sm:$0xff]
    %v1896 = vsel %vm246, %v1869, 0
    %v1899 = vsel %vm246, %v1870, 0
    %v1902 = vsel %vm246, %v1871, 0
    %v1905 = vsel %vm246, %v1872, 0
    %1907 = vmatprep.subr.mxu0 0.0
    %1908 = vmatpush1.msra.mxu0 %v1891
    %1909 = vmatprep.subr.mxu0 0.0
    %1910 = vmatpush1.msra.mxu0 %v1892
    %1911 = vmatprep.subr.mxu0 0.0
    %1912 = vmatpush1.msra.mxu0 %v1893
    %1913 = vmatprep.subr.mxu0 0.0
    %1914 = vmatpush1.msra.mxu0 %v1894
    %1915 = vmatprep.subr.mxu0 0.0
    %1916 = vmatpush1.msra.mxu0 0.0
    %1917 = vmatprep.subr.mxu0 0.0
    %1918 = vmatpush1.msra.mxu0 0.0
    %1919 = vmatprep.subr.mxu0 0.0
    %1920 = vmatpush1.msra.mxu0 0.0
    %1921 = vmatprep.subr.mxu0 0.0
    %1922 = vmatpush1.msra.mxu0 0.0
    %1923 = vmatprep.subr.mxu0 0.0
    %1924 = vmatpush1.msra.mxu0 0.0
    %1925 = vmatprep.subr.mxu0 0.0
    %1926 = vmatpush1.msra.mxu0 0.0
    %1927 = vmatprep.subr.mxu0 0.0
    %1928 = vmatpush1.msra.mxu0 0.0
    %1929 = vmatprep.subr.mxu0 0.0
    %1930 = vmatpush1.msra.mxu0 0.0
    %1931 = vmatprep.subr.mxu0 0.0
    %1932 = vmatpush1.msra.mxu0 0.0
    %1933 = vmatprep.subr.mxu0 0.0
    %1934 = vmatpush1.msra.mxu0 0.0
    %1935 = vmatprep.subr.mxu0 0.0
    %1936 = vmatpush1.msra.mxu0 0.0
    %1937 = vmatprep.subr.mxu0 0.0
    %1938 = vmatpush1.msra.mxu0 0.0
    %1939 = vmatprep.subr.mxu0 0.0
    %1940 = vmatpush1.msra.mxu0 0.0
    %1941 = vmatprep.subr.mxu0 0.0
    %1942 = vmatpush1.msra.mxu0 0.0
    %1943 = vmatprep.subr.mxu0 0.0
    %1944 = vmatpush1.msra.mxu0 0.0
    %1945 = vmatprep.subr.mxu0 0.0
    %1946 = vmatpush1.msra.mxu0 0.0
    %1947 = vmatprep.subr.mxu0 0.0
    %1948 = vmatpush1.msra.mxu0 0.0
    %1949 = vmatprep.subr.mxu0 0.0
    %1950 = vmatpush1.msra.mxu0 0.0
    %1951 = vmatprep.subr.mxu0 0.0
    %1952 = vmatpush1.msra.mxu0 0.0
    %1953 = vmatprep.subr.mxu0 0.0
    %1954 = vmatpush1.msra.mxu0 0.0
    %1955 = vmatprep.subr.mxu0 0.0
    %1956 = vmatpush1.msra.mxu0 0.0
    %1957 = vmatprep.subr.mxu0 0.0
    %1958 = vmatpush1.msra.mxu0 0.0
    %1959 = vmatprep.subr.mxu0 0.0
    %1960 = vmatpush1.msra.mxu0 0.0
    %1961 = vmatprep.subr.mxu0 0.0
    %1962 = vmatpush1.msra.mxu0 0.0
    %1963 = vmatprep.subr.mxu0 0.0
    %1964 = vmatpush1.msra.mxu0 0.0
    %1965 = vmatprep.subr.mxu0 0.0
    %1966 = vmatpush1.msra.mxu0 0.0
    %1967 = vmatprep.subr.mxu0 0.0
    %1968 = vmatpush1.msra.mxu0 0.0
    %1969 = vmatprep.subr.mxu0 0.0
    %1970 = vmatpush1.msra.mxu0 0.0
    %1971 = vmatprep.mubr.f32.mxu0 0.0
    %1972 = vmatmul.mubr.f32.gmra.mrb[0].mxu0 %v1896
    %v1973 = vpop.f32.mrb[0].mxu0
    %v1974 = vadd.f32 0.0, %v1973
    %v1975 = vpop.f32.mrb[0].mxu0
    %1976 = vmatprep.mubr.f32.mxu0 0.0
    %1977 = vmatmul.mubr.f32.gmra.mrb[0].mxu0 %v1899
    %v1978 = vpop.f32.mrb[0].mxu0
    %v1979 = vadd.f32 0.0, %v1978
    %v1980 = vpop.f32.mrb[0].mxu0
    %1981 = vmatprep.mubr.f32.mxu0 0.0
    %1982 = vmatmul.mubr.f32.gmra.mrb[0].mxu0 %v1902
    %v1983 = vpop.f32.mrb[0].mxu0
    %v1984 = vadd.f32 0.0, %v1983
    %v1985 = vpop.f32.mrb[0].mxu0
    %1986 = vmatprep.mubr.f32.mxu0 0.0
    %1987 = vmatmul.mubr.f32.gmra.mrb[0].mxu0 %v1905
    %v1988 = vpop.f32.mrb[0].mxu0
    %v1989 = vadd.f32 0.0, %v1988
    %v1990 = vpop.f32.mrb[0].mxu0
    %1991 = vdwg.mxu0
    %v1993 = vsel %vm246, %v1881, 0
    %v1996 = vsel %vm246, %v1882, 0
    %v1999 = vsel %vm246, %v1883, 0
    %v2002 = vsel %vm246, %v1884, 0
    %2004 = vmatprep.subr.mxu0 0.0
    %2005 = vmatpush1.msra.mxu0 %v1886
    %2006 = vmatprep.subr.mxu0 0.0
    %2007 = vmatpush1.msra.mxu0 %v1887
    %2008 = vmatprep.subr.mxu0 0.0
    %2009 = vmatpush1.msra.mxu0 %v1888
    %2010 = vmatprep.subr.mxu0 0.0
    %2011 = vmatpush1.msra.mxu0 %v1889
    %2012 = vmatprep.subr.mxu0 0.0
    %2013 = vmatpush1.msra.mxu0 0.0
    %2014 = vmatprep.subr.mxu0 0.0
    %2015 = vmatpush1.msra.mxu0 0.0
    %2016 = vmatprep.subr.mxu0 0.0
    %2017 = vmatpush1.msra.mxu0 0.0
    %2018 = vmatprep.subr.mxu0 0.0
    %2019 = vmatpush1.msra.mxu0 0.0
    %2020 = vmatprep.subr.mxu0 0.0
    %2021 = vmatpush1.msra.mxu0 0.0
    %2022 = vmatprep.subr.mxu0 0.0
    %2023 = vmatpush1.msra.mxu0 0.0
    %2024 = vmatprep.subr.mxu0 0.0
    %2025 = vmatpush1.msra.mxu0 0.0
    %2026 = vmatprep.subr.mxu0 0.0
    %2027 = vmatpush1.msra.mxu0 0.0
    %2028 = vmatprep.subr.mxu0 0.0
    %2029 = vmatpush1.msra.mxu0 0.0
    %2030 = vmatprep.subr.mxu0 0.0
    %2031 = vmatpush1.msra.mxu0 0.0
    %2032 = vmatprep.subr.mxu0 0.0
    %2033 = vmatpush1.msra.mxu0 0.0
    %2034 = vmatprep.subr.mxu0 0.0
    %2035 = vmatpush1.msra.mxu0 0.0
    %2036 = vmatprep.subr.mxu0 0.0
    %2037 = vmatpush1.msra.mxu0 0.0
    %2038 = vmatprep.subr.mxu0 0.0
    %2039 = vmatpush1.msra.mxu0 0.0
    %2040 = vmatprep.subr.mxu0 0.0
    %2041 = vmatpush1.msra.mxu0 0.0
    %2042 = vmatprep.subr.mxu0 0.0
    %2043 = vmatpush1.msra.mxu0 0.0
    %2044 = vmatprep.subr.mxu0 0.0
    %2045 = vmatpush1.msra.mxu0 0.0
    %2046 = vmatprep.subr.mxu0 0.0
    %2047 = vmatpush1.msra.mxu0 0.0
    %2048 = vmatprep.subr.mxu0 0.0
    %2049 = vmatpush1.msra.mxu0 0.0
    %2050 = vmatprep.subr.mxu0 0.0
    %2051 = vmatpush1.msra.mxu0 0.0
    %2052 = vmatprep.subr.mxu0 0.0
    %2053 = vmatpush1.msra.mxu0 0.0
    %2054 = vmatprep.subr.mxu0 0.0
    %2055 = vmatpush1.msra.mxu0 0.0
    %2056 = vmatprep.subr.mxu0 0.0
    %2057 = vmatpush1.msra.mxu0 0.0
    %2058 = vmatprep.subr.mxu0 0.0
    %2059 = vmatpush1.msra.mxu0 0.0
    %2060 = vmatprep.subr.mxu0 0.0
    %2061 = vmatpush1.msra.mxu0 0.0
    %2062 = vmatprep.subr.mxu0 0.0
    %2063 = vmatpush1.msra.mxu0 0.0
    %2064 = vmatprep.subr.mxu0 0.0
    %2065 = vmatpush1.msra.mxu0 0.0
    %2066 = vmatprep.subr.mxu0 0.0
    %2067 = vmatpush1.msra.mxu0 0.0
    %2068 = vmatprep.mubr.f32.mxu0 0.0
    %2069 = vmatmul.mubr.f32.gmra.mrb[0].mxu0 %v1993
    %v2070 = vpop.f32.mrb[0].mxu0
    %v2071 = vadd.f32 %v1974, %v2070
    %v2072 = vpop.f32.mrb[0].mxu0
    %2073 = vmatprep.mubr.f32.mxu0 0.0
    %2074 = vmatmul.mubr.f32.gmra.mrb[0].mxu0 %v1996
    %v2075 = vpop.f32.mrb[0].mxu0
    %v2076 = vadd.f32 %v1979, %v2075
    %v2077 = vpop.f32.mrb[0].mxu0
    %2078 = vmatprep.mubr.f32.mxu0 0.0
    %2079 = vmatmul.mubr.f32.gmra.mrb[0].mxu0 %v1999
    %v2080 = vpop.f32.mrb[0].mxu0
    %v2081 = vadd.f32 %v1984, %v2080
    %v2082 = vpop.f32.mrb[0].mxu0
    %2083 = vmatprep.mubr.f32.mxu0 0.0
    %2084 = vmatmul.mubr.f32.gmra.mrb[0].mxu0 %v2002
    %v2085 = vpop.f32.mrb[0].mxu0
    %v2086 = vadd.f32 %v1989, %v2085
    %v2087 = vpop.f32.mrb[0].mxu0
    %2088 = vdwg.mxu0
    %v2089 = vadd.f32 %v2071, %v589
    %v2090 = vadd.f32 %v2076, %v595
    %v2091 = vadd.f32 %v2081, %v601
    %v2092 = vadd.f32 %v2086, %v607
    %v2093 = vxor.u32 %v2089, 2147483648
    %v2094 = vxor.u32 %v2090, 2147483648
    %v2095 = vxor.u32 %v2091, 2147483648
    %v2096 = vxor.u32 %v2092, 2147483648
    %v2097 = vmul.f32 %v2093, 1.442695
    %v2098 = vpow.pop %v2097
    %v2099 = vmul.f32 %v2094, 1.442695
    %v2100 = vpow.pop %v2099
    %v2101 = vmul.f32 %v2095, 1.442695
    %v2102 = vpow.pop %v2101
    %v2103 = vmul.f32 %v2096, 1.442695
    %v2104 = vpow.pop %v2103
    %v2105 = vadd.f32 %v2098, 1.0
    %v2106 = vadd.f32 %v2100, 1.0
    %v2107 = vadd.f32 %v2102, 1.0
    %v2108 = vadd.f32 %v2104, 1.0
    %v2109 = vrcp.pop %v2105
    %v2110 = vmul.f32 1.0, %v2109
    %v2111 = vrcp.pop %v2106
    %v2112 = vmul.f32 1.0, %v2111
    %v2113 = vrcp.pop %v2107
    %v2114 = vmul.f32 1.0, %v2113
    %v2115 = vrcp.pop %v2108
    %v2116 = vmul.f32 1.0, %v2115
    %v2117 = vtanh.pop %v2089
    %v2118 = vtanh.pop %v2090
    %v2119 = vtanh.pop %v2091
    %v2120 = vtanh.pop %v2092
    %2125 = vrot.lane.b32.xlu0 %v2117, 96
    %v2126 = vpop.permute.xlu0 %2125
    %2127 = vrot.lane.b32.xlu0 %v2118, 96
    %v2128 = vpop.permute.xlu0 %2127
    %2129 = vrot.lane.b32.xlu0 %v2119, 96
    %v2130 = vpop.permute.xlu0 %2129
    %2131 = vrot.lane.b32.xlu0 %v2120, 96
    %v2132 = vpop.permute.xlu0 %2131
    %v2137 = vmul.f32 %v2110, %v2126
    %v2138 = vmul.f32 %v2112, %v2128
    %v2139 = vmul.f32 %v2114, %v2130
    %v2140 = vmul.f32 %v2116, %v2132
    %s2141 = scalar_lea.vmem [#allocation14], 96
    %v2142 = vld [vmem:[%s2141] sm:$0xff]
    %v2143 = vld [vmem:[%s2141 + $0x8] sm:$0xff]
    %v2144 = vld [vmem:[%s2141 + $0x10] sm:$0xff]
    %v2145 = vld [vmem:[%s2141 + $0x18] sm:$0xff]
    %s2146 = scalar_lea.vmem %s12, 3
    %v2147 = vld [vmem:[%s2146] sm:$0x1]
    %v2149 = vlaneseq
    %v2150 = vshrl.u32 %v2149, 7
    %v2151 = vsub.s32 0, %v2150
    %v2152 = vrot.slane %v2147, %v2151
    %v2155 = vsel %vm246, %v2137, 0
    %v2158 = vsel %vm246, %v2138, 0
    %v2161 = vsel %vm246, %v2139, 0
    %v2164 = vsel %vm246, %v2140, 0
    %2166 = vmatprep.subr.mxu0 0.0
    %2167 = vmatpush1.msra.mxu0 %v2142
    %2168 = vmatprep.subr.mxu0 0.0
    %2169 = vmatpush1.msra.mxu0 %v2143
    %2170 = vmatprep.subr.mxu0 0.0
    %2171 = vmatpush1.msra.mxu0 %v2144
    %2172 = vmatprep.subr.mxu0 0.0
    %2173 = vmatpush1.msra.mxu0 %v2145
    %2174 = vmatprep.subr.mxu0 0.0
    %2175 = vmatpush1.msra.mxu0 0.0
    %2176 = vmatprep.subr.mxu0 0.0
    %2177 = vmatpush1.msra.mxu0 0.0
    %2178 = vmatprep.subr.mxu0 0.0
    %2179 = vmatpush1.msra.mxu0 0.0
    %2180 = vmatprep.subr.mxu0 0.0
    %2181 = vmatpush1.msra.mxu0 0.0
    %2182 = vmatprep.subr.mxu0 0.0
    %2183 = vmatpush1.msra.mxu0 0.0
    %2184 = vmatprep.subr.mxu0 0.0
    %2185 = vmatpush1.msra.mxu0 0.0
    %2186 = vmatprep.subr.mxu0 0.0
    %2187 = vmatpush1.msra.mxu0 0.0
    %2188 = vmatprep.subr.mxu0 0.0
    %2189 = vmatpush1.msra.mxu0 0.0
    %2190 = vmatprep.subr.mxu0 0.0
    %2191 = vmatpush1.msra.mxu0 0.0
    %2192 = vmatprep.subr.mxu0 0.0
    %2193 = vmatpush1.msra.mxu0 0.0
    %2194 = vmatprep.subr.mxu0 0.0
    %2195 = vmatpush1.msra.mxu0 0.0
    %2196 = vmatprep.subr.mxu0 0.0
    %2197 = vmatpush1.msra.mxu0 0.0
    %2198 = vmatprep.subr.mxu0 0.0
    %2199 = vmatpush1.msra.mxu0 0.0
    %2200 = vmatprep.subr.mxu0 0.0
    %2201 = vmatpush1.msra.mxu0 0.0
    %2202 = vmatprep.subr.mxu0 0.0
    %2203 = vmatpush1.msra.mxu0 0.0
    %2204 = vmatprep.subr.mxu0 0.0
    %2205 = vmatpush1.msra.mxu0 0.0
    %2206 = vmatprep.subr.mxu0 0.0
    %2207 = vmatpush1.msra.mxu0 0.0
    %2208 = vmatprep.subr.mxu0 0.0
    %2209 = vmatpush1.msra.mxu0 0.0
    %2210 = vmatprep.subr.mxu0 0.0
    %2211 = vmatpush1.msra.mxu0 0.0
    %2212 = vmatprep.subr.mxu0 0.0
    %2213 = vmatpush1.msra.mxu0 0.0
    %2214 = vmatprep.subr.mxu0 0.0
    %2215 = vmatpush1.msra.mxu0 0.0
    %2216 = vmatprep.subr.mxu0 0.0
    %2217 = vmatpush1.msra.mxu0 0.0
    %2218 = vmatprep.subr.mxu0 0.0
    %2219 = vmatpush1.msra.mxu0 0.0
    %2220 = vmatprep.subr.mxu0 0.0
    %2221 = vmatpush1.msra.mxu0 0.0
    %2222 = vmatprep.subr.mxu0 0.0
    %2223 = vmatpush1.msra.mxu0 0.0
    %2224 = vmatprep.subr.mxu0 0.0
    %2225 = vmatpush1.msra.mxu0 0.0
    %2226 = vmatprep.subr.mxu0 0.0
    %2227 = vmatpush1.msra.mxu0 0.0
    %2228 = vmatprep.subr.mxu0 0.0
    %2229 = vmatpush1.msra.mxu0 0.0
    %2230 = vmatprep.mubr.f32.mxu0 0.0
    %2231 = vmatmul.mubr.f32.gmra.mrb[0].mxu0 %v2155
    %v2232 = vpop.f32.mrb[0].mxu0
    %v2233 = vadd.f32 %v2152, %v2232
    %v2234 = vpop.f32.mrb[0].mxu0
    %2235 = vmatprep.mubr.f32.mxu0 0.0
    %2236 = vmatmul.mubr.f32.gmra.mrb[0].mxu0 %v2158
    %v2237 = vpop.f32.mrb[0].mxu0
    %v2238 = vadd.f32 %v2152, %v2237
    %v2239 = vpop.f32.mrb[0].mxu0
    %2240 = vmatprep.mubr.f32.mxu0 0.0
    %2241 = vmatmul.mubr.f32.gmra.mrb[0].mxu0 %v2161
    %v2242 = vpop.f32.mrb[0].mxu0
    %v2243 = vadd.f32 %v2152, %v2242
    %v2244 = vpop.f32.mrb[0].mxu0
    %2245 = vmatprep.mubr.f32.mxu0 0.0
    %2246 = vmatmul.mubr.f32.gmra.mrb[0].mxu0 %v2164
    %v2247 = vpop.f32.mrb[0].mxu0
    %v2248 = vadd.f32 %v2152, %v2247
    %v2249 = vpop.f32.mrb[0].mxu0
    %2250 = vdwg.mxu0
    %v2251 = vadd.f32 %v1869, %v2233
    %v2252 = vadd.f32 %v1870, %v2238
    %v2253 = vadd.f32 %v1871, %v2243
    %v2254 = vadd.f32 %v1872, %v2248
    %v2255 = vrot.slane %v2251, 6
    %v2256 = vrot.slane %v2252, 6
    %v2257 = vrot.slane %v2253, 6
    %v2258 = vrot.slane %v2254, 6
    %v2259 = vsel %vm1111, %v2257, %v2258
    %v2260 = vsel %vm1111, %v2256, %v2257
    %v2261 = vsel %vm1111, %v2255, %v2256
    %v2262 = vsel %vm1111, %v2258, %v2255
    %v2263 = vsel %vm718, %v2262, 0.0
    %v2264 = vsel %vm719, %v2261, 0.0
    %v2265 = vsel %vm720, %v2260, 0.0
    %v2266 = vsel %vm721, %v2259, 0.0
    %s2267 = scalar_lea.vmem [#allocation11], 128
    %v2268 = vld [vmem:[%s2267] sm:$0xff]
    %v2269 = vld [vmem:[%s2267 + $0x8] sm:$0xff]
    %v2270 = vld [vmem:[%s2267 + $0x10] sm:$0xff]
    %v2271 = vld [vmem:[%s2267 + $0x18] sm:$0xff]
    %s2272 = scalar_lea.vmem [#allocation13], 128
    %v2273 = vld [vmem:[%s2272] sm:$0xff]
    %v2274 = vld [vmem:[%s2272 + $0x8] sm:$0xff]
    %v2275 = vld [vmem:[%s2272 + $0x10] sm:$0xff]
    %v2276 = vld [vmem:[%s2272 + $0x18] sm:$0xff]
    %v2278 = vsel %vm246, %v2251, 0
    %v2281 = vsel %vm246, %v2252, 0
    %v2284 = vsel %vm246, %v2253, 0
    %v2287 = vsel %vm246, %v2254, 0
    %2289 = vmatprep.subr.mxu0 0.0
    %2290 = vmatpush1.msra.mxu0 %v2273
    %2291 = vmatprep.subr.mxu0 0.0
    %2292 = vmatpush1.msra.mxu0 %v2274
    %2293 = vmatprep.subr.mxu0 0.0
    %2294 = vmatpush1.msra.mxu0 %v2275
    %2295 = vmatprep.subr.mxu0 0.0
    %2296 = vmatpush1.msra.mxu0 %v2276
    %2297 = vmatprep.subr.mxu0 0.0
    %2298 = vmatpush1.msra.mxu0 0.0
    %2299 = vmatprep.subr.mxu0 0.0
    %2300 = vmatpush1.msra.mxu0 0.0
    %2301 = vmatprep.subr.mxu0 0.0
    %2302 = vmatpush1.msra.mxu0 0.0
    %2303 = vmatprep.subr.mxu0 0.0
    %2304 = vmatpush1.msra.mxu0 0.0
    %2305 = vmatprep.subr.mxu0 0.0
    %2306 = vmatpush1.msra.mxu0 0.0
    %2307 = vmatprep.subr.mxu0 0.0
    %2308 = vmatpush1.msra.mxu0 0.0
    %2309 = vmatprep.subr.mxu0 0.0
    %2310 = vmatpush1.msra.mxu0 0.0
    %2311 = vmatprep.subr.mxu0 0.0
    %2312 = vmatpush1.msra.mxu0 0.0
    %2313 = vmatprep.subr.mxu0 0.0
    %2314 = vmatpush1.msra.mxu0 0.0
    %2315 = vmatprep.subr.mxu0 0.0
    %2316 = vmatpush1.msra.mxu0 0.0
    %2317 = vmatprep.subr.mxu0 0.0
    %2318 = vmatpush1.msra.mxu0 0.0
    %2319 = vmatprep.subr.mxu0 0.0
    %2320 = vmatpush1.msra.mxu0 0.0
    %2321 = vmatprep.subr.mxu0 0.0
    %2322 = vmatpush1.msra.mxu0 0.0
    %2323 = vmatprep.subr.mxu0 0.0
    %2324 = vmatpush1.msra.mxu0 0.0
    %2325 = vmatprep.subr.mxu0 0.0
    %2326 = vmatpush1.msra.mxu0 0.0
    %2327 = vmatprep.subr.mxu0 0.0
    %2328 = vmatpush1.msra.mxu0 0.0
    %2329 = vmatprep.subr.mxu0 0.0
    %2330 = vmatpush1.msra.mxu0 0.0
    %2331 = vmatprep.subr.mxu0 0.0
    %2332 = vmatpush1.msra.mxu0 0.0
    %2333 = vmatprep.subr.mxu0 0.0
    %2334 = vmatpush1.msra.mxu0 0.0
    %2335 = vmatprep.subr.mxu0 0.0
    %2336 = vmatpush1.msra.mxu0 0.0
    %2337 = vmatprep.subr.mxu0 0.0
    %2338 = vmatpush1.msra.mxu0 0.0
    %2339 = vmatprep.subr.mxu0 0.0
    %2340 = vmatpush1.msra.mxu0 0.0
    %2341 = vmatprep.subr.mxu0 0.0
    %2342 = vmatpush1.msra.mxu0 0.0
    %2343 = vmatprep.subr.mxu0 0.0
    %2344 = vmatpush1.msra.mxu0 0.0
    %2345 = vmatprep.subr.mxu0 0.0
    %2346 = vmatpush1.msra.mxu0 0.0
    %2347 = vmatprep.subr.mxu0 0.0
    %2348 = vmatpush1.msra.mxu0 0.0
    %2349 = vmatprep.subr.mxu0 0.0
    %2350 = vmatpush1.msra.mxu0 0.0
    %2351 = vmatprep.subr.mxu0 0.0
    %2352 = vmatpush1.msra.mxu0 0.0
    %2353 = vmatprep.mubr.f32.mxu0 0.0
    %2354 = vmatmul.mubr.f32.gmra.mrb[0].mxu0 %v2278
    %v2355 = vpop.f32.mrb[0].mxu0
    %v2356 = vadd.f32 0.0, %v2355
    %v2357 = vpop.f32.mrb[0].mxu0
    %2358 = vmatprep.mubr.f32.mxu0 0.0
    %2359 = vmatmul.mubr.f32.gmra.mrb[0].mxu0 %v2281
    %v2360 = vpop.f32.mrb[0].mxu0
    %v2361 = vadd.f32 0.0, %v2360
    %v2362 = vpop.f32.mrb[0].mxu0
    %2363 = vmatprep.mubr.f32.mxu0 0.0
    %2364 = vmatmul.mubr.f32.gmra.mrb[0].mxu0 %v2284
    %v2365 = vpop.f32.mrb[0].mxu0
    %v2366 = vadd.f32 0.0, %v2365
    %v2367 = vpop.f32.mrb[0].mxu0
    %2368 = vmatprep.mubr.f32.mxu0 0.0
    %2369 = vmatmul.mubr.f32.gmra.mrb[0].mxu0 %v2287
    %v2370 = vpop.f32.mrb[0].mxu0
    %v2371 = vadd.f32 0.0, %v2370
    %v2372 = vpop.f32.mrb[0].mxu0
    %2373 = vdwg.mxu0
    %v2375 = vsel %vm246, %v2263, 0
    %v2378 = vsel %vm246, %v2264, 0
    %v2381 = vsel %vm246, %v2265, 0
    %v2384 = vsel %vm246, %v2266, 0
    %2386 = vmatprep.subr.mxu0 0.0
    %2387 = vmatpush1.msra.mxu0 %v2268
    %2388 = vmatprep.subr.mxu0 0.0
    %2389 = vmatpush1.msra.mxu0 %v2269
    %2390 = vmatprep.subr.mxu0 0.0
    %2391 = vmatpush1.msra.mxu0 %v2270
    %2392 = vmatprep.subr.mxu0 0.0
    %2393 = vmatpush1.msra.mxu0 %v2271
    %2394 = vmatprep.subr.mxu0 0.0
    %2395 = vmatpush1.msra.mxu0 0.0
    %2396 = vmatprep.subr.mxu0 0.0
    %2397 = vmatpush1.msra.mxu0 0.0
    %2398 = vmatprep.subr.mxu0 0.0
    %2399 = vmatpush1.msra.mxu0 0.0
    %2400 = vmatprep.subr.mxu0 0.0
    %2401 = vmatpush1.msra.mxu0 0.0
    %2402 = vmatprep.subr.mxu0 0.0
    %2403 = vmatpush1.msra.mxu0 0.0
    %2404 = vmatprep.subr.mxu0 0.0
    %2405 = vmatpush1.msra.mxu0 0.0
    %2406 = vmatprep.subr.mxu0 0.0
    %2407 = vmatpush1.msra.mxu0 0.0
    %2408 = vmatprep.subr.mxu0 0.0
    %2409 = vmatpush1.msra.mxu0 0.0
    %2410 = vmatprep.subr.mxu0 0.0
    %2411 = vmatpush1.msra.mxu0 0.0
    %2412 = vmatprep.subr.mxu0 0.0
    %2413 = vmatpush1.msra.mxu0 0.0
    %2414 = vmatprep.subr.mxu0 0.0
    %2415 = vmatpush1.msra.mxu0 0.0
    %2416 = vmatprep.subr.mxu0 0.0
    %2417 = vmatpush1.msra.mxu0 0.0
    %2418 = vmatprep.subr.mxu0 0.0
    %2419 = vmatpush1.msra.mxu0 0.0
    %2420 = vmatprep.subr.mxu0 0.0
    %2421 = vmatpush1.msra.mxu0 0.0
    %2422 = vmatprep.subr.mxu0 0.0
    %2423 = vmatpush1.msra.mxu0 0.0
    %2424 = vmatprep.subr.mxu0 0.0
    %2425 = vmatpush1.msra.mxu0 0.0
    %2426 = vmatprep.subr.mxu0 0.0
    %2427 = vmatpush1.msra.mxu0 0.0
    %2428 = vmatprep.subr.mxu0 0.0
    %2429 = vmatpush1.msra.mxu0 0.0
    %2430 = vmatprep.subr.mxu0 0.0
    %2431 = vmatpush1.msra.mxu0 0.0
    %2432 = vmatprep.subr.mxu0 0.0
    %2433 = vmatpush1.msra.mxu0 0.0
    %2434 = vmatprep.subr.mxu0 0.0
    %2435 = vmatpush1.msra.mxu0 0.0
    %2436 = vmatprep.subr.mxu0 0.0
    %2437 = vmatpush1.msra.mxu0 0.0
    %2438 = vmatprep.subr.mxu0 0.0
    %2439 = vmatpush1.msra.mxu0 0.0
    %2440 = vmatprep.subr.mxu0 0.0
    %2441 = vmatpush1.msra.mxu0 0.0
    %2442 = vmatprep.subr.mxu0 0.0
    %2443 = vmatpush1.msra.mxu0 0.0
    %2444 = vmatprep.subr.mxu0 0.0
    %2445 = vmatpush1.msra.mxu0 0.0
    %2446 = vmatprep.subr.mxu0 0.0
    %2447 = vmatpush1.msra.mxu0 0.0
    %2448 = vmatprep.subr.mxu0 0.0
    %2449 = vmatpush1.msra.mxu0 0.0
    %2450 = vmatprep.mubr.f32.mxu0 0.0
    %2451 = vmatmul.mubr.f32.gmra.mrb[0].mxu0 %v2375
    %v2452 = vpop.f32.mrb[0].mxu0
    %v2453 = vadd.f32 %v2356, %v2452
    %v2454 = vpop.f32.mrb[0].mxu0
    %2455 = vmatprep.mubr.f32.mxu0 0.0
    %2456 = vmatmul.mubr.f32.gmra.mrb[0].mxu0 %v2378
    %v2457 = vpop.f32.mrb[0].mxu0
    %v2458 = vadd.f32 %v2361, %v2457
    %v2459 = vpop.f32.mrb[0].mxu0
    %2460 = vmatprep.mubr.f32.mxu0 0.0
    %2461 = vmatmul.mubr.f32.gmra.mrb[0].mxu0 %v2381
    %v2462 = vpop.f32.mrb[0].mxu0
    %v2463 = vadd.f32 %v2366, %v2462
    %v2464 = vpop.f32.mrb[0].mxu0
    %2465 = vmatprep.mubr.f32.mxu0 0.0
    %2466 = vmatmul.mubr.f32.gmra.mrb[0].mxu0 %v2384
    %v2467 = vpop.f32.mrb[0].mxu0
    %v2468 = vadd.f32 %v2371, %v2467
    %v2469 = vpop.f32.mrb[0].mxu0
    %2470 = vdwg.mxu0
    %v2471 = vadd.f32 %v2453, %v676
    %v2472 = vadd.f32 %v2458, %v682
    %v2473 = vadd.f32 %v2463, %v688
    %v2474 = vadd.f32 %v2468, %v694
    %v2475 = vxor.u32 %v2471, 2147483648
    %v2476 = vxor.u32 %v2472, 2147483648
    %v2477 = vxor.u32 %v2473, 2147483648
    %v2478 = vxor.u32 %v2474, 2147483648
    %v2479 = vmul.f32 %v2475, 1.442695
    %v2480 = vpow.pop %v2479
    %v2481 = vmul.f32 %v2476, 1.442695
    %v2482 = vpow.pop %v2481
    %v2483 = vmul.f32 %v2477, 1.442695
    %v2484 = vpow.pop %v2483
    %v2485 = vmul.f32 %v2478, 1.442695
    %v2486 = vpow.pop %v2485
    %v2487 = vadd.f32 %v2480, 1.0
    %v2488 = vadd.f32 %v2482, 1.0
    %v2489 = vadd.f32 %v2484, 1.0
    %v2490 = vadd.f32 %v2486, 1.0
    %v2491 = vrcp.pop %v2487
    %v2492 = vmul.f32 1.0, %v2491
    %v2493 = vrcp.pop %v2488
    %v2494 = vmul.f32 1.0, %v2493
    %v2495 = vrcp.pop %v2489
    %v2496 = vmul.f32 1.0, %v2495
    %v2497 = vrcp.pop %v2490
    %v2498 = vmul.f32 1.0, %v2497
    %v2499 = vtanh.pop %v2471
    %v2500 = vtanh.pop %v2472
    %v2501 = vtanh.pop %v2473
    %v2502 = vtanh.pop %v2474
    %2507 = vrot.lane.b32.xlu0 %v2499, 96
    %v2508 = vpop.permute.xlu0 %2507
    %2509 = vrot.lane.b32.xlu0 %v2500, 96
    %v2510 = vpop.permute.xlu0 %2509
    %2511 = vrot.lane.b32.xlu0 %v2501, 96
    %v2512 = vpop.permute.xlu0 %2511
    %2513 = vrot.lane.b32.xlu0 %v2502, 96
    %v2514 = vpop.permute.xlu0 %2513
    %v2519 = vmul.f32 %v2492, %v2508
    %v2520 = vmul.f32 %v2494, %v2510
    %v2521 = vmul.f32 %v2496, %v2512
    %v2522 = vmul.f32 %v2498, %v2514
    %s2523 = scalar_lea.vmem [#allocation14], 128
    %v2524 = vld [vmem:[%s2523] sm:$0xff]
    %v2525 = vld [vmem:[%s2523 + $0x8] sm:$0xff]
    %v2526 = vld [vmem:[%s2523 + $0x10] sm:$0xff]
    %v2527 = vld [vmem:[%s2523 + $0x18] sm:$0xff]
    %s2528 = scalar_lea.vmem %s12, 4
    %v2529 = vld [vmem:[%s2528] sm:$0x1]
    %v2531 = vlaneseq
    %v2532 = vshrl.u32 %v2531, 7
    %v2533 = vsub.s32 0, %v2532
    %v2534 = vrot.slane %v2529, %v2533
    %v2537 = vsel %vm246, %v2519, 0
    %v2540 = vsel %vm246, %v2520, 0
    %v2543 = vsel %vm246, %v2521, 0
    %v2546 = vsel %vm246, %v2522, 0
    %2548 = vmatprep.subr.mxu0 0.0
    %2549 = vmatpush1.msra.mxu0 %v2524
    %2550 = vmatprep.subr.mxu0 0.0
    %2551 = vmatpush1.msra.mxu0 %v2525
    %2552 = vmatprep.subr.mxu0 0.0
    %2553 = vmatpush1.msra.mxu0 %v2526
    %2554 = vmatprep.subr.mxu0 0.0
    %2555 = vmatpush1.msra.mxu0 %v2527
    %2556 = vmatprep.subr.mxu0 0.0
    %2557 = vmatpush1.msra.mxu0 0.0
    %2558 = vmatprep.subr.mxu0 0.0
    %2559 = vmatpush1.msra.mxu0 0.0
    %2560 = vmatprep.subr.mxu0 0.0
    %2561 = vmatpush1.msra.mxu0 0.0
    %2562 = vmatprep.subr.mxu0 0.0
    %2563 = vmatpush1.msra.mxu0 0.0
    %2564 = vmatprep.subr.mxu0 0.0
    %2565 = vmatpush1.msra.mxu0 0.0
    %2566 = vmatprep.subr.mxu0 0.0
    %2567 = vmatpush1.msra.mxu0 0.0
    %2568 = vmatprep.subr.mxu0 0.0
    %2569 = vmatpush1.msra.mxu0 0.0
    %2570 = vmatprep.subr.mxu0 0.0
    %2571 = vmatpush1.msra.mxu0 0.0
    %2572 = vmatprep.subr.mxu0 0.0
    %2573 = vmatpush1.msra.mxu0 0.0
    %2574 = vmatprep.subr.mxu0 0.0
    %2575 = vmatpush1.msra.mxu0 0.0
    %2576 = vmatprep.subr.mxu0 0.0
    %2577 = vmatpush1.msra.mxu0 0.0
    %2578 = vmatprep.subr.mxu0 0.0
    %2579 = vmatpush1.msra.mxu0 0.0
    %2580 = vmatprep.subr.mxu0 0.0
    %2581 = vmatpush1.msra.mxu0 0.0
    %2582 = vmatprep.subr.mxu0 0.0
    %2583 = vmatpush1.msra.mxu0 0.0
    %2584 = vmatprep.subr.mxu0 0.0
    %2585 = vmatpush1.msra.mxu0 0.0
    %2586 = vmatprep.subr.mxu0 0.0
    %2587 = vmatpush1.msra.mxu0 0.0
    %2588 = vmatprep.subr.mxu0 0.0
    %2589 = vmatpush1.msra.mxu0 0.0
    %2590 = vmatprep.subr.mxu0 0.0
    %2591 = vmatpush1.msra.mxu0 0.0
    %2592 = vmatprep.subr.mxu0 0.0
    %2593 = vmatpush1.msra.mxu0 0.0
    %2594 = vmatprep.subr.mxu0 0.0
    %2595 = vmatpush1.msra.mxu0 0.0
    %2596 = vmatprep.subr.mxu0 0.0
    %2597 = vmatpush1.msra.mxu0 0.0
    %2598 = vmatprep.subr.mxu0 0.0
    %2599 = vmatpush1.msra.mxu0 0.0
    %2600 = vmatprep.subr.mxu0 0.0
    %2601 = vmatpush1.msra.mxu0 0.0
    %2602 = vmatprep.subr.mxu0 0.0
    %2603 = vmatpush1.msra.mxu0 0.0
    %2604 = vmatprep.subr.mxu0 0.0
    %2605 = vmatpush1.msra.mxu0 0.0
    %2606 = vmatprep.subr.mxu0 0.0
    %2607 = vmatpush1.msra.mxu0 0.0
    %2608 = vmatprep.subr.mxu0 0.0
    %2609 = vmatpush1.msra.mxu0 0.0
    %2610 = vmatprep.subr.mxu0 0.0
    %2611 = vmatpush1.msra.mxu0 0.0
    %2612 = vmatprep.mubr.f32.mxu0 0.0
    %2613 = vmatmul.mubr.f32.gmra.mrb[0].mxu0 %v2537
    %v2614 = vpop.f32.mrb[0].mxu0
    %v2615 = vadd.f32 %v2534, %v2614
    %v2616 = vpop.f32.mrb[0].mxu0
    %2617 = vmatprep.mubr.f32.mxu0 0.0
    %2618 = vmatmul.mubr.f32.gmra.mrb[0].mxu0 %v2540
    %v2619 = vpop.f32.mrb[0].mxu0
    %v2620 = vadd.f32 %v2534, %v2619
    %v2621 = vpop.f32.mrb[0].mxu0
    %2622 = vmatprep.mubr.f32.mxu0 0.0
    %2623 = vmatmul.mubr.f32.gmra.mrb[0].mxu0 %v2543
    %v2624 = vpop.f32.mrb[0].mxu0
    %v2625 = vadd.f32 %v2534, %v2624
    %v2626 = vpop.f32.mrb[0].mxu0
    %2627 = vmatprep.mubr.f32.mxu0 0.0
    %2628 = vmatmul.mubr.f32.gmra.mrb[0].mxu0 %v2546
    %v2629 = vpop.f32.mrb[0].mxu0
    %v2630 = vadd.f32 %v2534, %v2629
    %v2631 = vpop.f32.mrb[0].mxu0
    %2632 = vdwg.mxu0
    %v2633 = vadd.f32 %v2251, %v2615
    %v2634 = vadd.f32 %v2252, %v2620
    %v2635 = vadd.f32 %v2253, %v2625
    %v2636 = vadd.f32 %v2254, %v2630
    %v2637 = vrot.slane %v2633, 4
    %v2638 = vrot.slane %v2634, 4
    %v2639 = vrot.slane %v2635, 4
    %v2640 = vrot.slane %v2636, 4
    %v2641 = vsel %vm1494, %v2639, %v2640
    %v2642 = vsel %vm1494, %v2638, %v2639
    %v2643 = vsel %vm1494, %v2637, %v2638
    %v2644 = vsel %vm1494, %v2640, %v2637
    %v2645 = vsel %vm722, %v2644, 0.0
    %v2646 = vsel %vm723, %v2643, 0.0
    %v2647 = vsel %vm724, %v2642, 0.0
    %v2648 = vsel %vm725, %v2641, 0.0
    %s2649 = scalar_lea.vmem [#allocation11], 160
    %v2650 = vld [vmem:[%s2649] sm:$0xff]
    %v2651 = vld [vmem:[%s2649 + $0x8] sm:$0xff]
    %v2652 = vld [vmem:[%s2649 + $0x10] sm:$0xff]
    %v2653 = vld [vmem:[%s2649 + $0x18] sm:$0xff]
    %s2654 = scalar_lea.vmem [#allocation13], 160
    %v2655 = vld [vmem:[%s2654] sm:$0xff]
    %v2656 = vld [vmem:[%s2654 + $0x8] sm:$0xff]
    %v2657 = vld [vmem:[%s2654 + $0x10] sm:$0xff]
    %v2658 = vld [vmem:[%s2654 + $0x18] sm:$0xff]
    %v2660 = vsel %vm246, %v2633, 0
    %v2663 = vsel %vm246, %v2634, 0
    %v2666 = vsel %vm246, %v2635, 0
    %v2669 = vsel %vm246, %v2636, 0
    %2671 = vmatprep.subr.mxu0 0.0
    %2672 = vmatpush1.msra.mxu0 %v2655
    %2673 = vmatprep.subr.mxu0 0.0
    %2674 = vmatpush1.msra.mxu0 %v2656
    %2675 = vmatprep.subr.mxu0 0.0
    %2676 = vmatpush1.msra.mxu0 %v2657
    %2677 = vmatprep.subr.mxu0 0.0
    %2678 = vmatpush1.msra.mxu0 %v2658
    %2679 = vmatprep.subr.mxu0 0.0
    %2680 = vmatpush1.msra.mxu0 0.0
    %2681 = vmatprep.subr.mxu0 0.0
    %2682 = vmatpush1.msra.mxu0 0.0
    %2683 = vmatprep.subr.mxu0 0.0
    %2684 = vmatpush1.msra.mxu0 0.0
    %2685 = vmatprep.subr.mxu0 0.0
    %2686 = vmatpush1.msra.mxu0 0.0
    %2687 = vmatprep.subr.mxu0 0.0
    %2688 = vmatpush1.msra.mxu0 0.0
    %2689 = vmatprep.subr.mxu0 0.0
    %2690 = vmatpush1.msra.mxu0 0.0
    %2691 = vmatprep.subr.mxu0 0.0
    %2692 = vmatpush1.msra.mxu0 0.0
    %2693 = vmatprep.subr.mxu0 0.0
    %2694 = vmatpush1.msra.mxu0 0.0
    %2695 = vmatprep.subr.mxu0 0.0
    %2696 = vmatpush1.msra.mxu0 0.0
    %2697 = vmatprep.subr.mxu0 0.0
    %2698 = vmatpush1.msra.mxu0 0.0
    %2699 = vmatprep.subr.mxu0 0.0
    %2700 = vmatpush1.msra.mxu0 0.0
    %2701 = vmatprep.subr.mxu0 0.0
    %2702 = vmatpush1.msra.mxu0 0.0
    %2703 = vmatprep.subr.mxu0 0.0
    %2704 = vmatpush1.msra.mxu0 0.0
    %2705 = vmatprep.subr.mxu0 0.0
    %2706 = vmatpush1.msra.mxu0 0.0
    %2707 = vmatprep.subr.mxu0 0.0
    %2708 = vmatpush1.msra.mxu0 0.0
    %2709 = vmatprep.subr.mxu0 0.0
    %2710 = vmatpush1.msra.mxu0 0.0
    %2711 = vmatprep.subr.mxu0 0.0
    %2712 = vmatpush1.msra.mxu0 0.0
    %2713 = vmatprep.subr.mxu0 0.0
    %2714 = vmatpush1.msra.mxu0 0.0
    %2715 = vmatprep.subr.mxu0 0.0
    %2716 = vmatpush1.msra.mxu0 0.0
    %2717 = vmatprep.subr.mxu0 0.0
    %2718 = vmatpush1.msra.mxu0 0.0
    %2719 = vmatprep.subr.mxu0 0.0
    %2720 = vmatpush1.msra.mxu0 0.0
    %2721 = vmatprep.subr.mxu0 0.0
    %2722 = vmatpush1.msra.mxu0 0.0
    %2723 = vmatprep.subr.mxu0 0.0
    %2724 = vmatpush1.msra.mxu0 0.0
    %2725 = vmatprep.subr.mxu0 0.0
    %2726 = vmatpush1.msra.mxu0 0.0
    %2727 = vmatprep.subr.mxu0 0.0
    %2728 = vmatpush1.msra.mxu0 0.0
    %2729 = vmatprep.subr.mxu0 0.0
    %2730 = vmatpush1.msra.mxu0 0.0
    %2731 = vmatprep.subr.mxu0 0.0
    %2732 = vmatpush1.msra.mxu0 0.0
    %2733 = vmatprep.subr.mxu0 0.0
    %2734 = vmatpush1.msra.mxu0 0.0
    %2735 = vmatprep.mubr.f32.mxu0 0.0
    %2736 = vmatmul.mubr.f32.gmra.mrb[0].mxu0 %v2660
    %v2737 = vpop.f32.mrb[0].mxu0
    %v2738 = vadd.f32 0.0, %v2737
    %v2739 = vpop.f32.mrb[0].mxu0
    %2740 = vmatprep.mubr.f32.mxu0 0.0
    %2741 = vmatmul.mubr.f32.gmra.mrb[0].mxu0 %v2663
    %v2742 = vpop.f32.mrb[0].mxu0
    %v2743 = vadd.f32 0.0, %v2742
    %v2744 = vpop.f32.mrb[0].mxu0
    %2745 = vmatprep.mubr.f32.mxu0 0.0
    %2746 = vmatmul.mubr.f32.gmra.mrb[0].mxu0 %v2666
    %v2747 = vpop.f32.mrb[0].mxu0
    %v2748 = vadd.f32 0.0, %v2747
    %v2749 = vpop.f32.mrb[0].mxu0
    %2750 = vmatprep.mubr.f32.mxu0 0.0
    %2751 = vmatmul.mubr.f32.gmra.mrb[0].mxu0 %v2669
    %v2752 = vpop.f32.mrb[0].mxu0
    %v2753 = vadd.f32 0.0, %v2752
    %v2754 = vpop.f32.mrb[0].mxu0
    %2755 = vdwg.mxu0
    %v2757 = vsel %vm246, %v2645, 0
    %v2760 = vsel %vm246, %v2646, 0
    %v2763 = vsel %vm246, %v2647, 0
    %v2766 = vsel %vm246, %v2648, 0
    %2768 = vmatprep.subr.mxu0 0.0
    %2769 = vmatpush1.msra.mxu0 %v2650
    %2770 = vmatprep.subr.mxu0 0.0
    %2771 = vmatpush1.msra.mxu0 %v2651
    %2772 = vmatprep.subr.mxu0 0.0
    %2773 = vmatpush1.msra.mxu0 %v2652
    %2774 = vmatprep.subr.mxu0 0.0
    %2775 = vmatpush1.msra.mxu0 %v2653
    %2776 = vmatprep.subr.mxu0 0.0
    %2777 = vmatpush1.msra.mxu0 0.0
    %2778 = vmatprep.subr.mxu0 0.0
    %2779 = vmatpush1.msra.mxu0 0.0
    %2780 = vmatprep.subr.mxu0 0.0
    %2781 = vmatpush1.msra.mxu0 0.0
    %2782 = vmatprep.subr.mxu0 0.0
    %2783 = vmatpush1.msra.mxu0 0.0
    %2784 = vmatprep.subr.mxu0 0.0
    %2785 = vmatpush1.msra.mxu0 0.0
    %2786 = vmatprep.subr.mxu0 0.0
    %2787 = vmatpush1.msra.mxu0 0.0
    %2788 = vmatprep.subr.mxu0 0.0
    %2789 = vmatpush1.msra.mxu0 0.0
    %2790 = vmatprep.subr.mxu0 0.0
    %2791 = vmatpush1.msra.mxu0 0.0
    %2792 = vmatprep.subr.mxu0 0.0
    %2793 = vmatpush1.msra.mxu0 0.0
    %2794 = vmatprep.subr.mxu0 0.0
    %2795 = vmatpush1.msra.mxu0 0.0
    %2796 = vmatprep.subr.mxu0 0.0
    %2797 = vmatpush1.msra.mxu0 0.0
    %2798 = vmatprep.subr.mxu0 0.0
    %2799 = vmatpush1.msra.mxu0 0.0
    %2800 = vmatprep.subr.mxu0 0.0
    %2801 = vmatpush1.msra.mxu0 0.0
    %2802 = vmatprep.subr.mxu0 0.0
    %2803 = vmatpush1.msra.mxu0 0.0
    %2804 = vmatprep.subr.mxu0 0.0
    %2805 = vmatpush1.msra.mxu0 0.0
    %2806 = vmatprep.subr.mxu0 0.0
    %2807 = vmatpush1.msra.mxu0 0.0
    %2808 = vmatprep.subr.mxu0 0.0
    %2809 = vmatpush1.msra.mxu0 0.0
    %2810 = vmatprep.subr.mxu0 0.0
    %2811 = vmatpush1.msra.mxu0 0.0
    %2812 = vmatprep.subr.mxu0 0.0
    %2813 = vmatpush1.msra.mxu0 0.0
    %2814 = vmatprep.subr.mxu0 0.0
    %2815 = vmatpush1.msra.mxu0 0.0
    %2816 = vmatprep.subr.mxu0 0.0
    %2817 = vmatpush1.msra.mxu0 0.0
    %2818 = vmatprep.subr.mxu0 0.0
    %2819 = vmatpush1.msra.mxu0 0.0
    %2820 = vmatprep.subr.mxu0 0.0
    %2821 = vmatpush1.msra.mxu0 0.0
    %2822 = vmatprep.subr.mxu0 0.0
    %2823 = vmatpush1.msra.mxu0 0.0
    %2824 = vmatprep.subr.mxu0 0.0
    %2825 = vmatpush1.msra.mxu0 0.0
    %2826 = vmatprep.subr.mxu0 0.0
    %2827 = vmatpush1.msra.mxu0 0.0
    %2828 = vmatprep.subr.mxu0 0.0
    %2829 = vmatpush1.msra.mxu0 0.0
    %2830 = vmatprep.subr.mxu0 0.0
    %2831 = vmatpush1.msra.mxu0 0.0
    %2832 = vmatprep.mubr.f32.mxu0 0.0
    %2833 = vmatmul.mubr.f32.gmra.mrb[0].mxu0 %v2757
    %v2834 = vpop.f32.mrb[0].mxu0
    %v2835 = vadd.f32 %v2738, %v2834
    %v2836 = vpop.f32.mrb[0].mxu0
    %2837 = vmatprep.mubr.f32.mxu0 0.0
    %2838 = vmatmul.mubr.f32.gmra.mrb[0].mxu0 %v2760
    %v2839 = vpop.f32.mrb[0].mxu0
    %v2840 = vadd.f32 %v2743, %v2839
    %v2841 = vpop.f32.mrb[0].mxu0
    %2842 = vmatprep.mubr.f32.mxu0 0.0
    %2843 = vmatmul.mubr.f32.gmra.mrb[0].mxu0 %v2763
    %v2844 = vpop.f32.mrb[0].mxu0
    %v2845 = vadd.f32 %v2748, %v2844
    %v2846 = vpop.f32.mrb[0].mxu0
    %2847 = vmatprep.mubr.f32.mxu0 0.0
    %2848 = vmatmul.mubr.f32.gmra.mrb[0].mxu0 %v2766
    %v2849 = vpop.f32.mrb[0].mxu0
    %v2850 = vadd.f32 %v2753, %v2849
    %v2851 = vpop.f32.mrb[0].mxu0
    %2852 = vdwg.mxu0
    %v2853 = vadd.f32 %v2835, %v678
    %v2854 = vadd.f32 %v2840, %v684
    %v2855 = vadd.f32 %v2845, %v690
    %v2856 = vadd.f32 %v2850, %v696
    %v2857 = vxor.u32 %v2853, 2147483648
    %v2858 = vxor.u32 %v2854, 2147483648
    %v2859 = vxor.u32 %v2855, 2147483648
    %v2860 = vxor.u32 %v2856, 2147483648
    %v2861 = vmul.f32 %v2857, 1.442695
    %v2862 = vpow.pop %v2861
    %v2863 = vmul.f32 %v2858, 1.442695
    %v2864 = vpow.pop %v2863
    %v2865 = vmul.f32 %v2859, 1.442695
    %v2866 = vpow.pop %v2865
    %v2867 = vmul.f32 %v2860, 1.442695
    %v2868 = vpow.pop %v2867
    %v2869 = vadd.f32 %v2862, 1.0
    %v2870 = vadd.f32 %v2864, 1.0
    %v2871 = vadd.f32 %v2866, 1.0
    %v2872 = vadd.f32 %v2868, 1.0
    %v2873 = vrcp.pop %v2869
    %v2874 = vmul.f32 1.0, %v2873
    %v2875 = vrcp.pop %v2870
    %v2876 = vmul.f32 1.0, %v2875
    %v2877 = vrcp.pop %v2871
    %v2878 = vmul.f32 1.0, %v2877
    %v2879 = vrcp.pop %v2872
    %v2880 = vmul.f32 1.0, %v2879
    %v2881 = vtanh.pop %v2853
    %v2882 = vtanh.pop %v2854
    %v2883 = vtanh.pop %v2855
    %v2884 = vtanh.pop %v2856
    %2889 = vrot.lane.b32.xlu0 %v2881, 96
    %v2890 = vpop.permute.xlu0 %2889
    %2891 = vrot.lane.b32.xlu0 %v2882, 96
    %v2892 = vpop.permute.xlu0 %2891
    %2893 = vrot.lane.b32.xlu0 %v2883, 96
    %v2894 = vpop.permute.xlu0 %2893
    %2895 = vrot.lane.b32.xlu0 %v2884, 96
    %v2896 = vpop.permute.xlu0 %2895
    %v2901 = vmul.f32 %v2874, %v2890
    %v2902 = vmul.f32 %v2876, %v2892
    %v2903 = vmul.f32 %v2878, %v2894
    %v2904 = vmul.f32 %v2880, %v2896
    %s2905 = scalar_lea.vmem [#allocation14], 160
    %v2906 = vld [vmem:[%s2905] sm:$0xff]
    %v2907 = vld [vmem:[%s2905 + $0x8] sm:$0xff]
    %v2908 = vld [vmem:[%s2905 + $0x10] sm:$0xff]
    %v2909 = vld [vmem:[%s2905 + $0x18] sm:$0xff]
    %s2910 = scalar_lea.vmem %s12, 5
    %v2911 = vld [vmem:[%s2910] sm:$0x1]
    %v2913 = vlaneseq
    %v2914 = vshrl.u32 %v2913, 7
    %v2915 = vsub.s32 0, %v2914
    %v2916 = vrot.slane %v2911, %v2915
    %v2919 = vsel %vm246, %v2901, 0
    %v2922 = vsel %vm246, %v2902, 0
    %v2925 = vsel %vm246, %v2903, 0
    %v2928 = vsel %vm246, %v2904, 0
    %2930 = vmatprep.subr.mxu0 0.0
    %2931 = vmatpush1.msra.mxu0 %v2906
    %2932 = vmatprep.subr.mxu0 0.0
    %2933 = vmatpush1.msra.mxu0 %v2907
    %2934 = vmatprep.subr.mxu0 0.0
    %2935 = vmatpush1.msra.mxu0 %v2908
    %2936 = vmatprep.subr.mxu0 0.0
    %2937 = vmatpush1.msra.mxu0 %v2909
    %2938 = vmatprep.subr.mxu0 0.0
    %2939 = vmatpush1.msra.mxu0 0.0
    %2940 = vmatprep.subr.mxu0 0.0
    %2941 = vmatpush1.msra.mxu0 0.0
    %2942 = vmatprep.subr.mxu0 0.0
    %2943 = vmatpush1.msra.mxu0 0.0
    %2944 = vmatprep.subr.mxu0 0.0
    %2945 = vmatpush1.msra.mxu0 0.0
    %2946 = vmatprep.subr.mxu0 0.0
    %2947 = vmatpush1.msra.mxu0 0.0
    %2948 = vmatprep.subr.mxu0 0.0
    %2949 = vmatpush1.msra.mxu0 0.0
    %2950 = vmatprep.subr.mxu0 0.0
    %2951 = vmatpush1.msra.mxu0 0.0
    %2952 = vmatprep.subr.mxu0 0.0
    %2953 = vmatpush1.msra.mxu0 0.0
    %2954 = vmatprep.subr.mxu0 0.0
    %2955 = vmatpush1.msra.mxu0 0.0
    %2956 = vmatprep.subr.mxu0 0.0
    %2957 = vmatpush1.msra.mxu0 0.0
    %2958 = vmatprep.subr.mxu0 0.0
    %2959 = vmatpush1.msra.mxu0 0.0
    %2960 = vmatprep.subr.mxu0 0.0
    %2961 = vmatpush1.msra.mxu0 0.0
    %2962 = vmatprep.subr.mxu0 0.0
    %2963 = vmatpush1.msra.mxu0 0.0
    %2964 = vmatprep.subr.mxu0 0.0
    %2965 = vmatpush1.msra.mxu0 0.0
    %2966 = vmatprep.subr.mxu0 0.0
    %2967 = vmatpush1.msra.mxu0 0.0
    %2968 = vmatprep.subr.mxu0 0.0
    %2969 = vmatpush1.msra.mxu0 0.0
    %2970 = vmatprep.subr.mxu0 0.0
    %2971 = vmatpush1.msra.mxu0 0.0
    %2972 = vmatprep.subr.mxu0 0.0
    %2973 = vmatpush1.msra.mxu0 0.0
    %2974 = vmatprep.subr.mxu0 0.0
    %2975 = vmatpush1.msra.mxu0 0.0
    %2976 = vmatprep.subr.mxu0 0.0
    %2977 = vmatpush1.msra.mxu0 0.0
    %2978 = vmatprep.subr.mxu0 0.0
    %2979 = vmatpush1.msra.mxu0 0.0
    %2980 = vmatprep.subr.mxu0 0.0
    %2981 = vmatpush1.msra.mxu0 0.0
    %2982 = vmatprep.subr.mxu0 0.0
    %2983 = vmatpush1.msra.mxu0 0.0
    %2984 = vmatprep.subr.mxu0 0.0
    %2985 = vmatpush1.msra.mxu0 0.0
    %2986 = vmatprep.subr.mxu0 0.0
    %2987 = vmatpush1.msra.mxu0 0.0
    %2988 = vmatprep.subr.mxu0 0.0
    %2989 = vmatpush1.msra.mxu0 0.0
    %2990 = vmatprep.subr.mxu0 0.0
    %2991 = vmatpush1.msra.mxu0 0.0
    %2992 = vmatprep.subr.mxu0 0.0
    %2993 = vmatpush1.msra.mxu0 0.0
    %2994 = vmatprep.mubr.f32.mxu0 0.0
    %2995 = vmatmul.mubr.f32.gmra.mrb[0].mxu0 %v2919
    %v2996 = vpop.f32.mrb[0].mxu0
    %v2997 = vadd.f32 %v2916, %v2996
    %v2998 = vpop.f32.mrb[0].mxu0
    %2999 = vmatprep.mubr.f32.mxu0 0.0
    %3000 = vmatmul.mubr.f32.gmra.mrb[0].mxu0 %v2922
    %v3001 = vpop.f32.mrb[0].mxu0
    %v3002 = vadd.f32 %v2916, %v3001
    %v3003 = vpop.f32.mrb[0].mxu0
    %3004 = vmatprep.mubr.f32.mxu0 0.0
    %3005 = vmatmul.mubr.f32.gmra.mrb[0].mxu0 %v2925
    %v3006 = vpop.f32.mrb[0].mxu0
    %v3007 = vadd.f32 %v2916, %v3006
    %v3008 = vpop.f32.mrb[0].mxu0
    %3009 = vmatprep.mubr.f32.mxu0 0.0
    %3010 = vmatmul.mubr.f32.gmra.mrb[0].mxu0 %v2928
    %v3011 = vpop.f32.mrb[0].mxu0
    %v3012 = vadd.f32 %v2916, %v3011
    %v3013 = vpop.f32.mrb[0].mxu0
    %3014 = vdwg.mxu0
    %v3015 = vadd.f32 %v2633, %v2997
    %v3016 = vadd.f32 %v2634, %v3002
    %v3017 = vadd.f32 %v2635, %v3007
    %v3018 = vadd.f32 %v2636, %v3012
    %v3019 = vmax.f32 %v3015, 0.0
    %v3020 = vmax.f32 %v3016, 0.0
    %v3021 = vmax.f32 %v3017, 0.0
    %v3022 = vmax.f32 %v3018, 0.0
    %v3023 = vld [vmem:[%s13] sm:$0xff]
    %v3024 = vld [vmem:[%s13 + $0x8] sm:$0xff]
    %v3025 = vld [vmem:[%s13 + $0x10] sm:$0xff]
    %v3026 = vld [vmem:[%s13 + $0x18] sm:$0xff]
    %v3027 = vld [vmem:[%s14] sm:$0xf]
    %v3029 = vsel %vm418, %v3027, 0
    %3031 = vmatprep.subr.mxu0 0.0
    %3032 = vmatpush1.msra.mxu0 %v3029
    %3033 = vmatprep.subr.mxu0 0.0
    %3034 = vmatpush1.msra.mxu0 0.0
    %3035 = vmatprep.subr.mxu0 0.0
    %3036 = vmatpush1.msra.mxu0 0.0
    %3037 = vmatprep.subr.mxu0 0.0
    %3038 = vmatpush1.msra.mxu0 0.0
    %3039 = vmatprep.subr.mxu0 0.0
    %3040 = vmatpush1.msra.mxu0 0.0
    %3041 = vmatprep.subr.mxu0 0.0
    %3042 = vmatpush1.msra.mxu0 0.0
    %3043 = vmatprep.subr.mxu0 0.0
    %3044 = vmatpush1.msra.mxu0 0.0
    %3045 = vmatprep.subr.mxu0 0.0
    %3046 = vmatpush1.msra.mxu0 0.0
    %3047 = vmatprep.subr.mxu0 0.0
    %3048 = vmatpush1.msra.mxu0 0.0
    %3049 = vmatprep.subr.mxu0 0.0
    %3050 = vmatpush1.msra.mxu0 0.0
    %3051 = vmatprep.subr.mxu0 0.0
    %3052 = vmatpush1.msra.mxu0 0.0
    %3053 = vmatprep.subr.mxu0 0.0
    %3054 = vmatpush1.msra.mxu0 0.0
    %3055 = vmatprep.subr.mxu0 0.0
    %3056 = vmatpush1.msra.mxu0 0.0
    %3057 = vmatprep.subr.mxu0 0.0
    %3058 = vmatpush1.msra.mxu0 0.0
    %3059 = vmatprep.subr.mxu0 0.0
    %3060 = vmatpush1.msra.mxu0 0.0
    %3061 = vmatprep.subr.mxu0 0.0
    %3062 = vmatpush1.msra.mxu0 0.0
    %3063 = vmatprep.subr.mxu0 0.0
    %3064 = vmatpush1.msra.mxu0 0.0
    %3065 = vmatprep.subr.mxu0 0.0
    %3066 = vmatpush1.msra.mxu0 0.0
    %3067 = vmatprep.subr.mxu0 0.0
    %3068 = vmatpush1.msra.mxu0 0.0
    %3069 = vmatprep.subr.mxu0 0.0
    %3070 = vmatpush1.msra.mxu0 0.0
    %3071 = vmatprep.subr.mxu0 0.0
    %3072 = vmatpush1.msra.mxu0 0.0
    %3073 = vmatprep.subr.mxu0 0.0
    %3074 = vmatpush1.msra.mxu0 0.0
    %3075 = vmatprep.subr.mxu0 0.0
    %3076 = vmatpush1.msra.mxu0 0.0
    %3077 = vmatprep.subr.mxu0 0.0
    %3078 = vmatpush1.msra.mxu0 0.0
    %3079 = vmatprep.subr.mxu0 0.0
    %3080 = vmatpush1.msra.mxu0 0.0
    %3081 = vmatprep.subr.mxu0 0.0
    %3082 = vmatpush1.msra.mxu0 0.0
    %3083 = vmatprep.subr.mxu0 0.0
    %3084 = vmatpush1.msra.mxu0 0.0
    %3085 = vmatprep.subr.mxu0 0.0
    %3086 = vmatpush1.msra.mxu0 0.0
    %3087 = vmatprep.subr.mxu0 0.0
    %3088 = vmatpush1.msra.mxu0 0.0
    %3089 = vmatprep.subr.mxu0 0.0
    %3090 = vmatpush1.msra.mxu0 0.0
    %3091 = vmatprep.subr.mxu0 0.0
    %3092 = vmatpush1.msra.mxu0 0.0
    %3093 = vmatprep.subr.mxu0 0.0
    %3094 = vmatpush1.msra.mxu0 0.0
    %3095 = vmatprep.mubr.f32.mxu0 0.0
    %3096 = vmatmul.mubr.f32.gmra.mrb[0].mxu0 %v407
    %v3097 = vpop.f32.mrb[0].mxu0
    %v3098 = vadd.f32 0.0, %v3097
    %v3099 = vpop.f32.mrb[0].mxu0
    %3100 = vmatprep.mubr.f32.mxu0 0.0
    %3101 = vmatmul.mubr.f32.gmra.mrb[0].mxu0 %v410
    %v3102 = vpop.f32.mrb[0].mxu0
    %v3103 = vadd.f32 0.0, %v3102
    %v3104 = vpop.f32.mrb[0].mxu0
    %3105 = vmatprep.mubr.f32.mxu0 0.0
    %3106 = vmatmul.mubr.f32.gmra.mrb[0].mxu0 %v413
    %v3107 = vpop.f32.mrb[0].mxu0
    %v3108 = vadd.f32 0.0, %v3107
    %v3109 = vpop.f32.mrb[0].mxu0
    %3110 = vmatprep.mubr.f32.mxu0 0.0
    %3111 = vmatmul.mubr.f32.gmra.mrb[0].mxu0 %v416
    %v3112 = vpop.f32.mrb[0].mxu0
    %v3113 = vadd.f32 0.0, %v3112
    %v3114 = vpop.f32.mrb[0].mxu0
    %3115 = vdwg.mxu0
    %3120 = vrot.lane.b32.xlu0 %v3019, 96
    %v3121 = vpop.permute.xlu0 %3120
    %3122 = vrot.lane.b32.xlu0 %v3020, 96
    %v3123 = vpop.permute.xlu0 %3122
    %3124 = vrot.lane.b32.xlu0 %v3021, 96
    %v3125 = vpop.permute.xlu0 %3124
    %3126 = vrot.lane.b32.xlu0 %v3022, 96
    %v3127 = vpop.permute.xlu0 %3126
    %v3128 = vsel %vm246, %v3121, 0
    %v3130 = vsel %vm246, %v3123, 0
    %v3132 = vsel %vm246, %v3125, 0
    %v3134 = vsel %vm246, %v3127, 0
    %3136 = vmatprep.subr.mxu0 0.0
    %3137 = vmatpush1.msra.mxu0 %v3023
    %3138 = vmatprep.subr.mxu0 0.0
    %3139 = vmatpush1.msra.mxu0 %v3024
    %3140 = vmatprep.subr.mxu0 0.0
    %3141 = vmatpush1.msra.mxu0 %v3025
    %3142 = vmatprep.subr.mxu0 0.0
    %3143 = vmatpush1.msra.mxu0 %v3026
    %3144 = vmatprep.subr.mxu0 0.0
    %3145 = vmatpush1.msra.mxu0 0.0
    %3146 = vmatprep.subr.mxu0 0.0
    %3147 = vmatpush1.msra.mxu0 0.0
    %3148 = vmatprep.subr.mxu0 0.0
    %3149 = vmatpush1.msra.mxu0 0.0
    %3150 = vmatprep.subr.mxu0 0.0
    %3151 = vmatpush1.msra.mxu0 0.0
    %3152 = vmatprep.subr.mxu0 0.0
    %3153 = vmatpush1.msra.mxu0 0.0
    %3154 = vmatprep.subr.mxu0 0.0
    %3155 = vmatpush1.msra.mxu0 0.0
    %3156 = vmatprep.subr.mxu0 0.0
    %3157 = vmatpush1.msra.mxu0 0.0
    %3158 = vmatprep.subr.mxu0 0.0
    %3159 = vmatpush1.msra.mxu0 0.0
    %3160 = vmatprep.subr.mxu0 0.0
    %3161 = vmatpush1.msra.mxu0 0.0
    %3162 = vmatprep.subr.mxu0 0.0
    %3163 = vmatpush1.msra.mxu0 0.0
    %3164 = vmatprep.subr.mxu0 0.0
    %3165 = vmatpush1.msra.mxu0 0.0
    %3166 = vmatprep.subr.mxu0 0.0
    %3167 = vmatpush1.msra.mxu0 0.0
    %3168 = vmatprep.subr.mxu0 0.0
    %3169 = vmatpush1.msra.mxu0 0.0
    %3170 = vmatprep.subr.mxu0 0.0
    %3171 = vmatpush1.msra.mxu0 0.0
    %3172 = vmatprep.subr.mxu0 0.0
    %3173 = vmatpush1.msra.mxu0 0.0
    %3174 = vmatprep.subr.mxu0 0.0
    %3175 = vmatpush1.msra.mxu0 0.0
    %3176 = vmatprep.subr.mxu0 0.0
    %3177 = vmatpush1.msra.mxu0 0.0
    %3178 = vmatprep.subr.mxu0 0.0
    %3179 = vmatpush1.msra.mxu0 0.0
    %3180 = vmatprep.subr.mxu0 0.0
    %3181 = vmatpush1.msra.mxu0 0.0
    %3182 = vmatprep.subr.mxu0 0.0
    %3183 = vmatpush1.msra.mxu0 0.0
    %3184 = vmatprep.subr.mxu0 0.0
    %3185 = vmatpush1.msra.mxu0 0.0
    %3186 = vmatprep.subr.mxu0 0.0
    %3187 = vmatpush1.msra.mxu0 0.0
    %3188 = vmatprep.subr.mxu0 0.0
    %3189 = vmatpush1.msra.mxu0 0.0
    %3190 = vmatprep.subr.mxu0 0.0
    %3191 = vmatpush1.msra.mxu0 0.0
    %3192 = vmatprep.subr.mxu0 0.0
    %3193 = vmatpush1.msra.mxu0 0.0
    %3194 = vmatprep.subr.mxu0 0.0
    %3195 = vmatpush1.msra.mxu0 0.0
    %3196 = vmatprep.subr.mxu0 0.0
    %3197 = vmatpush1.msra.mxu0 0.0
    %3198 = vmatprep.subr.mxu0 0.0
    %3199 = vmatpush1.msra.mxu0 0.0
    %3200 = vmatprep.mubr.f32.mxu0 0.0
    %3201 = vmatmul.mubr.f32.gmra.mrb[0].mxu0 %v3128
    %v3202 = vpop.f32.mrb[0].mxu0
    %v3203 = vadd.f32 %v3098, %v3202
    %v3204 = vpop.f32.mrb[0].mxu0
    %3205 = vmatprep.mubr.f32.mxu0 0.0
    %3206 = vmatmul.mubr.f32.gmra.mrb[0].mxu0 %v3130
    %v3207 = vpop.f32.mrb[0].mxu0
    %v3208 = vadd.f32 %v3103, %v3207
    %v3209 = vpop.f32.mrb[0].mxu0
    %3210 = vmatprep.mubr.f32.mxu0 0.0
    %3211 = vmatmul.mubr.f32.gmra.mrb[0].mxu0 %v3132
    %v3212 = vpop.f32.mrb[0].mxu0
    %v3213 = vadd.f32 %v3108, %v3212
    %v3214 = vpop.f32.mrb[0].mxu0
    %3215 = vmatprep.mubr.f32.mxu0 0.0
    %3216 = vmatmul.mubr.f32.gmra.mrb[0].mxu0 %v3134
    %v3217 = vpop.f32.mrb[0].mxu0
    %v3218 = vadd.f32 %v3113, %v3217
    %v3219 = vpop.f32.mrb[0].mxu0
    %3220 = vdwg.mxu0
    %v3221 = vld [vmem:[%s15] sm:$0x1]
    %v3223 = vlaneseq
    %v3224 = vshrl.u32 %v3223, 7
    %v3225 = vsub.s32 0, %v3224
    %v3226 = vrot.slane %v3221, %v3225
    %v3228 = vadd.f32 %v3203, %v3226
    %v3229 = vadd.f32 %v3208, %v3226
    %v3230 = vadd.f32 %v3213, %v3226
    %v3231 = vadd.f32 %v3218, %v3226
    %v3232 = vmax.f32 %v3228, 0.0
    %v3233 = vmax.f32 %v3229, 0.0
    %v3234 = vmax.f32 %v3230, 0.0
    %v3235 = vmax.f32 %v3231, 0.0
    %v3236 = vld [vmem:[%s16] sm:$0xff]
    %v3237 = vld [vmem:[%s16 + $0x8] sm:$0xff]
    %v3238 = vld [vmem:[%s16 + $0x10] sm:$0xff]
    %v3239 = vld [vmem:[%s16 + $0x18] sm:$0xff]
    %v3240 = vld [vmem:[%s16 + $0x20] sm:$0xff]
    %v3241 = vld [vmem:[%s16 + $0x28] sm:$0xff]
    %v3242 = vld [vmem:[%s16 + $0x30] sm:$0xff]
    %v3243 = vld [vmem:[%s16 + $0x38] sm:$0xff]
    %v3244 = vld [vmem:[%s17] sm:$0x3]
    %v3246 = vlaneseq
    %v3247 = vshrl.u32 %v3246, 7
    %v3248 = vsub.s32 0, %v3247
    %v3249 = vrot.slane %v3244, %v3248
    %v3250 = vlaneseq
    %v3251 = vshrl.u32 %v3250, 7
    %v3252 = vsub.s32 1, %v3251
    %v3253 = vrot.slane %v3244, %v3252
    %v3257 = vsel %vm246, %v3232, 0
    %v3260 = vsel %vm246, %v3233, 0
    %v3263 = vsel %vm246, %v3234, 0
    %v3266 = vsel %vm246, %v3235, 0
    %3268 = vmatprep.subr.mxu0 %v3237
    %3269 = vmatpush1.msra.mxu0 %v3236
    %3270 = vmatprep.subr.mxu0 %v3239
    %3271 = vmatpush1.msra.mxu0 %v3238
    %3272 = vmatprep.subr.mxu0 %v3241
    %3273 = vmatpush1.msra.mxu0 %v3240
    %3274 = vmatprep.subr.mxu0 %v3243
    %3275 = vmatpush1.msra.mxu0 %v3242
    %3276 = vmatprep.subr.mxu0 0.0
    %3277 = vmatpush1.msra.mxu0 0.0
    %3278 = vmatprep.subr.mxu0 0.0
    %3279 = vmatpush1.msra.mxu0 0.0
    %3280 = vmatprep.subr.mxu0 0.0
    %3281 = vmatpush1.msra.mxu0 0.0
    %3282 = vmatprep.subr.mxu0 0.0
    %3283 = vmatpush1.msra.mxu0 0.0
    %3284 = vmatprep.subr.mxu0 0.0
    %3285 = vmatpush1.msra.mxu0 0.0
    %3286 = vmatprep.subr.mxu0 0.0
    %3287 = vmatpush1.msra.mxu0 0.0
    %3288 = vmatprep.subr.mxu0 0.0
    %3289 = vmatpush1.msra.mxu0 0.0
    %3290 = vmatprep.subr.mxu0 0.0
    %3291 = vmatpush1.msra.mxu0 0.0
    %3292 = vmatprep.subr.mxu0 0.0
    %3293 = vmatpush1.msra.mxu0 0.0
    %3294 = vmatprep.subr.mxu0 0.0
    %3295 = vmatpush1.msra.mxu0 0.0
    %3296 = vmatprep.subr.mxu0 0.0
    %3297 = vmatpush1.msra.mxu0 0.0
    %3298 = vmatprep.subr.mxu0 0.0
    %3299 = vmatpush1.msra.mxu0 0.0
    %3300 = vmatprep.subr.mxu0 0.0
    %3301 = vmatpush1.msra.mxu0 0.0
    %3302 = vmatprep.subr.mxu0 0.0
    %3303 = vmatpush1.msra.mxu0 0.0
    %3304 = vmatprep.subr.mxu0 0.0
    %3305 = vmatpush1.msra.mxu0 0.0
    %3306 = vmatprep.subr.mxu0 0.0
    %3307 = vmatpush1.msra.mxu0 0.0
    %3308 = vmatprep.subr.mxu0 0.0
    %3309 = vmatpush1.msra.mxu0 0.0
    %3310 = vmatprep.subr.mxu0 0.0
    %3311 = vmatpush1.msra.mxu0 0.0
    %3312 = vmatprep.subr.mxu0 0.0
    %3313 = vmatpush1.msra.mxu0 0.0
    %3314 = vmatprep.subr.mxu0 0.0
    %3315 = vmatpush1.msra.mxu0 0.0
    %3316 = vmatprep.subr.mxu0 0.0
    %3317 = vmatpush1.msra.mxu0 0.0
    %3318 = vmatprep.subr.mxu0 0.0
    %3319 = vmatpush1.msra.mxu0 0.0
    %3320 = vmatprep.subr.mxu0 0.0
    %3321 = vmatpush1.msra.mxu0 0.0
    %3322 = vmatprep.subr.mxu0 0.0
    %3323 = vmatpush1.msra.mxu0 0.0
    %3324 = vmatprep.subr.mxu0 0.0
    %3325 = vmatpush1.msra.mxu0 0.0
    %3326 = vmatprep.subr.mxu0 0.0
    %3327 = vmatpush1.msra.mxu0 0.0
    %3328 = vmatprep.subr.mxu0 0.0
    %3329 = vmatpush1.msra.mxu0 0.0
    %3330 = vmatprep.subr.mxu0 0.0
    %3331 = vmatpush1.msra.mxu0 0.0
    %3332 = vmatprep.mubr.f32.mxu0 0.0
    %3333 = vmatmul.mubr.f32.gmra.mrb[0].mxu0 %v3257
    %v3334 = vpop.f32.mrb[0].mxu0
    %v3335 = vadd.f32 %v3249, %v3334
    %v3336 = vpop.f32.mrb[0].mxu0
    %v3337 = vadd.f32 %v3253, %v3336
    %3338 = vmatprep.mubr.f32.mxu0 0.0
    %3339 = vmatmul.mubr.f32.gmra.mrb[0].mxu0 %v3260
    %v3340 = vpop.f32.mrb[0].mxu0
    %v3341 = vadd.f32 %v3249, %v3340
    %v3342 = vpop.f32.mrb[0].mxu0
    %v3343 = vadd.f32 %v3253, %v3342
    %3344 = vmatprep.mubr.f32.mxu0 0.0
    %3345 = vmatmul.mubr.f32.gmra.mrb[0].mxu0 %v3263
    %v3346 = vpop.f32.mrb[0].mxu0
    %v3347 = vadd.f32 %v3249, %v3346
    %v3348 = vpop.f32.mrb[0].mxu0
    %v3349 = vadd.f32 %v3253, %v3348
    %3350 = vmatprep.mubr.f32.mxu0 0.0
    %3351 = vmatmul.mubr.f32.gmra.mrb[0].mxu0 %v3266
    %v3352 = vpop.f32.mrb[0].mxu0
    %v3353 = vadd.f32 %v3249, %v3352
    %v3354 = vpop.f32.mrb[0].mxu0
    %v3355 = vadd.f32 %v3253, %v3354
    %3356 = vdwg.mxu0
    %3357 = vst [vmem:[#allocation16] sm:$0xff] %v3335
    %3358 = vst [vmem:[#allocation16 + $0x8] sm:$0xff] %v3337
    %3359 = vst [vmem:[#allocation16 + $0x10] sm:$0xff] %v3341
    %3360 = vst [vmem:[#allocation16 + $0x18] sm:$0xff] %v3343
    %3361 = vst [vmem:[#allocation16 + $0x20] sm:$0xff] %v3347
    %3362 = vst [vmem:[#allocation16 + $0x28] sm:$0xff] %v3349
    %3363 = vst [vmem:[#allocation16 + $0x30] sm:$0xff] %v3353
    %3364 = vst [vmem:[#allocation16 + $0x38] sm:$0xff] %v3355
    // Predicated region
    $region106: #{tpu_custom_call.1} parent=1 // pred_check
      _
    $region107: #{tpu_custom_call.1} parent=1 // pred_check_branch
      %3366 = sbr.rel (0) target = $region109
    $region108: #{tpu_custom_call.1} parent=1 // pred_region
      %s3368 = ssub.s32 1024, 1024
      %3369 = vsyncadd [#allocation4], %s3368
      %s3370 = sshll.u32 [#allocation16], 4
      %s3371 = int_to_ptr.vmem [resolvable:$true] %s3370
      %3376 = dma.vmem_to_hbm [thread:$0]  %s3371, 1024, %s18, [#allocation4], 256, 256, 16
    $region109: #{tpu_custom_call.1} parent=1 // pred_fallthru
      _
    // Predicated region
    $region110: #{tpu_custom_call.1} parent=1 // pred_check
      _
    $region111: #{tpu_custom_call.1} parent=1 // pred_check_branch
      %3378 = sbr.rel (0) target = $region113
    $region112: #{tpu_custom_call.1} parent=1 // pred_region
      %3379 = dma.done [#allocation4], 1024
    $region113: #{tpu_custom_call.1} parent=1 // pred_fallthru
      _
    %3380 = vsyncpa [#allocation3], 1
    %3381 = vsyncpa [#allocation6], 1
    %3382 = vsyncpa [#allocation9], 1
    %3383 = vsyncpa [#allocation12], 1
    %3384 = vsyncpa [#allocation15], 1
    %3385 = vsyncpa [#allocation4], 1

</llo_original>
